<compile_context>
chip_gen: v5e
topology: v5e:2x2
jax: 0.10.0
libtpu: 0.0.40
codegen_flags: <defaults>
</compile_context>

<pallas_src>
import jax
import jax.numpy as jnp
import numpy as np
from jax.experimental import pallas as pl
from jax.experimental.pallas import tpu as pltpu

FH = 64   # half-width of the packed gen|recon output slab (requires fin <= 64)


# ---------------------------------------------------------------------------
# Fused kernel: generator + denoiser + 3x critic + pooling + SSE accumulation
# ---------------------------------------------------------------------------
def _make_kernel(pool_band, fin):
    fh = FH

    def kernel(x_ref, y_ref, batch_ref, mask_ref,
               w1_ref, b1_ref, w2_ref, b2_ref,
               wc1_ref, bc1_ref, wc2_ref, bc2_ref,
               out_ref, pooled_ref, sse_ref):
        i = pl.program_id(1)

        @pl.when(i == 0)
        def _init():
            pooled_ref[...] = jnp.zeros_like(pooled_ref)
            sse_ref[...] = jnp.zeros_like(sse_ref)

        x = x_ref[...]                                       # [TM, fin] bf16
        tm = x.shape[0]

        # ---- layer 1, fused generator|denoiser|critic(x): one MXU pass ----
        h = jnp.dot(x, w1_ref[...],
                    preferred_element_type=jnp.float32) + b1_ref[...]
        h = jnp.maximum(h, 0.0)                              # [TM, 3k] f32

        # ---- layer 2, fused: lanes 0:64 gen, 64:128 rec, 128:160 critic(x) feat
        out_all = (jnp.dot(h.astype(jnp.bfloat16), w2_ref[...],
                           preferred_element_type=jnp.float32) + b2_ref[...])
        out128 = out_all[:, :2 * fh]                         # [TM, 128] f32
        feat_x = out_all[:, 2 * fh:]                         # [TM, 32]  f32

        out_bf = out128.astype(jnp.bfloat16)
        out_ref[...] = out_bf                                # single bf16 lane-dense store

        # ---- masked per-lane SSE partials (cross-lane reduce in wrapper) ----
        yv = y_ref[...].astype(jnp.float32)                  # [TM, fin]
        if fin < fh:
            yv = jnp.concatenate(
                [yv, jnp.zeros((tm, fh - fin), jnp.float32)], axis=1)
        y128 = jnp.concatenate([yv, yv], axis=1)             # [TM, 128]
        diff = (out128 - y128) * mask_ref[...]               # padded rows masked out
        sse_ref[...] += jnp.sum(diff * diff, axis=0, keepdims=True)

        # ---- critic on gen|rec fused with block-diagonal weights ----
        hc = (jnp.dot(out_bf, wc1_ref[...],
                      preferred_element_type=jnp.float32) + bc1_ref[...])
        hc = jnp.maximum(hc, 0.0)                            # [TM, 64]
        feat_gr = (jnp.dot(hc.astype(jnp.bfloat16), wc2_ref[...],
                           preferred_element_type=jnp.float32) + bc2_ref[...])  # [TM, 64]

        # ---- single pooling matmul over [feat_x | feat_gen | feat_rec] ----
        # (kept f32: the 0/1 one-hot @ f32 feats is exact; padded rows have
        #  graph id -1 and never match the iota, so they are excluded)
        feats = jnp.concatenate([feat_x, feat_gr], axis=1)   # [TM, 96] f32
        oh = (jax.lax.broadcasted_iota(jnp.int32, (pool_band, tm), 0)
              == batch_ref[...]).astype(jnp.float32)         # [PB, TM]
        pooled_ref[...] += jnp.dot(oh, feats, preferred_element_type=jnp.float32)

    return kernel


# ---------------------------------------------------------------------------
# Full AdversarialDenoiser forward
# ---------------------------------------------------------------------------
def adversarial_denoiser_forward(params, x, y, batch, num_graphs, *,
                                 tm=512, nsplit=1):
    # nsplit: 1 on single-TensorCore v5e/v6e (default); 2 on v7x so the outer
    # "parallel" grid axis can shard across its two TensorCores.
    n, fin = x.shape
    assert fin <= FH, "packed gen|recon slab assumes fin <= 64"
    k = params["generator"]["w1"].shape[1]
    fout_c = params["critic"]["w2"].shape[1]
    pool_band = max(8, ((num_graphs + 7) // 8) * 8)   # 8-aligned pooling rows
    pw = 3 * fout_c                                   # pooled width: x|gen|rec

    inner = max(1, -(-n // (tm * nsplit)))
    n_pad = nsplit * inner * tm

    bf = jnp.bfloat16
    f32 = jnp.float32

    # Node features stay at native lane width (fin): no 32x HBM pad pass.
    x_p = jnp.zeros((n_pad, fin), bf).at[:n].set(x.astype(bf))
    y_p = jnp.zeros((n_pad, fin), bf).at[:n].set(y.astype(bf))
    batch_row = jnp.full((1, n_pad), -1, jnp.int32).at[0, :n].set(
        batch.astype(jnp.int32))
    mask = jnp.zeros((n_pad, 1), f32).at[:n].set(1.0)

    g, d, c = params["generator"], params["denoiser"], params["critic"]

    # layer-1 weights concatenated: [fin, 3k] = [W1_g | W1_d | W1_c]
    w1all = jnp.concatenate([g["w1"], d["w1"], c["w1"]], axis=1).astype(bf)
    b1all = jnp.concatenate([g["b1"], d["b1"], c["b1"]], axis=1)

    # layer-2 weights block-structured: [3k, 2*FH + fout_c]
    w2all = (jnp.zeros((3 * k, 2 * FH + fout_c), f32)
             .at[:k, :fin].set(g["w2"])
             .at[k:2 * k, FH:FH + fin].set(d["w2"])
             .at[2 * k:, 2 * FH:].set(c["w2"])).astype(bf)
    b2all = (jnp.zeros((1, 2 * FH + fout_c), f32)
             .at[:, :fin].set(g["b2"])
             .at[:, FH:FH + fin].set(d["b2"])
             .at[:, 2 * FH:].set(c["b2"]))

    # critic layer-1/2 for (gen | rec) as block-diagonals
    wc1gr = (jnp.zeros((2 * FH, 2 * k), f32)
             .at[:fin, :k].set(c["w1"])
             .at[FH:FH + fin, k:].set(c["w1"])).astype(bf)
    bc1gr = jnp.concatenate([c["b1"], c["b1"]], axis=1)
    wc2gr = (jnp.zeros((2 * k, 2 * fout_c), f32)
             .at[:k, :fout_c].set(c["w2"])
             .at[k:, fout_c:].set(c["w2"])).astype(bf)
    bc2gr = jnp.concatenate([c["b2"], c["b2"]], axis=1)

    node_map = lambda s, i: (s * inner + i, 0)
    const_map = lambda s, i: (0, 0)

    kernel = _make_kernel(pool_band, fin)
    out_slab, pooled_part, sse_part = pl.pallas_call(
        kernel,
        out_shape=(
            jax.ShapeDtypeStruct((n_pad, 2 * FH), bf),            # gen|recon bf16
            jax.ShapeDtypeStruct((nsplit, pool_band, pw), f32),   # pooled partials
            jax.ShapeDtypeStruct((nsplit, 1, 128), f32),          # SSE per-lane partials
        ),
        grid_spec=pltpu.PrefetchScalarGridSpec(
            num_scalar_prefetch=0,
            grid=(nsplit, inner),
            in_specs=[
                pl.BlockSpec((tm, fin), node_map),                         # x
                pl.BlockSpec((tm, fin), node_map),                         # y
                pl.BlockSpec((1, tm), lambda s, i: (0, s * inner + i)),    # graph ids
                pl.BlockSpec((tm, 1), node_map),                           # valid mask
                pl.BlockSpec((fin, 3 * k), const_map),                     # W1 fused
                pl.BlockSpec((1, 3 * k), const_map),
                pl.BlockSpec((3 * k, 2 * FH + fout_c), const_map),         # W2 fused
                pl.BlockSpec((1, 2 * FH + fout_c), const_map),
                pl.BlockSpec((2 * FH, 2 * k), const_map),                  # critic L1 blockdiag
                pl.BlockSpec((1, 2 * k), const_map),
                pl.BlockSpec((2 * k, 2 * fout_c), const_map),              # critic L2 blockdiag
                pl.BlockSpec((1, 2 * fout_c), const_map),
            ],
            out_specs=(
                pl.BlockSpec((tm, 2 * FH), node_map),
                pl.BlockSpec((None, pool_band, pw), lambda s, i: (s, 0, 0)),
                pl.BlockSpec((None, 1, 128), lambda s, i: (s, 0, 0)),
            ),
        ),
        compiler_params=pltpu.CompilerParams(
            dimension_semantics=("parallel", "arbitrary"),
            vmem_limit_bytes=32 * 1024 * 1024,
        ),
    )(x_p, y_p, batch_row, mask,
      w1all, b1all, w2all, b2all, wc1gr, bc1gr, wc2gr, bc2gr)

    # ---- tiny epilogue in plain JAX (B x 32 MLP + sigmoid, negligible) ----
    gen = out_slab[:n, :fin].astype(f32)
    recon = out_slab[:n, FH:FH + fin].astype(f32)

    denom = float(n * fin)
    sse = sse_part.sum(axis=0)[0]                             # (128,)
    gen_mse = jnp.sum(sse[:FH]) / denom
    recon_mse = jnp.sum(sse[FH:]) / denom

    pooled = pooled_part.sum(axis=0)[:num_graphs]             # (B, 3*32)
    wm, bm = params["critic_mlp"]["wm"], params["critic_mlp"]["bm"]
    y_real = jax.nn.sigmoid(pooled[:, :fout_c] @ wm + bm)
    y_gen = jax.nn.sigmoid(pooled[:, fout_c:2 * fout_c] @ wm + bm)
    y_recon = jax.nn.sigmoid(pooled[:, 2 * fout_c:] @ wm + bm)
    # NOTE: original torch critics() has no `return`; we return the value so the
    # forward tuple is meaningful.
    return gen, recon, gen_mse, recon_mse, y_real, y_gen, y_recon


# ---------------------------------------------------------------------------
# Pure-JAX reference (same bf16-in / f32-accumulate numerics) for sanity check
# ---------------------------------------------------------------------------
def reference_forward(params, x, y, batch, num_graphs):
    bf = jnp.bfloat16

    def filt(p, xx):
        h = jnp.maximum(jnp.dot(xx.astype(bf), p["w1"].astype(bf),
                                preferred_element_type=jnp.float32) + p["b1"], 0.0)
        return (jnp.dot(h.astype(bf), p["w2"].astype(bf),
                        preferred_element_type=jnp.float32) + p["b2"])

    gen = filt(params["generator"], x)
    recon = filt(params["denoiser"], x)
    yq = y.astype(bf).astype(jnp.float32)
    gen_mse = jnp.mean((gen - yq) ** 2)
    recon_mse = jnp.mean((recon - yq) ** 2)

    onehot = (batch[None, :] == jnp.arange(num_graphs)[:, None]).astype(jnp.float32)

    def critic(xx):
        feat = filt(params["critic"], xx)
        pooled = onehot @ feat
        return jax.nn.sigmoid(pooled @ params["critic_mlp"]["wm"]
                              + params["critic_mlp"]["bm"])

    return gen, recon, gen_mse, recon_mse, critic(x), critic(gen), critic(recon)


# ---------------------------------------------------------------------------
# Deterministic parameter init (synthetic weights, not a checkpoint)
# ---------------------------------------------------------------------------
def init_filter_params(key, fin, fout, k=32):
    k1, k2 = jax.random.split(key)
    return dict(
        w1=jax.random.normal(k1, (fin, k), jnp.float32) / jnp.sqrt(float(fin)),
        b1=jnp.zeros((1, k), jnp.float32),
        w2=jax.random.normal(k2, (k, fout), jnp.float32) / jnp.sqrt(float(k)),
        b2=jnp.zeros((1, fout), jnp.float32),
    )


if __name__ == "__main__":
    N, FIN, B, K = 300, 4, 2, 32          # 300 nodes, 4 features, 2 graphs
    key = jax.random.PRNGKey(0)
    kx, ky, kd, kg, kc, km = jax.random.split(key, 6)

    x = jax.random.normal(kx, (N, FIN), jnp.float32)            # data.x
    y = jax.random.normal(ky, (N, FIN), jnp.float32)            # data.y
    batch = jnp.repeat(jnp.arange(B, dtype=jnp.int32), N // B)  # data.batch

    params = dict(
        denoiser=init_filter_params(kd, FIN, FIN, K),
        generator=init_filter_params(kg, FIN, FIN, K),
        critic=init_filter_params(kc, FIN, 32, K),
        critic_mlp=dict(
            wm=jax.random.normal(km, (32, 1), jnp.float32) / jnp.sqrt(32.0),
            bm=jnp.zeros((1, 1), jnp.float32),
        ),
    )

    fwd = jax.jit(adversarial_denoiser_forward, static_argnames=("num_graphs",))
    outs = fwd(params, x, y, batch, num_graphs=B)
    jax.block_until_ready(outs)

    gen, recon, gen_mse, recon_mse, y_real, y_gen, y_recon = outs
    assert gen.shape == (N, FIN) and recon.shape == (N, FIN)
    assert y_real.shape == (B, 1) and y_gen.shape == (B, 1) and y_recon.shape == (B, 1)

    ref = reference_forward(params, x, y, batch, B)
    for got, want in zip(outs, ref):
        np.testing.assert_allclose(np.asarray(got, np.float32),
                                   np.asarray(want, np.float32),
                                   rtol=2e-2, atol=2e-2)
    print("KERNEL_OK")
</pallas_src>

<mosaic_0001>
module attributes {stable_mosaic.version = 11 : i64} {
  func.func @kernel(%arg0: i32, %arg1: i32, %arg2: memref<512x4xbf16, #tpu.memory_space<vmem>>, %arg3: memref<512x4xbf16, #tpu.memory_space<vmem>>, %arg4: memref<1x512xi32, #tpu.memory_space<vmem>>, %arg5: memref<512x1xf32, #tpu.memory_space<vmem>>, %arg6: memref<4x96xbf16, #tpu.memory_space<vmem>>, %arg7: memref<1x96xf32, #tpu.memory_space<vmem>>, %arg8: memref<96x160xbf16, #tpu.memory_space<vmem>>, %arg9: memref<1x160xf32, #tpu.memory_space<vmem>>, %arg10: memref<128x64xbf16, #tpu.memory_space<vmem>>, %arg11: memref<1x64xf32, #tpu.memory_space<vmem>>, %arg12: memref<64x64xbf16, #tpu.memory_space<vmem>>, %arg13: memref<1x64xf32, #tpu.memory_space<vmem>>, %arg14: memref<512x128xbf16, #tpu.memory_space<vmem>>, %arg15: memref<1x8x96xf32, #tpu.memory_space<vmem>>, %arg16: memref<1x1x128xf32, #tpu.memory_space<vmem>>) attributes {dimension_semantics = [#tpu.dimension_semantics<parallel>, #tpu.dimension_semantics<arbitrary>], iteration_bounds = array<i64: 1, 1>, scalar_prefetch = 0 : i64, scratch_operands = 0 : i64, tpu.core_type = #tpu.core_type<tc>, window_params = [{transform_indices = @transform_0, window_bounds = array<i64: 512, 4>}, {transform_indices = @transform_1, window_bounds = array<i64: 512, 4>}, {transform_indices = @transform_2, window_bounds = array<i64: 1, 512>}, {transform_indices = @transform_3, window_bounds = array<i64: 512, 1>}, {pipeline_mode = #tpu.pipeline_mode<synchronous>, transform_indices = @transform_4, window_bounds = array<i64: 4, 96>}, {pipeline_mode = #tpu.pipeline_mode<synchronous>, transform_indices = @transform_5, window_bounds = array<i64: 1, 96>}, {pipeline_mode = #tpu.pipeline_mode<synchronous>, transform_indices = @transform_6, window_bounds = array<i64: 96, 160>}, {pipeline_mode = #tpu.pipeline_mode<synchronous>, transform_indices = @transform_7, window_bounds = array<i64: 1, 160>}, {pipeline_mode = #tpu.pipeline_mode<synchronous>, transform_indices = @transform_8, window_bounds = array<i64: 128, 64>}, {pipeline_mode = #tpu.pipeline_mode<synchronous>, transform_indices = @transform_9, window_bounds = array<i64: 1, 64>}, {pipeline_mode = #tpu.pipeline_mode<synchronous>, transform_indices = @transform_10, window_bounds = array<i64: 64, 64>}, {pipeline_mode = #tpu.pipeline_mode<synchronous>, transform_indices = @transform_11, window_bounds = array<i64: 1, 64>}, {transform_indices = @transform_12, window_bounds = array<i64: 512, 128>}, {transform_indices = @transform_13, window_bounds = array<i64: 1, 8, 96>}, {transform_indices = @transform_14, window_bounds = array<i64: 1, 1, 128>}]} {
    %c0_i32 = arith.constant 0 : i32
    %0 = arith.cmpi eq, %arg1, %c0_i32 : i32
    %1 = arith.extui %0 : i1 to i32
    %c0_i32_0 = arith.constant 0 : i32
    %2 = arith.cmpi ne, %1, %c0_i32_0 : i32
    scf.if %2 {
      %cst_46 = arith.constant 0.000000e+00 : f32
      %66 = vector.broadcast %cst_46 : f32 to vector<8x96xf32>
      %c0_47 = arith.constant 0 : index
      %c0_48 = arith.constant 0 : index
      %c0_49 = arith.constant 0 : index
      %67 = vector.load %arg15[%c0_47, %c0_48, %c0_49] : memref<1x8x96xf32, #tpu.memory_space<vmem>>, vector<1x8x96xf32>
      %68 = vector.shape_cast %67 : vector<1x8x96xf32> to vector<8x96xf32>
      %69 = vector.shape_cast %66 : vector<8x96xf32> to vector<1x8x96xf32>
      tpu.vector_store %arg15[%c0_47, %c0_48, %c0_49], %69 {strides = array<i32>} : memref<1x8x96xf32, #tpu.memory_space<vmem>>, vector<1x8x96xf32>,
      %cst_50 = arith.constant 0.000000e+00 : f32
      %70 = vector.broadcast %cst_50 : f32 to vector<1x128xf32>
      %c0_51 = arith.constant 0 : index
      %c0_52 = arith.constant 0 : index
      %c0_53 = arith.constant 0 : index
      %71 = vector.load %arg16[%c0_51, %c0_52, %c0_53] : memref<1x1x128xf32, #tpu.memory_space<vmem>>, vector<1x1x128xf32>
      %72 = vector.shape_cast %71 : vector<1x1x128xf32> to vector<1x128xf32>
      %73 = vector.shape_cast %70 : vector<1x128xf32> to vector<1x1x128xf32>
      tpu.vector_store %arg16[%c0_51, %c0_52, %c0_53], %73 {strides = array<i32>} : memref<1x1x128xf32, #tpu.memory_space<vmem>>, vector<1x1x128xf32>,
    } else {
    }
    %c0 = arith.constant 0 : index
    %c0_1 = arith.constant 0 : index
    %3 = vector.load %arg2[%c0, %c0_1] : memref<512x4xbf16, #tpu.memory_space<vmem>>, vector<512x4xbf16>
    %c0_2 = arith.constant 0 : index
    %c0_3 = arith.constant 0 : index
    %4 = vector.load %arg6[%c0_2, %c0_3] : memref<4x96xbf16, #tpu.memory_space<vmem>>, vector<4x96xbf16>
    %cst = arith.constant dense<0.000000e+00> : vector<512x96xf32>
    %5 = tpu.matmul %3, %4, %cst {dimension_numbers = #tpu.dot_dimension_numbers<[1], [0], [0], [1], [0, 0, 1, 1], [], []>} : vector<512x4xbf16>, vector<4x96xbf16>, vector<512x96xf32> -> vector<512x96xf32>
    %c0_4 = arith.constant 0 : index
    %c0_5 = arith.constant 0 : index
    %6 = vector.load %arg7[%c0_4, %c0_5] : memref<1x96xf32, #tpu.memory_space<vmem>>, vector<1x96xf32>
    %7 = vector.broadcast %6 : vector<1x96xf32> to vector<512x96xf32>
    %8 = arith.addf %5, %7 : vector<512x96xf32>
    %cst_6 = arith.constant 0.000000e+00 : f32
    %9 = vector.broadcast %cst_6 : f32 to vector<512x96xf32>
    %10 = arith.maximumf %8, %9 : vector<512x96xf32>
    %11 = arith.truncf %10 : vector<512x96xf32> to vector<512x96xbf16>
    %c0_7 = arith.constant 0 : index
    %c0_8 = arith.constant 0 : index
    %12 = vector.load %arg8[%c0_7, %c0_8] : memref<96x160xbf16, #tpu.memory_space<vmem>>, vector<96x160xbf16>
    %cst_9 = arith.constant dense<0.000000e+00> : vector<512x160xf32>
    %13 = tpu.matmul %11, %12, %cst_9 {dimension_numbers = #tpu.dot_dimension_numbers<[1], [0], [0], [1], [0, 0, 1, 1], [], []>} : vector<512x96xbf16>, vector<96x160xbf16>, vector<512x160xf32> -> vector<512x160xf32>
    %c0_10 = arith.constant 0 : index
    %c0_11 = arith.constant 0 : index
    %14 = vector.load %arg9[%c0_10, %c0_11] : memref<1x160xf32, #tpu.memory_space<vmem>>, vector<1x160xf32>
    %15 = vector.broadcast %14 : vector<1x160xf32> to vector<512x160xf32>
    %16 = arith.addf %13, %15 : vector<512x160xf32>
    %17 = vector.extract_strided_slice %16 {offsets = [0, 0], sizes = [512, 128], strides = [1, 1]} : vector<512x160xf32> to vector<512x128xf32>
    %18 = vector.extract_strided_slice %16 {offsets = [0, 128], sizes = [512, 32], strides = [1, 1]} : vector<512x160xf32> to vector<512x32xf32>
    %19 = arith.truncf %17 : vector<512x128xf32> to vector<512x128xbf16>
    %c0_12 = arith.constant 0 : index
    %c0_13 = arith.constant 0 : index
    %20 = vector.load %arg14[%c0_12, %c0_13] : memref<512x128xbf16, #tpu.memory_space<vmem>>, vector<512x128xbf16>
    tpu.vector_store %arg14[%c0_12, %c0_13], %19 {strides = array<i32>} : memref<512x128xbf16, #tpu.memory_space<vmem>>, vector<512x128xbf16>,
    %c0_14 = arith.constant 0 : index
    %c0_15 = arith.constant 0 : index
    %21 = vector.load %arg3[%c0_14, %c0_15] : memref<512x4xbf16, #tpu.memory_space<vmem>>, vector<512x4xbf16>
    %22 = arith.extf %21 : vector<512x4xbf16> to vector<512x4xf32>
    %cst_16 = arith.constant 0.000000e+00 : f32
    %23 = vector.broadcast %cst_16 : f32 to vector<512x60xf32>
    %24 = tpu.concatenate %22, %23 in 1 : vector<512x4xf32>, vector<512x60xf32> -> vector<512x64xf32>
    %25 = tpu.concatenate %24, %24 in 1 : vector<512x64xf32>, vector<512x64xf32> -> vector<512x128xf32>
    %26 = arith.subf %17, %25 : vector<512x128xf32>
    %c0_17 = arith.constant 0 : index
    %c0_18 = arith.constant 0 : index
    %27 = vector.load %arg5[%c0_17, %c0_18] : memref<512x1xf32, #tpu.memory_space<vmem>>, vector<512x1xf32>
    %28 = vector.broadcast %27 : vector<512x1xf32> to vector<512x128xf32>
    %29 = arith.mulf %26, %28 : vector<512x128xf32>
    %c0_19 = arith.constant 0 : index
    %c0_20 = arith.constant 0 : index
    %c0_21 = arith.constant 0 : index
    %30 = vector.load %arg16[%c0_19, %c0_20, %c0_21] : memref<1x1x128xf32, #tpu.memory_space<vmem>>, vector<1x1x128xf32>
    %31 = vector.shape_cast %30 : vector<1x1x128xf32> to vector<1x128xf32>
    %32 = arith.mulf %29, %29 : vector<512x128xf32>
    %cst_22 = arith.constant dense<0.000000e+00> : vector<128xf32>
    %33 = vector.multi_reduction <add>, %32, %cst_22 [0] : vector<512x128xf32> to vector<128xf32>
    %34 = vector.shape_cast %33 : vector<128xf32> to vector<1x128xf32>
    %35 = arith.addf %31, %34 : vector<1x128xf32>
    %c0_23 = arith.constant 0 : index
    %c0_24 = arith.constant 0 : index
    %c0_25 = arith.constant 0 : index
    %36 = vector.load %arg16[%c0_23, %c0_24, %c0_25] : memref<1x1x128xf32, #tpu.memory_space<vmem>>, vector<1x1x128xf32>
    %37 = vector.shape_cast %36 : vector<1x1x128xf32> to vector<1x128xf32>
    %38 = vector.shape_cast %35 : vector<1x128xf32> to vector<1x1x128xf32>
    tpu.vector_store %arg16[%c0_23, %c0_24, %c0_25], %38 {strides = array<i32>} : memref<1x1x128xf32, #tpu.memory_space<vmem>>, vector<1x1x128xf32>,
    %c0_26 = arith.constant 0 : index
    %c0_27 = arith.constant 0 : index
    %39 = vector.load %arg10[%c0_26, %c0_27] : memref<128x64xbf16, #tpu.memory_space<vmem>>, vector<128x64xbf16>
    %cst_28 = arith.constant dense<0.000000e+00> : vector<512x64xf32>
    %40 = tpu.matmul %19, %39, %cst_28 {dimension_numbers = #tpu.dot_dimension_numbers<[1], [0], [0], [1], [0, 0, 1, 1], [], []>} : vector<512x128xbf16>, vector<128x64xbf16>, vector<512x64xf32> -> vector<512x64xf32>
    %c0_29 = arith.constant 0 : index
    %c0_30 = arith.constant 0 : index
    %41 = vector.load %arg11[%c0_29, %c0_30] : memref<1x64xf32, #tpu.memory_space<vmem>>, vector<1x64xf32>
    %42 = vector.broadcast %41 : vector<1x64xf32> to vector<512x64xf32>
    %43 = arith.addf %40, %42 : vector<512x64xf32>
    %cst_31 = arith.constant 0.000000e+00 : f32
    %44 = vector.broadcast %cst_31 : f32 to vector<512x64xf32>
    %45 = arith.maximumf %43, %44 : vector<512x64xf32>
    %46 = arith.truncf %45 : vector<512x64xf32> to vector<512x64xbf16>
    %c0_32 = arith.constant 0 : index
    %c0_33 = arith.constant 0 : index
    %47 = vector.load %arg12[%c0_32, %c0_33] : memref<64x64xbf16, #tpu.memory_space<vmem>>, vector<64x64xbf16>
    %cst_34 = arith.constant dense<0.000000e+00> : vector<512x64xf32>
    %48 = tpu.matmul %46, %47, %cst_34 {dimension_numbers = #tpu.dot_dimension_numbers<[1], [0], [0], [1], [0, 0, 1, 1], [], []>} : vector<512x64xbf16>, vector<64x64xbf16>, vector<512x64xf32> -> vector<512x64xf32>
    %c0_35 = arith.constant 0 : index
    %c0_36 = arith.constant 0 : index
    %49 = vector.load %arg13[%c0_35, %c0_36] : memref<1x64xf32, #tpu.memory_space<vmem>>, vector<1x64xf32>
    %50 = vector.broadcast %49 : vector<1x64xf32> to vector<512x64xf32>
    %51 = arith.addf %48, %50 : vector<512x64xf32>
    %52 = tpu.concatenate %18, %51 in 1 : vector<512x32xf32>, vector<512x64xf32> -> vector<512x96xf32>
    %53 = tpu.iota {dimensions = array<i32: 0>} : vector<8x512xi32>
    %c0_37 = arith.constant 0 : index
    %c0_38 = arith.constant 0 : index
    %54 = vector.load %arg4[%c0_37, %c0_38] : memref<1x512xi32, #tpu.memory_space<vmem>>, vector<1x512xi32>
    %55 = vector.broadcast %54 : vector<1x512xi32> to vector<8x512xi32>
    %56 = arith.cmpi eq, %53, %55 : vector<8x512xi32>
    %57 = arith.extui %56 : vector<8x512xi1> to vector<8x512xi32>
    %58 = arith.sitofp %57 : vector<8x512xi32> to vector<8x512xf32>
    %c0_39 = arith.constant 0 : index
    %c0_40 = arith.constant 0 : index
    %c0_41 = arith.constant 0 : index
    %59 = vector.load %arg15[%c0_39, %c0_40, %c0_41] : memref<1x8x96xf32, #tpu.memory_space<vmem>>, vector<1x8x96xf32>
    %60 = vector.shape_cast %59 : vector<1x8x96xf32> to vector<8x96xf32>
    %cst_42 = arith.constant dense<0.000000e+00> : vector<8x96xf32>
    %61 = tpu.matmul %58, %52, %cst_42 {dimension_numbers = #tpu.dot_dimension_numbers<[1], [0], [0], [1], [0, 0, 1, 1], [], []>} : vector<8x512xf32>, vector<512x96xf32>, vector<8x96xf32> -> vector<8x96xf32>
    %62 = arith.addf %60, %61 : vector<8x96xf32>
    %c0_43 = arith.constant 0 : index
    %c0_44 = arith.constant 0 : index
    %c0_45 = arith.constant 0 : index
    %63 = vector.load %arg15[%c0_43, %c0_44, %c0_45] : memref<1x8x96xf32, #tpu.memory_space<vmem>>, vector<1x8x96xf32>
    %64 = vector.shape_cast %63 : vector<1x8x96xf32> to vector<8x96xf32>
    %65 = vector.shape_cast %62 : vector<8x96xf32> to vector<1x8x96xf32>
    tpu.vector_store %arg15[%c0_43, %c0_44, %c0_45], %65 {strides = array<i32>} : memref<1x8x96xf32, #tpu.memory_space<vmem>>, vector<1x8x96xf32>,
    return
  }
  func.func @transform_0(%arg0: i32, %arg1: i32) -> (i32, i32) {
    %c1_i32 = arith.constant 1 : i32
    %0 = arith.muli %arg0, %c1_i32 : i32
    %1 = arith.addi %0, %arg1 : i32
    %c0_i32 = arith.constant 0 : i32
    %c0_i32_0 = arith.constant 0 : i32
    return %1, %c0_i32 : i32, i32
  }
  func.func @transform_1(%arg0: i32, %arg1: i32) -> (i32, i32) {
    %c1_i32 = arith.constant 1 : i32
    %0 = arith.muli %arg0, %c1_i32 : i32
    %1 = arith.addi %0, %arg1 : i32
    %c0_i32 = arith.constant 0 : i32
    %c0_i32_0 = arith.constant 0 : i32
    return %1, %c0_i32 : i32, i32
  }
  func.func @transform_2(%arg0: i32, %arg1: i32) -> (i32, i32) {
    %c1_i32 = arith.constant 1 : i32
    %0 = arith.muli %arg0, %c1_i32 : i32
    %1 = arith.addi %0, %arg1 : i32
    %c0_i32 = arith.constant 0 : i32
    %c0_i32_0 = arith.constant 0 : i32
    return %c0_i32, %1 : i32, i32
  }
  func.func @transform_3(%arg0: i32, %arg1: i32) -> (i32, i32) {
    %c1_i32 = arith.constant 1 : i32
    %0 = arith.muli %arg0, %c1_i32 : i32
    %1 = arith.addi %0, %arg1 : i32
    %c0_i32 = arith.constant 0 : i32
    %c0_i32_0 = arith.constant 0 : i32
    return %1, %c0_i32 : i32, i32
  }
  func.func @transform_4(%arg0: i32, %arg1: i32) -> (i32, i32) {
    %c0_i32 = arith.constant 0 : i32
    %c0_i32_0 = arith.constant 0 : i32
    %c0_i32_1 = arith.constant 0 : i32
    return %c0_i32, %c0_i32_0 : i32, i32
  }
  func.func @transform_5(%arg0: i32, %arg1: i32) -> (i32, i32) {
    %c0_i32 = arith.constant 0 : i32
    %c0_i32_0 = arith.constant 0 : i32
    %c0_i32_1 = arith.constant 0 : i32
    return %c0_i32, %c0_i32_0 : i32, i32
  }
  func.func @transform_6(%arg0: i32, %arg1: i32) -> (i32, i32) {
    %c0_i32 = arith.constant 0 : i32
    %c0_i32_0 = arith.constant 0 : i32
    %c0_i32_1 = arith.constant 0 : i32
    return %c0_i32, %c0_i32_0 : i32, i32
  }
  func.func @transform_7(%arg0: i32, %arg1: i32) -> (i32, i32) {
    %c0_i32 = arith.constant 0 : i32
    %c0_i32_0 = arith.constant 0 : i32
    %c0_i32_1 = arith.constant 0 : i32
    return %c0_i32, %c0_i32_0 : i32, i32
  }
  func.func @transform_8(%arg0: i32, %arg1: i32) -> (i32, i32) {
    %c0_i32 = arith.constant 0 : i32
    %c0_i32_0 = arith.constant 0 : i32
    %c0_i32_1 = arith.constant 0 : i32
    return %c0_i32, %c0_i32_0 : i32, i32
  }
  func.func @transform_9(%arg0: i32, %arg1: i32) -> (i32, i32) {
    %c0_i32 = arith.constant 0 : i32
    %c0_i32_0 = arith.constant 0 : i32
    %c0_i32_1 = arith.constant 0 : i32
    return %c0_i32, %c0_i32_0 : i32, i32
  }
  func.func @transform_10(%arg0: i32, %arg1: i32) -> (i32, i32) {
    %c0_i32 = arith.constant 0 : i32
    %c0_i32_0 = arith.constant 0 : i32
    %c0_i32_1 = arith.constant 0 : i32
    return %c0_i32, %c0_i32_0 : i32, i32
  }
  func.func @transform_11(%arg0: i32, %arg1: i32) -> (i32, i32) {
    %c0_i32 = arith.constant 0 : i32
    %c0_i32_0 = arith.constant 0 : i32
    %c0_i32_1 = arith.constant 0 : i32
    return %c0_i32, %c0_i32_0 : i32, i32
  }
  func.func @transform_12(%arg0: i32, %arg1: i32) -> (i32, i32) {
    %c1_i32 = arith.constant 1 : i32
    %0 = arith.muli %arg0, %c1_i32 : i32
    %1 = arith.addi %0, %arg1 : i32
    %c0_i32 = arith.constant 0 : i32
    %c0_i32_0 = arith.constant 0 : i32
    return %1, %c0_i32 : i32, i32
  }
  func.func @transform_13(%arg0: i32, %arg1: i32) -> (i32, i32, i32) {
    %c0_i32 = arith.constant 0 : i32
    %c0_i32_0 = arith.constant 0 : i32
    %c0_i32_1 = arith.constant 0 : i32
    return %arg0, %c0_i32, %c0_i32_0 : i32, i32, i32
  }
  func.func @transform_14(%arg0: i32, %arg1: i32) -> (i32, i32, i32) {
    %c0_i32 = arith.constant 0 : i32
    %c0_i32_0 = arith.constant 0 : i32
    %c0_i32_1 = arith.constant 0 : i32
    return %arg0, %c0_i32, %c0_i32_0 : i32, i32, i32
  }
}

</mosaic_0001>

<llo_original>
// kernel: adversarial_denoiser_forward.1
$region0: #{adversarial_denoiser_forward.1}
  #allocation0 [shape = 'u32[]', space=smem, size = 0x4, offset = 0x4, fixed_abs, tag = 'smem constant byte address 0x4 - core index']
  #allocation1 [shape = 'u32[72,128]{1,0:T(1,128)}', space=vmem, size = 0x9000, scoped, tag = 'internal scratch']
  %s0 = inlined_call_operand.vmem [shape: bf16[512,4], index: 0, kind: input, shape index: {}]
  %s1 = inlined_call_operand.vmem [shape: bf16[512,4], index: 1, kind: input, shape index: {}]
  %s2 = inlined_call_operand.vmem [shape: s32[1,512], index: 2, kind: input, shape index: {}]
  %s3 = inlined_call_operand.vmem [shape: f32[512,1], index: 3, kind: input, shape index: {}]
  %s4 = inlined_call_operand.vmem [shape: bf16[4,96], index: 4, kind: input, shape index: {}]
  %s5 = inlined_call_operand.vmem [shape: f32[1,96], index: 5, kind: input, shape index: {}]
  %s6 = inlined_call_operand.vmem [shape: bf16[96,160], index: 6, kind: input, shape index: {}]
  %s7 = inlined_call_operand.vmem [shape: f32[1,160], index: 7, kind: input, shape index: {}]
  %s8 = inlined_call_operand.vmem [shape: bf16[128,64], index: 8, kind: input, shape index: {}]
  %s9 = inlined_call_operand.vmem [shape: f32[1,64], index: 9, kind: input, shape index: {}]
  %s10 = inlined_call_operand.vmem [shape: bf16[64,64], index: 10, kind: input, shape index: {}]
  %s11 = inlined_call_operand.vmem [shape: f32[1,64], index: 11, kind: input, shape index: {}]
  %s12 = inlined_call_operand.vmem [shape: bf16[512,128], index: 12, kind: output, shape index: {0}]
  %s13 = inlined_call_operand.vmem [shape: f32[1,8,96], index: 13, kind: output, shape index: {1}]
  %s14 = inlined_call_operand.vmem [shape: f32[1,1,128], index: 14, kind: output, shape index: {2}]
  %15 = xla_tuple %s12, %s13, %s14
  %s16 = sld [smem:[#allocation0]]
  $region78: #{adversarial_denoiser_forward.1} parent=0
    _
  %s18 = ssub.s32 1, %s16
  %s19 = scalar_select 0, %s18, %s16
  // Predicated region
  $region2: #{adversarial_denoiser_forward.1} parent=0 // pred_check
    _
  $region3: #{adversarial_denoiser_forward.1} parent=0 // pred_check_branch
    %21 = sbr.rel (0) target = $region5
  $region4: #{adversarial_denoiser_forward.1} parent=0 // pred_region
    %s22 = sadd.s32 0, 0
    %s23 = smul.u32 64, %s22
    %p24 = scmp.lt.s32.totalorder %s23, 63
    %s25 = scalar_select %p24, %s23, 63
    %s26 = smul.addr %s25, 4
    %s27 = scalar_lea.vmem %s0, %s26
    %s28 = sadd.s32 0, 0
    %s29 = smul.u32 64, %s28
  $region5: #{adversarial_denoiser_forward.1} parent=0 // pred_fallthru
    _
  // Predicated region
  $region6: #{adversarial_denoiser_forward.1} parent=0 // pred_check
    _
  $region7: #{adversarial_denoiser_forward.1} parent=0 // pred_check_branch
    %31 = sbr.rel (0) target = $region9
  $region8: #{adversarial_denoiser_forward.1} parent=0 // pred_region
    %s32 = sadd.s32 0, 0
    %s33 = smul.u32 64, %s32
    %p34 = scmp.lt.s32.totalorder %s33, 63
    %s35 = scalar_select %p34, %s33, 63
    %s36 = smul.addr %s35, 4
    %s37 = scalar_lea.vmem %s1, %s36
    %s38 = sadd.s32 0, 0
    %s39 = smul.u32 64, %s38
  $region9: #{adversarial_denoiser_forward.1} parent=0 // pred_fallthru
    _
  // Predicated region
  $region10: #{adversarial_denoiser_forward.1} parent=0 // pred_check
    _
  $region11: #{adversarial_denoiser_forward.1} parent=0 // pred_check_branch
    %41 = sbr.rel (0) target = $region13
  $region12: #{adversarial_denoiser_forward.1} parent=0 // pred_region
    %s42 = sadd.s32 0, 0
    %s43 = smul.u32 4, %s42
    %p44 = scmp.lt.s32.totalorder %s43, 3
    %s45 = scalar_select %p44, %s43, 3
    %s46 = scalar_lea.vmem %s2, %s45
    %s47 = sadd.s32 0, 0
    %s48 = smul.u32 4, %s47
  $region13: #{adversarial_denoiser_forward.1} parent=0 // pred_fallthru
    _
  // Predicated region
  $region14: #{adversarial_denoiser_forward.1} parent=0 // pred_check
    _
  $region15: #{adversarial_denoiser_forward.1} parent=0 // pred_check_branch
    %50 = sbr.rel (0) target = $region17
  $region16: #{adversarial_denoiser_forward.1} parent=0 // pred_region
    %s51 = sadd.s32 0, 0
    %s52 = smul.u32 64, %s51
    %p53 = scmp.lt.s32.totalorder %s52, 63
    %s54 = scalar_select %p53, %s52, 63
    %s55 = smul.addr %s54, 8
    %s56 = scalar_lea.vmem %s3, %s55
    %s57 = sadd.s32 0, 0
    %s58 = smul.u32 64, %s57
  $region17: #{adversarial_denoiser_forward.1} parent=0 // pred_fallthru
    _
  // Predicated region
  $region18: #{adversarial_denoiser_forward.1} parent=0 // pred_check
    _
  $region19: #{adversarial_denoiser_forward.1} parent=0 // pred_check_branch
    %60 = sbr.rel (0) target = $region21
  $region20: #{adversarial_denoiser_forward.1} parent=0 // pred_region
    _
  $region21: #{adversarial_denoiser_forward.1} parent=0 // pred_fallthru
    _
  // Predicated region
  $region22: #{adversarial_denoiser_forward.1} parent=0 // pred_check
    _
  $region23: #{adversarial_denoiser_forward.1} parent=0 // pred_check_branch
    %62 = sbr.rel (0) target = $region25
  $region24: #{adversarial_denoiser_forward.1} parent=0 // pred_region
    _
  $region25: #{adversarial_denoiser_forward.1} parent=0 // pred_fallthru
    _
  // Predicated region
  $region26: #{adversarial_denoiser_forward.1} parent=0 // pred_check
    _
  $region27: #{adversarial_denoiser_forward.1} parent=0 // pred_check_branch
    %64 = sbr.rel (0) target = $region29
  $region28: #{adversarial_denoiser_forward.1} parent=0 // pred_region
    _
  $region29: #{adversarial_denoiser_forward.1} parent=0 // pred_fallthru
    _
  // Predicated region
  $region30: #{adversarial_denoiser_forward.1} parent=0 // pred_check
    _
  $region31: #{adversarial_denoiser_forward.1} parent=0 // pred_check_branch
    %66 = sbr.rel (0) target = $region33
  $region32: #{adversarial_denoiser_forward.1} parent=0 // pred_region
    _
  $region33: #{adversarial_denoiser_forward.1} parent=0 // pred_fallthru
    _
  // Predicated region
  $region34: #{adversarial_denoiser_forward.1} parent=0 // pred_check
    _
  $region35: #{adversarial_denoiser_forward.1} parent=0 // pred_check_branch
    %68 = sbr.rel (0) target = $region37
  $region36: #{adversarial_denoiser_forward.1} parent=0 // pred_region
    _
  $region37: #{adversarial_denoiser_forward.1} parent=0 // pred_fallthru
    _
  // Predicated region
  $region38: #{adversarial_denoiser_forward.1} parent=0 // pred_check
    _
  $region39: #{adversarial_denoiser_forward.1} parent=0 // pred_check_branch
    %70 = sbr.rel (0) target = $region41
  $region40: #{adversarial_denoiser_forward.1} parent=0 // pred_region
    _
  $region41: #{adversarial_denoiser_forward.1} parent=0 // pred_fallthru
    _
  // Predicated region
  $region42: #{adversarial_denoiser_forward.1} parent=0 // pred_check
    _
  $region43: #{adversarial_denoiser_forward.1} parent=0 // pred_check_branch
    %72 = sbr.rel (0) target = $region45
  $region44: #{adversarial_denoiser_forward.1} parent=0 // pred_region
    _
  $region45: #{adversarial_denoiser_forward.1} parent=0 // pred_fallthru
    _
  // Predicated region
  $region46: #{adversarial_denoiser_forward.1} parent=0 // pred_check
    _
  $region47: #{adversarial_denoiser_forward.1} parent=0 // pred_check_branch
    %74 = sbr.rel (0) target = $region49
  $region48: #{adversarial_denoiser_forward.1} parent=0 // pred_region
    _
  $region49: #{adversarial_denoiser_forward.1} parent=0 // pred_fallthru
    _
  %s75 = sadd.s32 0, 0
  %s76 = smul.u32 64, %s75
  %p77 = scmp.lt.s32.totalorder %s76, 63
  %s78 = scalar_select %p77, %s76, 63
  %s79 = smul.addr %s78, 4
  %s80 = scalar_lea.vmem %s0, %s79
  %s81 = sadd.s32 0, 0
  %s82 = smul.u32 64, %s81
  %p83 = scmp.lt.s32.totalorder %s82, 63
  %s84 = scalar_select %p83, %s82, 63
  %s85 = smul.addr %s84, 4
  %s86 = scalar_lea.vmem %s1, %s85
  %s87 = sadd.s32 0, 0
  %s88 = smul.u32 4, %s87
  %p89 = scmp.lt.s32.totalorder %s88, 3
  %s90 = scalar_select %p89, %s88, 3
  %s91 = scalar_lea.vmem %s2, %s90
  %s92 = sadd.s32 0, 0
  %s93 = smul.u32 64, %s92
  %p94 = scmp.lt.s32.totalorder %s93, 63
  %s95 = scalar_select %p94, %s93, 63
  %s96 = smul.addr %s95, 8
  %s97 = scalar_lea.vmem %s3, %s96
  %s98 = sadd.s32 0, 0
  %s99 = smul.u32 64, %s98
  %p100 = scmp.lt.s32.totalorder %s99, 63
  %s101 = scalar_select %p100, %s99, 63
  %s102 = smul.addr %s101, 4
  %s103 = scalar_lea.vmem %s12, %s102
  %s104 = sadd.s32 0, 0
  %s105 = smul.u32 64, %s104
  %p106 = scmp.lt.s32.totalorder %s105, 63
  %s107 = scalar_select %p106, %s105, 63
  %s108 = smul.addr %s107, 4
  %s109 = scalar_lea.vmem %s0, %s108
  %s110 = sadd.s32 0, 0
  %s111 = smul.u32 64, %s110
  %s112 = sadd.s32 0, 0
  %s113 = smul.u32 64, %s112
  %p114 = scmp.lt.s32.totalorder %s113, 63
  %s115 = scalar_select %p114, %s113, 63
  %s116 = smul.addr %s115, 4
  %s117 = scalar_lea.vmem %s1, %s116
  %s118 = sadd.s32 0, 0
  %s119 = smul.u32 64, %s118
  %s120 = sadd.s32 0, 0
  %s121 = smul.u32 4, %s120
  %p122 = scmp.lt.s32.totalorder %s121, 3
  %s123 = scalar_select %p122, %s121, 3
  %s124 = scalar_lea.vmem %s2, %s123
  %s125 = sadd.s32 0, 0
  %s126 = smul.u32 4, %s125
  %s127 = sadd.s32 0, 0
  %s128 = smul.u32 64, %s127
  %p129 = scmp.lt.s32.totalorder %s128, 63
  %s130 = scalar_select %p129, %s128, 63
  %s131 = smul.addr %s130, 8
  %s132 = scalar_lea.vmem %s3, %s131
  %s133 = sadd.s32 0, 0
  %s134 = smul.u32 64, %s133
  %s135 = sadd.s32 0, 0
  %s136 = smul.u32 64, %s135
  %p137 = scmp.lt.s32.totalorder %s136, 63
  %s138 = scalar_select %p137, %s136, 63
  %s139 = smul.addr %s138, 4
  %s140 = scalar_lea.vmem %s12, %s139
  %s141 = sadd.s32 0, 0
  %s142 = smul.u32 64, %s141
  %p144 = scmp.eq.s32.totalorder 0, 0
  // Predicated region
  $region50: #{adversarial_denoiser_forward.1} parent=0 // pred_check
    %p145 = pneg %p144
  $region51: #{adversarial_denoiser_forward.1} parent=0 // pred_check_branch
    %147 = sbr.rel (%p145) target = $region53
  $region52: #{adversarial_denoiser_forward.1} parent=0 // pred_region
    %vm148 = vcmask 785408
    %149 = vst.msk [vmem:[%s13] sm:$0xff] %vm148, 0.0
    %150 = vst [vmem:[%s14] sm:$0x1] 0.0
  $region53: #{adversarial_denoiser_forward.1} parent=0 // pred_fallthru
    _
  %v151 = vld [vmem:[%s109] sm:$0xf]
  %v152 = vld [vmem:[%s109 + $0x4] sm:$0xf]
  %v153 = vld [vmem:[%s109 + $0x8] sm:$0xf]
  %v154 = vld [vmem:[%s109 + $0xc] sm:$0xf]
  %v155 = vld [vmem:[%s109 + $0x10] sm:$0xf]
  %v156 = vld [vmem:[%s109 + $0x14] sm:$0xf]
  %v157 = vld [vmem:[%s109 + $0x18] sm:$0xf]
  %v158 = vld [vmem:[%s109 + $0x1c] sm:$0xf]
  %v159 = vld [vmem:[%s109 + $0x20] sm:$0xf]
  %v160 = vld [vmem:[%s109 + $0x24] sm:$0xf]
  %v161 = vld [vmem:[%s109 + $0x28] sm:$0xf]
  %v162 = vld [vmem:[%s109 + $0x2c] sm:$0xf]
  %v163 = vld [vmem:[%s109 + $0x30] sm:$0xf]
  %v164 = vld [vmem:[%s109 + $0x34] sm:$0xf]
  %v165 = vld [vmem:[%s109 + $0x38] sm:$0xf]
  %v166 = vld [vmem:[%s109 + $0x3c] sm:$0xf]
  %v167 = vld [vmem:[%s109 + $0x40] sm:$0xf]
  %v168 = vld [vmem:[%s109 + $0x44] sm:$0xf]
  %v169 = vld [vmem:[%s109 + $0x48] sm:$0xf]
  %v170 = vld [vmem:[%s109 + $0x4c] sm:$0xf]
  %v171 = vld [vmem:[%s109 + $0x50] sm:$0xf]
  %v172 = vld [vmem:[%s109 + $0x54] sm:$0xf]
  %v173 = vld [vmem:[%s109 + $0x58] sm:$0xf]
  %v174 = vld [vmem:[%s109 + $0x5c] sm:$0xf]
  %v175 = vld [vmem:[%s109 + $0x60] sm:$0xf]
  %v176 = vld [vmem:[%s109 + $0x64] sm:$0xf]
  %v177 = vld [vmem:[%s109 + $0x68] sm:$0xf]
  %v178 = vld [vmem:[%s109 + $0x6c] sm:$0xf]
  %v179 = vld [vmem:[%s109 + $0x70] sm:$0xf]
  %v180 = vld [vmem:[%s109 + $0x74] sm:$0xf]
  %v181 = vld [vmem:[%s109 + $0x78] sm:$0xf]
  %v182 = vld [vmem:[%s109 + $0x7c] sm:$0xf]
  %v183 = vld [vmem:[%s109 + $0x80] sm:$0xf]
  %v184 = vld [vmem:[%s109 + $0x84] sm:$0xf]
  %v185 = vld [vmem:[%s109 + $0x88] sm:$0xf]
  %v186 = vld [vmem:[%s109 + $0x8c] sm:$0xf]
  %v187 = vld [vmem:[%s109 + $0x90] sm:$0xf]
  %v188 = vld [vmem:[%s109 + $0x94] sm:$0xf]
  %v189 = vld [vmem:[%s109 + $0x98] sm:$0xf]
  %v190 = vld [vmem:[%s109 + $0x9c] sm:$0xf]
  %v191 = vld [vmem:[%s109 + $0xa0] sm:$0xf]
  %v192 = vld [vmem:[%s109 + $0xa4] sm:$0xf]
  %v193 = vld [vmem:[%s109 + $0xa8] sm:$0xf]
  %v194 = vld [vmem:[%s109 + $0xac] sm:$0xf]
  %v195 = vld [vmem:[%s109 + $0xb0] sm:$0xf]
  %v196 = vld [vmem:[%s109 + $0xb4] sm:$0xf]
  %v197 = vld [vmem:[%s109 + $0xb8] sm:$0xf]
  %v198 = vld [vmem:[%s109 + $0xbc] sm:$0xf]
  %v199 = vld [vmem:[%s109 + $0xc0] sm:$0xf]
  %v200 = vld [vmem:[%s109 + $0xc4] sm:$0xf]
  %v201 = vld [vmem:[%s109 + $0xc8] sm:$0xf]
  %v202 = vld [vmem:[%s109 + $0xcc] sm:$0xf]
  %v203 = vld [vmem:[%s109 + $0xd0] sm:$0xf]
  %v204 = vld [vmem:[%s109 + $0xd4] sm:$0xf]
  %v205 = vld [vmem:[%s109 + $0xd8] sm:$0xf]
  %v206 = vld [vmem:[%s109 + $0xdc] sm:$0xf]
  %v207 = vld [vmem:[%s109 + $0xe0] sm:$0xf]
  %v208 = vld [vmem:[%s109 + $0xe4] sm:$0xf]
  %v209 = vld [vmem:[%s109 + $0xe8] sm:$0xf]
  %v210 = vld [vmem:[%s109 + $0xec] sm:$0xf]
  %v211 = vld [vmem:[%s109 + $0xf0] sm:$0xf]
  %v212 = vld [vmem:[%s109 + $0xf4] sm:$0xf]
  %v213 = vld [vmem:[%s109 + $0xf8] sm:$0xf]
  %v214 = vld [vmem:[%s109 + $0xfc] sm:$0xf]
  %v215 = vld [vmem:[%s4] sm:$0x3]
  %v216 = vld [vmem:[%s5] sm:$0x1]
  %v218 = vperm.slane %v216, 0
  %v284 = vunpack.c.l.b16 %v151
  %v285 = vunpack.c.l.b16 %v152
  %v286 = vunpack.c.l.b16 %v153
  %v287 = vunpack.c.l.b16 %v154
  %v288 = vunpack.c.l.b16 %v155
  %v289 = vunpack.c.l.b16 %v156
  %v290 = vunpack.c.l.b16 %v157
  %v291 = vunpack.c.l.b16 %v158
  %v292 = vunpack.c.l.b16 %v159
  %v293 = vunpack.c.l.b16 %v160
  %v294 = vunpack.c.l.b16 %v161
  %v295 = vunpack.c.l.b16 %v162
  %v296 = vunpack.c.l.b16 %v163
  %v297 = vunpack.c.l.b16 %v164
  %v298 = vunpack.c.l.b16 %v165
  %v299 = vunpack.c.l.b16 %v166
  %v300 = vunpack.c.l.b16 %v167
  %v301 = vunpack.c.l.b16 %v168
  %v302 = vunpack.c.l.b16 %v169
  %v303 = vunpack.c.l.b16 %v170
  %v304 = vunpack.c.l.b16 %v171
  %v305 = vunpack.c.l.b16 %v172
  %v306 = vunpack.c.l.b16 %v173
  %v307 = vunpack.c.l.b16 %v174
  %v308 = vunpack.c.l.b16 %v175
  %v309 = vunpack.c.l.b16 %v176
  %v310 = vunpack.c.l.b16 %v177
  %v311 = vunpack.c.l.b16 %v178
  %v312 = vunpack.c.l.b16 %v179
  %v313 = vunpack.c.l.b16 %v180
  %v314 = vunpack.c.l.b16 %v181
  %v315 = vunpack.c.l.b16 %v182
  %v316 = vunpack.c.l.b16 %v183
  %v317 = vunpack.c.l.b16 %v184
  %v318 = vunpack.c.l.b16 %v185
  %v319 = vunpack.c.l.b16 %v186
  %v320 = vunpack.c.l.b16 %v187
  %v321 = vunpack.c.l.b16 %v188
  %v322 = vunpack.c.l.b16 %v189
  %v323 = vunpack.c.l.b16 %v190
  %v324 = vunpack.c.l.b16 %v191
  %v325 = vunpack.c.l.b16 %v192
  %v326 = vunpack.c.l.b16 %v193
  %v327 = vunpack.c.l.b16 %v194
  %v328 = vunpack.c.l.b16 %v195
  %v329 = vunpack.c.l.b16 %v196
  %v330 = vunpack.c.l.b16 %v197
  %v331 = vunpack.c.l.b16 %v198
  %v332 = vunpack.c.l.b16 %v199
  %v333 = vunpack.c.l.b16 %v200
  %v334 = vunpack.c.l.b16 %v201
  %v335 = vunpack.c.l.b16 %v202
  %v336 = vunpack.c.l.b16 %v203
  %v337 = vunpack.c.l.b16 %v204
  %v338 = vunpack.c.l.b16 %v205
  %v339 = vunpack.c.l.b16 %v206
  %v340 = vunpack.c.l.b16 %v207
  %v341 = vunpack.c.l.b16 %v208
  %v342 = vunpack.c.l.b16 %v209
  %v343 = vunpack.c.l.b16 %v210
  %v344 = vunpack.c.l.b16 %v211
  %v345 = vunpack.c.l.b16 %v212
  %v346 = vunpack.c.l.b16 %v213
  %v347 = vunpack.c.l.b16 %v214
  %v348 = vpack.c.b16 %v285, %v284
  %v349 = vpack.c.b16 %v287, %v286
  %v350 = vpack.c.b16 %v289, %v288
  %v351 = vpack.c.b16 %v291, %v290
  %v352 = vpack.c.b16 %v293, %v292
  %v353 = vpack.c.b16 %v295, %v294
  %v354 = vpack.c.b16 %v297, %v296
  %v355 = vpack.c.b16 %v299, %v298
  %v356 = vpack.c.b16 %v301, %v300
  %v357 = vpack.c.b16 %v303, %v302
  %v358 = vpack.c.b16 %v305, %v304
  %v359 = vpack.c.b16 %v307, %v306
  %v360 = vpack.c.b16 %v309, %v308
  %v361 = vpack.c.b16 %v311, %v310
  %v362 = vpack.c.b16 %v313, %v312
  %v363 = vpack.c.b16 %v315, %v314
  %v364 = vpack.c.b16 %v317, %v316
  %v365 = vpack.c.b16 %v319, %v318
  %v366 = vpack.c.b16 %v321, %v320
  %v367 = vpack.c.b16 %v323, %v322
  %v368 = vpack.c.b16 %v325, %v324
  %v369 = vpack.c.b16 %v327, %v326
  %v370 = vpack.c.b16 %v329, %v328
  %v371 = vpack.c.b16 %v331, %v330
  %v372 = vpack.c.b16 %v333, %v332
  %v373 = vpack.c.b16 %v335, %v334
  %v374 = vpack.c.b16 %v337, %v336
  %v375 = vpack.c.b16 %v339, %v338
  %v376 = vpack.c.b16 %v341, %v340
  %v377 = vpack.c.b16 %v343, %v342
  %v378 = vpack.c.b16 %v345, %v344
  %v379 = vpack.c.b16 %v347, %v346
  %vm380 = vcmask 31744
  %v382 = vsel %vm380, %v348, 0
  %v385 = vsel %vm380, %v349, 0
  %v388 = vsel %vm380, %v350, 0
  %v391 = vsel %vm380, %v351, 0
  %v394 = vsel %vm380, %v352, 0
  %v397 = vsel %vm380, %v353, 0
  %v400 = vsel %vm380, %v354, 0
  %v403 = vsel %vm380, %v355, 0
  %v406 = vsel %vm380, %v356, 0
  %v409 = vsel %vm380, %v357, 0
  %v412 = vsel %vm380, %v358, 0
  %v415 = vsel %vm380, %v359, 0
  %v418 = vsel %vm380, %v360, 0
  %v421 = vsel %vm380, %v361, 0
  %v424 = vsel %vm380, %v362, 0
  %v427 = vsel %vm380, %v363, 0
  %v430 = vsel %vm380, %v364, 0
  %v433 = vsel %vm380, %v365, 0
  %v436 = vsel %vm380, %v366, 0
  %v439 = vsel %vm380, %v367, 0
  %v442 = vsel %vm380, %v368, 0
  %v445 = vsel %vm380, %v369, 0
  %v448 = vsel %vm380, %v370, 0
  %v451 = vsel %vm380, %v371, 0
  %v454 = vsel %vm380, %v372, 0
  %v457 = vsel %vm380, %v373, 0
  %v460 = vsel %vm380, %v374, 0
  %v463 = vsel %vm380, %v375, 0
  %v466 = vsel %vm380, %v376, 0
  %v469 = vsel %vm380, %v377, 0
  %v472 = vsel %vm380, %v378, 0
  %v475 = vsel %vm380, %v379, 0
  %vm477 = vcmask 1041408
  %v479 = vsel %vm477, %v215, 0
  %481 = vmatpush.bf16.msra.mxu0 0
  %482 = vmatpush.bf16.msra.mxu0 0
  %483 = vmatpush.bf16.msra.mxu0 0
  %484 = vmatpush.bf16.msra.mxu0 0
  %485 = vmatpush.bf16.msra.mxu0 0
  %486 = vmatpush.bf16.msra.mxu0 0
  %487 = vmatpush.bf16.msra.mxu0 0
  %488 = vmatpush.bf16.msra.mxu0 %v479
  %489 = vmatmul.bf16.gmra.mxu0 %v382
  %v490 = vpop.f32.mrf.mxu0
  %v491 = vadd.f32 %v218, %v490
  %v492 = vpop.f32.mrf.mxu0
  %v493 = vadd.f32 %v218, %v492
  %494 = vmatmul.bf16.gmra.mxu0 %v385
  %v495 = vpop.f32.mrf.mxu0
  %v496 = vadd.f32 %v218, %v495
  %v497 = vpop.f32.mrf.mxu0
  %v498 = vadd.f32 %v218, %v497
  %499 = vmatmul.bf16.gmra.mxu0 %v388
  %v500 = vpop.f32.mrf.mxu0
  %v501 = vadd.f32 %v218, %v500
  %v502 = vpop.f32.mrf.mxu0
  %v503 = vadd.f32 %v218, %v502
  %504 = vmatmul.bf16.gmra.mxu0 %v391
  %v505 = vpop.f32.mrf.mxu0
  %v506 = vadd.f32 %v218, %v505
  %v507 = vpop.f32.mrf.mxu0
  %v508 = vadd.f32 %v218, %v507
  %509 = vmatmul.bf16.gmra.mxu0 %v394
  %v510 = vpop.f32.mrf.mxu0
  %v511 = vadd.f32 %v218, %v510
  %v512 = vpop.f32.mrf.mxu0
  %v513 = vadd.f32 %v218, %v512
  %514 = vmatmul.bf16.gmra.mxu0 %v397
  %v515 = vpop.f32.mrf.mxu0
  %v516 = vadd.f32 %v218, %v515
  %v517 = vpop.f32.mrf.mxu0
  %v518 = vadd.f32 %v218, %v517
  %519 = vmatmul.bf16.gmra.mxu0 %v400
  %v520 = vpop.f32.mrf.mxu0
  %v521 = vadd.f32 %v218, %v520
  %v522 = vpop.f32.mrf.mxu0
  %v523 = vadd.f32 %v218, %v522
  %524 = vmatmul.bf16.gmra.mxu0 %v403
  %v525 = vpop.f32.mrf.mxu0
  %v526 = vadd.f32 %v218, %v525
  %v527 = vpop.f32.mrf.mxu0
  %v528 = vadd.f32 %v218, %v527
  %529 = vmatmul.bf16.gmra.mxu0 %v406
  %v530 = vpop.f32.mrf.mxu0
  %v531 = vadd.f32 %v218, %v530
  %v532 = vpop.f32.mrf.mxu0
  %v533 = vadd.f32 %v218, %v532
  %534 = vmatmul.bf16.gmra.mxu0 %v409
  %v535 = vpop.f32.mrf.mxu0
  %v536 = vadd.f32 %v218, %v535
  %v537 = vpop.f32.mrf.mxu0
  %v538 = vadd.f32 %v218, %v537
  %539 = vmatmul.bf16.gmra.mxu0 %v412
  %v540 = vpop.f32.mrf.mxu0
  %v541 = vadd.f32 %v218, %v540
  %v542 = vpop.f32.mrf.mxu0
  %v543 = vadd.f32 %v218, %v542
  %544 = vmatmul.bf16.gmra.mxu0 %v415
  %v545 = vpop.f32.mrf.mxu0
  %v546 = vadd.f32 %v218, %v545
  %v547 = vpop.f32.mrf.mxu0
  %v548 = vadd.f32 %v218, %v547
  %549 = vmatmul.bf16.gmra.mxu0 %v418
  %v550 = vpop.f32.mrf.mxu0
  %v551 = vadd.f32 %v218, %v550
  %v552 = vpop.f32.mrf.mxu0
  %v553 = vadd.f32 %v218, %v552
  %554 = vmatmul.bf16.gmra.mxu0 %v421
  %v555 = vpop.f32.mrf.mxu0
  %v556 = vadd.f32 %v218, %v555
  %v557 = vpop.f32.mrf.mxu0
  %v558 = vadd.f32 %v218, %v557
  %559 = vmatmul.bf16.gmra.mxu0 %v424
  %v560 = vpop.f32.mrf.mxu0
  %v561 = vadd.f32 %v218, %v560
  %v562 = vpop.f32.mrf.mxu0
  %v563 = vadd.f32 %v218, %v562
  %564 = vmatmul.bf16.gmra.mxu0 %v427
  %v565 = vpop.f32.mrf.mxu0
  %v566 = vadd.f32 %v218, %v565
  %v567 = vpop.f32.mrf.mxu0
  %v568 = vadd.f32 %v218, %v567
  %569 = vmatmul.bf16.gmra.mxu0 %v430
  %v570 = vpop.f32.mrf.mxu0
  %v571 = vadd.f32 %v218, %v570
  %v572 = vpop.f32.mrf.mxu0
  %v573 = vadd.f32 %v218, %v572
  %574 = vmatmul.bf16.gmra.mxu0 %v433
  %v575 = vpop.f32.mrf.mxu0
  %v576 = vadd.f32 %v218, %v575
  %v577 = vpop.f32.mrf.mxu0
  %v578 = vadd.f32 %v218, %v577
  %579 = vmatmul.bf16.gmra.mxu0 %v436
  %v580 = vpop.f32.mrf.mxu0
  %v581 = vadd.f32 %v218, %v580
  %v582 = vpop.f32.mrf.mxu0
  %v583 = vadd.f32 %v218, %v582
  %584 = vmatmul.bf16.gmra.mxu0 %v439
  %v585 = vpop.f32.mrf.mxu0
  %v586 = vadd.f32 %v218, %v585
  %v587 = vpop.f32.mrf.mxu0
  %v588 = vadd.f32 %v218, %v587
  %589 = vmatmul.bf16.gmra.mxu0 %v442
  %v590 = vpop.f32.mrf.mxu0
  %v591 = vadd.f32 %v218, %v590
  %v592 = vpop.f32.mrf.mxu0
  %v593 = vadd.f32 %v218, %v592
  %594 = vmatmul.bf16.gmra.mxu0 %v445
  %v595 = vpop.f32.mrf.mxu0
  %v596 = vadd.f32 %v218, %v595
  %v597 = vpop.f32.mrf.mxu0
  %v598 = vadd.f32 %v218, %v597
  %599 = vmatmul.bf16.gmra.mxu0 %v448
  %v600 = vpop.f32.mrf.mxu0
  %v601 = vadd.f32 %v218, %v600
  %v602 = vpop.f32.mrf.mxu0
  %v603 = vadd.f32 %v218, %v602
  %604 = vmatmul.bf16.gmra.mxu0 %v451
  %v605 = vpop.f32.mrf.mxu0
  %v606 = vadd.f32 %v218, %v605
  %v607 = vpop.f32.mrf.mxu0
  %v608 = vadd.f32 %v218, %v607
  %609 = vmatmul.bf16.gmra.mxu0 %v454
  %v610 = vpop.f32.mrf.mxu0
  %v611 = vadd.f32 %v218, %v610
  %v612 = vpop.f32.mrf.mxu0
  %v613 = vadd.f32 %v218, %v612
  %614 = vmatmul.bf16.gmra.mxu0 %v457
  %v615 = vpop.f32.mrf.mxu0
  %v616 = vadd.f32 %v218, %v615
  %v617 = vpop.f32.mrf.mxu0
  %v618 = vadd.f32 %v218, %v617
  %619 = vmatmul.bf16.gmra.mxu0 %v460
  %v620 = vpop.f32.mrf.mxu0
  %v621 = vadd.f32 %v218, %v620
  %v622 = vpop.f32.mrf.mxu0
  %v623 = vadd.f32 %v218, %v622
  %624 = vmatmul.bf16.gmra.mxu0 %v463
  %v625 = vpop.f32.mrf.mxu0
  %v626 = vadd.f32 %v218, %v625
  %v627 = vpop.f32.mrf.mxu0
  %v628 = vadd.f32 %v218, %v627
  %629 = vmatmul.bf16.gmra.mxu0 %v466
  %v630 = vpop.f32.mrf.mxu0
  %v631 = vadd.f32 %v218, %v630
  %v632 = vpop.f32.mrf.mxu0
  %v633 = vadd.f32 %v218, %v632
  %634 = vmatmul.bf16.gmra.mxu0 %v469
  %v635 = vpop.f32.mrf.mxu0
  %v636 = vadd.f32 %v218, %v635
  %v637 = vpop.f32.mrf.mxu0
  %v638 = vadd.f32 %v218, %v637
  %639 = vmatmul.bf16.gmra.mxu0 %v472
  %v640 = vpop.f32.mrf.mxu0
  %v641 = vadd.f32 %v218, %v640
  %v642 = vpop.f32.mrf.mxu0
  %v643 = vadd.f32 %v218, %v642
  %644 = vmatmul.bf16.gmra.mxu0 %v475
  %v645 = vpop.f32.mrf.mxu0
  %v646 = vadd.f32 %v218, %v645
  %v647 = vpop.f32.mrf.mxu0
  %v648 = vadd.f32 %v218, %v647
  %649 = vdwg.mxu0
  %v650 = vmax.f32 %v491, 0.0
  %v651 = vmax.f32 %v493, 0.0
  %v652 = vmax.f32 %v496, 0.0
  %v653 = vmax.f32 %v498, 0.0
  %v654 = vmax.f32 %v501, 0.0
  %v655 = vmax.f32 %v503, 0.0
  %v656 = vmax.f32 %v506, 0.0
  %v657 = vmax.f32 %v508, 0.0
  %v658 = vmax.f32 %v511, 0.0
  %v659 = vmax.f32 %v513, 0.0
  %v660 = vmax.f32 %v516, 0.0
  %v661 = vmax.f32 %v518, 0.0
  %v662 = vmax.f32 %v521, 0.0
  %v663 = vmax.f32 %v523, 0.0
  %v664 = vmax.f32 %v526, 0.0
  %v665 = vmax.f32 %v528, 0.0
  %v666 = vmax.f32 %v531, 0.0
  %v667 = vmax.f32 %v533, 0.0
  %v668 = vmax.f32 %v536, 0.0
  %v669 = vmax.f32 %v538, 0.0
  %v670 = vmax.f32 %v541, 0.0
  %v671 = vmax.f32 %v543, 0.0
  %v672 = vmax.f32 %v546, 0.0
  %v673 = vmax.f32 %v548, 0.0
  %v674 = vmax.f32 %v551, 0.0
  %v675 = vmax.f32 %v553, 0.0
  %v676 = vmax.f32 %v556, 0.0
  %v677 = vmax.f32 %v558, 0.0
  %v678 = vmax.f32 %v561, 0.0
  %v679 = vmax.f32 %v563, 0.0
  %v680 = vmax.f32 %v566, 0.0
  %v681 = vmax.f32 %v568, 0.0
  %v682 = vmax.f32 %v571, 0.0
  %v683 = vmax.f32 %v573, 0.0
  %v684 = vmax.f32 %v576, 0.0
  %v685 = vmax.f32 %v578, 0.0
  %v686 = vmax.f32 %v581, 0.0
  %v687 = vmax.f32 %v583, 0.0
  %v688 = vmax.f32 %v586, 0.0
  %v689 = vmax.f32 %v588, 0.0
  %v690 = vmax.f32 %v591, 0.0
  %v691 = vmax.f32 %v593, 0.0
  %v692 = vmax.f32 %v596, 0.0
  %v693 = vmax.f32 %v598, 0.0
  %v694 = vmax.f32 %v601, 0.0
  %v695 = vmax.f32 %v603, 0.0
  %v696 = vmax.f32 %v606, 0.0
  %v697 = vmax.f32 %v608, 0.0
  %v698 = vmax.f32 %v611, 0.0
  %v699 = vmax.f32 %v613, 0.0
  %v700 = vmax.f32 %v616, 0.0
  %v701 = vmax.f32 %v618, 0.0
  %v702 = vmax.f32 %v621, 0.0
  %v703 = vmax.f32 %v623, 0.0
  %v704 = vmax.f32 %v626, 0.0
  %v705 = vmax.f32 %v628, 0.0
  %v706 = vmax.f32 %v631, 0.0
  %v707 = vmax.f32 %v633, 0.0
  %v708 = vmax.f32 %v636, 0.0
  %v709 = vmax.f32 %v638, 0.0
  %v710 = vmax.f32 %v641, 0.0
  %v711 = vmax.f32 %v643, 0.0
  %v712 = vmax.f32 %v646, 0.0
  %v713 = vmax.f32 %v648, 0.0
  %v714 = vpack.c.bf16 %v651, %v650
  %v715 = vpack.c.bf16 %v653, %v652
  %v716 = vpack.c.bf16 %v655, %v654
  %v717 = vpack.c.bf16 %v657, %v656
  %v718 = vpack.c.bf16 %v659, %v658
  %v719 = vpack.c.bf16 %v661, %v660
  %v720 = vpack.c.bf16 %v663, %v662
  %v721 = vpack.c.bf16 %v665, %v664
  %v722 = vpack.c.bf16 %v667, %v666
  %v723 = vpack.c.bf16 %v669, %v668
  %v724 = vpack.c.bf16 %v671, %v670
  %v725 = vpack.c.bf16 %v673, %v672
  %v726 = vpack.c.bf16 %v675, %v674
  %v727 = vpack.c.bf16 %v677, %v676
  %v728 = vpack.c.bf16 %v679, %v678
  %v729 = vpack.c.bf16 %v681, %v680
  %v730 = vpack.c.bf16 %v683, %v682
  %v731 = vpack.c.bf16 %v685, %v684
  %v732 = vpack.c.bf16 %v687, %v686
  %v733 = vpack.c.bf16 %v689, %v688
  %v734 = vpack.c.bf16 %v691, %v690
  %v735 = vpack.c.bf16 %v693, %v692
  %v736 = vpack.c.bf16 %v695, %v694
  %v737 = vpack.c.bf16 %v697, %v696
  %v738 = vpack.c.bf16 %v699, %v698
  %v739 = vpack.c.bf16 %v701, %v700
  %v740 = vpack.c.bf16 %v703, %v702
  %v741 = vpack.c.bf16 %v705, %v704
  %v742 = vpack.c.bf16 %v707, %v706
  %v743 = vpack.c.bf16 %v709, %v708
  %v744 = vpack.c.bf16 %v711, %v710
  %v745 = vpack.c.bf16 %v713, %v712
  %v746 = vld [vmem:[%s6] sm:$0xff]
  %v747 = vld [vmem:[%s6 + $0x8] sm:$0xff]
  %v748 = vld [vmem:[%s6 + $0x10] sm:$0xff]
  %v749 = vld [vmem:[%s6 + $0x18] sm:$0xff]
  %v750 = vld [vmem:[%s6 + $0x20] sm:$0xff]
  %v751 = vld [vmem:[%s6 + $0x28] sm:$0xff]
  %v752 = vld [vmem:[%s6 + $0x30] sm:$0xff]
  %v753 = vld [vmem:[%s6 + $0x38] sm:$0xff]
  %v754 = vld [vmem:[%s6 + $0x40] sm:$0xff]
  %v755 = vld [vmem:[%s6 + $0x48] sm:$0xff]
  %v756 = vld [vmem:[%s6 + $0x50] sm:$0xff]
  %v757 = vld [vmem:[%s6 + $0x58] sm:$0xff]
  %v758 = vld [vmem:[%s7] sm:$0x3]
  %v760 = vperm.slane %v758, 0
  %v761 = vperm.slane %v758, 1
  %v776 = vunpack.c.l.b16 %v746
  %v777 = vunpack.c.h.b16 %v746
  %v778 = vunpack.c.l.b16 %v747
  %v779 = vunpack.c.h.b16 %v747
  %v780 = vunpack.c.l.b16 %v748
  %v781 = vunpack.c.h.b16 %v748
  %v782 = vunpack.c.l.b16 %v749
  %v783 = vunpack.c.h.b16 %v749
  %v784 = vunpack.c.l.b16 %v750
  %v785 = vunpack.c.h.b16 %v750
  %v786 = vunpack.c.l.b16 %v751
  %v787 = vunpack.c.h.b16 %v751
  %v788 = vunpack.c.l.b16 %v752
  %v789 = vunpack.c.h.b16 %v752
  %v790 = vunpack.c.l.b16 %v753
  %v791 = vunpack.c.h.b16 %v753
  %v792 = vunpack.c.l.b16 %v754
  %v793 = vunpack.c.h.b16 %v754
  %v794 = vunpack.c.l.b16 %v755
  %v795 = vunpack.c.h.b16 %v755
  %v796 = vunpack.c.l.b16 %v756
  %v797 = vunpack.c.h.b16 %v756
  %v798 = vunpack.c.l.b16 %v757
  %v799 = vunpack.c.h.b16 %v757
  %v800 = vpack.c.b16 %v778, %v776
  %v801 = vpack.c.b16 %v779, %v777
  %v802 = vpack.c.b16 %v782, %v780
  %v803 = vpack.c.b16 %v783, %v781
  %v804 = vpack.c.b16 %v786, %v784
  %v805 = vpack.c.b16 %v787, %v785
  %v806 = vpack.c.b16 %v790, %v788
  %v807 = vpack.c.b16 %v791, %v789
  %v808 = vpack.c.b16 %v794, %v792
  %v809 = vpack.c.b16 %v795, %v793
  %v810 = vpack.c.b16 %v798, %v796
  %v811 = vpack.c.b16 %v799, %v797
  %vm824 = vcmask 785408
  %v826 = vsel %vm824, %v714, 0
  %v829 = vsel %vm824, %v715, 0
  %v832 = vsel %vm824, %v716, 0
  %v835 = vsel %vm824, %v717, 0
  %v838 = vsel %vm824, %v718, 0
  %v841 = vsel %vm824, %v719, 0
  %v844 = vsel %vm824, %v720, 0
  %v847 = vsel %vm824, %v721, 0
  %v850 = vsel %vm824, %v722, 0
  %v853 = vsel %vm824, %v723, 0
  %v856 = vsel %vm824, %v724, 0
  %v859 = vsel %vm824, %v725, 0
  %v862 = vsel %vm824, %v726, 0
  %v865 = vsel %vm824, %v727, 0
  %v868 = vsel %vm824, %v728, 0
  %v871 = vsel %vm824, %v729, 0
  %v874 = vsel %vm824, %v730, 0
  %v877 = vsel %vm824, %v731, 0
  %v880 = vsel %vm824, %v732, 0
  %v883 = vsel %vm824, %v733, 0
  %v886 = vsel %vm824, %v734, 0
  %v889 = vsel %vm824, %v735, 0
  %v892 = vsel %vm824, %v736, 0
  %v895 = vsel %vm824, %v737, 0
  %v898 = vsel %vm824, %v738, 0
  %v901 = vsel %vm824, %v739, 0
  %v904 = vsel %vm824, %v740, 0
  %v907 = vsel %vm824, %v741, 0
  %v910 = vsel %vm824, %v742, 0
  %v913 = vsel %vm824, %v743, 0
  %v916 = vsel %vm824, %v744, 0
  %v919 = vsel %vm824, %v745, 0
  %921 = vmatpush.bf16.msra.mxu0 0
  %922 = vmatpush.bf16.msra.mxu0 0
  %923 = vmatpush.bf16.msra.mxu0 %v810
  %924 = vmatpush.bf16.msra.mxu0 %v808
  %925 = vmatpush.bf16.msra.mxu0 %v806
  %926 = vmatpush.bf16.msra.mxu0 %v804
  %927 = vmatpush.bf16.msra.mxu0 %v802
  %928 = vmatpush.bf16.msra.mxu0 %v800
  %929 = vmatmul.bf16.gmra.mxu0 %v826
  %v930 = vpop.f32.mrf.mxu0
  %v931 = vadd.f32 %v760, %v930
  %v932 = vpop.f32.mrf.mxu0
  %v933 = vadd.f32 %v760, %v932
  %934 = vmatmul.bf16.gmra.mxu0 %v829
  %v935 = vpop.f32.mrf.mxu0
  %v936 = vadd.f32 %v760, %v935
  %v937 = vpop.f32.mrf.mxu0
  %v938 = vadd.f32 %v760, %v937
  %939 = vmatmul.bf16.gmra.mxu0 %v832
  %v940 = vpop.f32.mrf.mxu0
  %v941 = vadd.f32 %v760, %v940
  %v942 = vpop.f32.mrf.mxu0
  %v943 = vadd.f32 %v760, %v942
  %944 = vmatmul.bf16.gmra.mxu0 %v835
  %v945 = vpop.f32.mrf.mxu0
  %v946 = vadd.f32 %v760, %v945
  %v947 = vpop.f32.mrf.mxu0
  %v948 = vadd.f32 %v760, %v947
  %949 = vmatmul.bf16.gmra.mxu0 %v838
  %v950 = vpop.f32.mrf.mxu0
  %v951 = vadd.f32 %v760, %v950
  %v952 = vpop.f32.mrf.mxu0
  %v953 = vadd.f32 %v760, %v952
  %954 = vmatmul.bf16.gmra.mxu0 %v841
  %v955 = vpop.f32.mrf.mxu0
  %v956 = vadd.f32 %v760, %v955
  %v957 = vpop.f32.mrf.mxu0
  %v958 = vadd.f32 %v760, %v957
  %959 = vmatmul.bf16.gmra.mxu0 %v844
  %v960 = vpop.f32.mrf.mxu0
  %v961 = vadd.f32 %v760, %v960
  %v962 = vpop.f32.mrf.mxu0
  %v963 = vadd.f32 %v760, %v962
  %964 = vmatmul.bf16.gmra.mxu0 %v847
  %v965 = vpop.f32.mrf.mxu0
  %v966 = vadd.f32 %v760, %v965
  %v967 = vpop.f32.mrf.mxu0
  %v968 = vadd.f32 %v760, %v967
  %969 = vmatmul.bf16.gmra.mxu0 %v850
  %v970 = vpop.f32.mrf.mxu0
  %v971 = vadd.f32 %v760, %v970
  %v972 = vpop.f32.mrf.mxu0
  %v973 = vadd.f32 %v760, %v972
  %974 = vmatmul.bf16.gmra.mxu0 %v853
  %v975 = vpop.f32.mrf.mxu0
  %v976 = vadd.f32 %v760, %v975
  %v977 = vpop.f32.mrf.mxu0
  %v978 = vadd.f32 %v760, %v977
  %979 = vmatmul.bf16.gmra.mxu0 %v856
  %v980 = vpop.f32.mrf.mxu0
  %v981 = vadd.f32 %v760, %v980
  %v982 = vpop.f32.mrf.mxu0
  %v983 = vadd.f32 %v760, %v982
  %984 = vmatmul.bf16.gmra.mxu0 %v859
  %v985 = vpop.f32.mrf.mxu0
  %v986 = vadd.f32 %v760, %v985
  %v987 = vpop.f32.mrf.mxu0
  %v988 = vadd.f32 %v760, %v987
  %989 = vmatmul.bf16.gmra.mxu0 %v862
  %v990 = vpop.f32.mrf.mxu0
  %v991 = vadd.f32 %v760, %v990
  %v992 = vpop.f32.mrf.mxu0
  %v993 = vadd.f32 %v760, %v992
  %994 = vmatmul.bf16.gmra.mxu0 %v865
  %v995 = vpop.f32.mrf.mxu0
  %v996 = vadd.f32 %v760, %v995
  %v997 = vpop.f32.mrf.mxu0
  %v998 = vadd.f32 %v760, %v997
  %999 = vmatmul.bf16.gmra.mxu0 %v868
  %v1000 = vpop.f32.mrf.mxu0
  %v1001 = vadd.f32 %v760, %v1000
  %v1002 = vpop.f32.mrf.mxu0
  %v1003 = vadd.f32 %v760, %v1002
  %1004 = vmatmul.bf16.gmra.mxu0 %v871
  %v1005 = vpop.f32.mrf.mxu0
  %v1006 = vadd.f32 %v760, %v1005
  %v1007 = vpop.f32.mrf.mxu0
  %v1008 = vadd.f32 %v760, %v1007
  %1009 = vmatmul.bf16.gmra.mxu0 %v874
  %v1010 = vpop.f32.mrf.mxu0
  %v1011 = vadd.f32 %v760, %v1010
  %v1012 = vpop.f32.mrf.mxu0
  %v1013 = vadd.f32 %v760, %v1012
  %1014 = vmatmul.bf16.gmra.mxu0 %v877
  %v1015 = vpop.f32.mrf.mxu0
  %v1016 = vadd.f32 %v760, %v1015
  %v1017 = vpop.f32.mrf.mxu0
  %v1018 = vadd.f32 %v760, %v1017
  %1019 = vmatmul.bf16.gmra.mxu0 %v880
  %v1020 = vpop.f32.mrf.mxu0
  %v1021 = vadd.f32 %v760, %v1020
  %v1022 = vpop.f32.mrf.mxu0
  %v1023 = vadd.f32 %v760, %v1022
  %1024 = vmatmul.bf16.gmra.mxu0 %v883
  %v1025 = vpop.f32.mrf.mxu0
  %v1026 = vadd.f32 %v760, %v1025
  %v1027 = vpop.f32.mrf.mxu0
  %v1028 = vadd.f32 %v760, %v1027
  %1029 = vmatmul.bf16.gmra.mxu0 %v886
  %v1030 = vpop.f32.mrf.mxu0
  %v1031 = vadd.f32 %v760, %v1030
  %v1032 = vpop.f32.mrf.mxu0
  %v1033 = vadd.f32 %v760, %v1032
  %1034 = vmatmul.bf16.gmra.mxu0 %v889
  %v1035 = vpop.f32.mrf.mxu0
  %v1036 = vadd.f32 %v760, %v1035
  %v1037 = vpop.f32.mrf.mxu0
  %v1038 = vadd.f32 %v760, %v1037
  %1039 = vmatmul.bf16.gmra.mxu0 %v892
  %v1040 = vpop.f32.mrf.mxu0
  %v1041 = vadd.f32 %v760, %v1040
  %v1042 = vpop.f32.mrf.mxu0
  %v1043 = vadd.f32 %v760, %v1042
  %1044 = vmatmul.bf16.gmra.mxu0 %v895
  %v1045 = vpop.f32.mrf.mxu0
  %v1046 = vadd.f32 %v760, %v1045
  %v1047 = vpop.f32.mrf.mxu0
  %v1048 = vadd.f32 %v760, %v1047
  %1049 = vmatmul.bf16.gmra.mxu0 %v898
  %v1050 = vpop.f32.mrf.mxu0
  %v1051 = vadd.f32 %v760, %v1050
  %v1052 = vpop.f32.mrf.mxu0
  %v1053 = vadd.f32 %v760, %v1052
  %1054 = vmatmul.bf16.gmra.mxu0 %v901
  %v1055 = vpop.f32.mrf.mxu0
  %v1056 = vadd.f32 %v760, %v1055
  %v1057 = vpop.f32.mrf.mxu0
  %v1058 = vadd.f32 %v760, %v1057
  %1059 = vmatmul.bf16.gmra.mxu0 %v904
  %v1060 = vpop.f32.mrf.mxu0
  %v1061 = vadd.f32 %v760, %v1060
  %v1062 = vpop.f32.mrf.mxu0
  %v1063 = vadd.f32 %v760, %v1062
  %1064 = vmatmul.bf16.gmra.mxu0 %v907
  %v1065 = vpop.f32.mrf.mxu0
  %v1066 = vadd.f32 %v760, %v1065
  %v1067 = vpop.f32.mrf.mxu0
  %v1068 = vadd.f32 %v760, %v1067
  %1069 = vmatmul.bf16.gmra.mxu0 %v910
  %v1070 = vpop.f32.mrf.mxu0
  %v1071 = vadd.f32 %v760, %v1070
  %v1072 = vpop.f32.mrf.mxu0
  %v1073 = vadd.f32 %v760, %v1072
  %1074 = vmatmul.bf16.gmra.mxu0 %v913
  %v1075 = vpop.f32.mrf.mxu0
  %v1076 = vadd.f32 %v760, %v1075
  %v1077 = vpop.f32.mrf.mxu0
  %v1078 = vadd.f32 %v760, %v1077
  %1079 = vmatmul.bf16.gmra.mxu0 %v916
  %v1080 = vpop.f32.mrf.mxu0
  %v1081 = vadd.f32 %v760, %v1080
  %v1082 = vpop.f32.mrf.mxu0
  %v1083 = vadd.f32 %v760, %v1082
  %1084 = vmatmul.bf16.gmra.mxu0 %v919
  %v1085 = vpop.f32.mrf.mxu0
  %v1086 = vadd.f32 %v760, %v1085
  %v1087 = vpop.f32.mrf.mxu0
  %v1088 = vadd.f32 %v760, %v1087
  %1089 = vdwg.mxu0
  %1090 = vmatpush.bf16.msra.mxu0 0
  %1091 = vmatpush.bf16.msra.mxu0 0
  %1092 = vmatpush.bf16.msra.mxu0 %v811
  %1093 = vmatpush.bf16.msra.mxu0 %v809
  %1094 = vmatpush.bf16.msra.mxu0 %v807
  %1095 = vmatpush.bf16.msra.mxu0 %v805
  %1096 = vmatpush.bf16.msra.mxu0 %v803
  %1097 = vmatpush.bf16.msra.mxu0 %v801
  %1098 = vmatmul.bf16.gmra.mxu0 %v826
  %v1099 = vpop.f32.mrf.mxu0
  %v1100 = vadd.f32 %v761, %v1099
  %v1101 = vpop.f32.mrf.mxu0
  %v1102 = vadd.f32 %v761, %v1101
  %1103 = vmatmul.bf16.gmra.mxu0 %v829
  %v1104 = vpop.f32.mrf.mxu0
  %v1105 = vadd.f32 %v761, %v1104
  %v1106 = vpop.f32.mrf.mxu0
  %v1107 = vadd.f32 %v761, %v1106
  %1108 = vmatmul.bf16.gmra.mxu0 %v832
  %v1109 = vpop.f32.mrf.mxu0
  %v1110 = vadd.f32 %v761, %v1109
  %v1111 = vpop.f32.mrf.mxu0
  %v1112 = vadd.f32 %v761, %v1111
  %1113 = vmatmul.bf16.gmra.mxu0 %v835
  %v1114 = vpop.f32.mrf.mxu0
  %v1115 = vadd.f32 %v761, %v1114
  %v1116 = vpop.f32.mrf.mxu0
  %v1117 = vadd.f32 %v761, %v1116
  %1118 = vmatmul.bf16.gmra.mxu0 %v838
  %v1119 = vpop.f32.mrf.mxu0
  %v1120 = vadd.f32 %v761, %v1119
  %v1121 = vpop.f32.mrf.mxu0
  %v1122 = vadd.f32 %v761, %v1121
  %1123 = vmatmul.bf16.gmra.mxu0 %v841
  %v1124 = vpop.f32.mrf.mxu0
  %v1125 = vadd.f32 %v761, %v1124
  %v1126 = vpop.f32.mrf.mxu0
  %v1127 = vadd.f32 %v761, %v1126
  %1128 = vmatmul.bf16.gmra.mxu0 %v844
  %v1129 = vpop.f32.mrf.mxu0
  %v1130 = vadd.f32 %v761, %v1129
  %v1131 = vpop.f32.mrf.mxu0
  %v1132 = vadd.f32 %v761, %v1131
  %1133 = vmatmul.bf16.gmra.mxu0 %v847
  %v1134 = vpop.f32.mrf.mxu0
  %v1135 = vadd.f32 %v761, %v1134
  %v1136 = vpop.f32.mrf.mxu0
  %v1137 = vadd.f32 %v761, %v1136
  %1138 = vmatmul.bf16.gmra.mxu0 %v850
  %v1139 = vpop.f32.mrf.mxu0
  %v1140 = vadd.f32 %v761, %v1139
  %v1141 = vpop.f32.mrf.mxu0
  %v1142 = vadd.f32 %v761, %v1141
  %1143 = vmatmul.bf16.gmra.mxu0 %v853
  %v1144 = vpop.f32.mrf.mxu0
  %v1145 = vadd.f32 %v761, %v1144
  %v1146 = vpop.f32.mrf.mxu0
  %v1147 = vadd.f32 %v761, %v1146
  %1148 = vmatmul.bf16.gmra.mxu0 %v856
  %v1149 = vpop.f32.mrf.mxu0
  %v1150 = vadd.f32 %v761, %v1149
  %v1151 = vpop.f32.mrf.mxu0
  %v1152 = vadd.f32 %v761, %v1151
  %1153 = vmatmul.bf16.gmra.mxu0 %v859
  %v1154 = vpop.f32.mrf.mxu0
  %v1155 = vadd.f32 %v761, %v1154
  %v1156 = vpop.f32.mrf.mxu0
  %v1157 = vadd.f32 %v761, %v1156
  %1158 = vmatmul.bf16.gmra.mxu0 %v862
  %v1159 = vpop.f32.mrf.mxu0
  %v1160 = vadd.f32 %v761, %v1159
  %v1161 = vpop.f32.mrf.mxu0
  %v1162 = vadd.f32 %v761, %v1161
  %1163 = vmatmul.bf16.gmra.mxu0 %v865
  %v1164 = vpop.f32.mrf.mxu0
  %v1165 = vadd.f32 %v761, %v1164
  %v1166 = vpop.f32.mrf.mxu0
  %v1167 = vadd.f32 %v761, %v1166
  %1168 = vmatmul.bf16.gmra.mxu0 %v868
  %v1169 = vpop.f32.mrf.mxu0
  %v1170 = vadd.f32 %v761, %v1169
  %v1171 = vpop.f32.mrf.mxu0
  %v1172 = vadd.f32 %v761, %v1171
  %1173 = vmatmul.bf16.gmra.mxu0 %v871
  %v1174 = vpop.f32.mrf.mxu0
  %v1175 = vadd.f32 %v761, %v1174
  %v1176 = vpop.f32.mrf.mxu0
  %v1177 = vadd.f32 %v761, %v1176
  %1178 = vmatmul.bf16.gmra.mxu0 %v874
  %v1179 = vpop.f32.mrf.mxu0
  %v1180 = vadd.f32 %v761, %v1179
  %v1181 = vpop.f32.mrf.mxu0
  %v1182 = vadd.f32 %v761, %v1181
  %1183 = vmatmul.bf16.gmra.mxu0 %v877
  %v1184 = vpop.f32.mrf.mxu0
  %v1185 = vadd.f32 %v761, %v1184
  %v1186 = vpop.f32.mrf.mxu0
  %v1187 = vadd.f32 %v761, %v1186
  %1188 = vmatmul.bf16.gmra.mxu0 %v880
  %v1189 = vpop.f32.mrf.mxu0
  %v1190 = vadd.f32 %v761, %v1189
  %v1191 = vpop.f32.mrf.mxu0
  %v1192 = vadd.f32 %v761, %v1191
  %1193 = vmatmul.bf16.gmra.mxu0 %v883
  %v1194 = vpop.f32.mrf.mxu0
  %v1195 = vadd.f32 %v761, %v1194
  %v1196 = vpop.f32.mrf.mxu0
  %v1197 = vadd.f32 %v761, %v1196
  %1198 = vmatmul.bf16.gmra.mxu0 %v886
  %v1199 = vpop.f32.mrf.mxu0
  %v1200 = vadd.f32 %v761, %v1199
  %v1201 = vpop.f32.mrf.mxu0
  %v1202 = vadd.f32 %v761, %v1201
  %1203 = vmatmul.bf16.gmra.mxu0 %v889
  %v1204 = vpop.f32.mrf.mxu0
  %v1205 = vadd.f32 %v761, %v1204
  %v1206 = vpop.f32.mrf.mxu0
  %v1207 = vadd.f32 %v761, %v1206
  %1208 = vmatmul.bf16.gmra.mxu0 %v892
  %v1209 = vpop.f32.mrf.mxu0
  %v1210 = vadd.f32 %v761, %v1209
  %v1211 = vpop.f32.mrf.mxu0
  %v1212 = vadd.f32 %v761, %v1211
  %1213 = vmatmul.bf16.gmra.mxu0 %v895
  %v1214 = vpop.f32.mrf.mxu0
  %v1215 = vadd.f32 %v761, %v1214
  %v1216 = vpop.f32.mrf.mxu0
  %v1217 = vadd.f32 %v761, %v1216
  %1218 = vmatmul.bf16.gmra.mxu0 %v898
  %v1219 = vpop.f32.mrf.mxu0
  %v1220 = vadd.f32 %v761, %v1219
  %v1221 = vpop.f32.mrf.mxu0
  %v1222 = vadd.f32 %v761, %v1221
  %1223 = vmatmul.bf16.gmra.mxu0 %v901
  %v1224 = vpop.f32.mrf.mxu0
  %v1225 = vadd.f32 %v761, %v1224
  %v1226 = vpop.f32.mrf.mxu0
  %v1227 = vadd.f32 %v761, %v1226
  %1228 = vmatmul.bf16.gmra.mxu0 %v904
  %v1229 = vpop.f32.mrf.mxu0
  %v1230 = vadd.f32 %v761, %v1229
  %v1231 = vpop.f32.mrf.mxu0
  %v1232 = vadd.f32 %v761, %v1231
  %1233 = vmatmul.bf16.gmra.mxu0 %v907
  %v1234 = vpop.f32.mrf.mxu0
  %v1235 = vadd.f32 %v761, %v1234
  %v1236 = vpop.f32.mrf.mxu0
  %v1237 = vadd.f32 %v761, %v1236
  %1238 = vmatmul.bf16.gmra.mxu0 %v910
  %v1239 = vpop.f32.mrf.mxu0
  %v1240 = vadd.f32 %v761, %v1239
  %v1241 = vpop.f32.mrf.mxu0
  %v1242 = vadd.f32 %v761, %v1241
  %1243 = vmatmul.bf16.gmra.mxu0 %v913
  %v1244 = vpop.f32.mrf.mxu0
  %v1245 = vadd.f32 %v761, %v1244
  %v1246 = vpop.f32.mrf.mxu0
  %v1247 = vadd.f32 %v761, %v1246
  %1248 = vmatmul.bf16.gmra.mxu0 %v916
  %v1249 = vpop.f32.mrf.mxu0
  %v1250 = vadd.f32 %v761, %v1249
  %v1251 = vpop.f32.mrf.mxu0
  %v1252 = vadd.f32 %v761, %v1251
  %1253 = vmatmul.bf16.gmra.mxu0 %v919
  %v1254 = vpop.f32.mrf.mxu0
  %v1255 = vadd.f32 %v761, %v1254
  %v1256 = vpop.f32.mrf.mxu0
  %v1257 = vadd.f32 %v761, %v1256
  %1258 = vdwg.mxu0
  %v1259 = vpack.c.bf16 %v931, %v931
  %v1260 = vpack.c.bf16 %v933, %v933
  %v1261 = vpack.c.bf16 %v936, %v936
  %v1262 = vpack.c.bf16 %v938, %v938
  %v1263 = vpack.c.bf16 %v941, %v941
  %v1264 = vpack.c.bf16 %v943, %v943
  %v1265 = vpack.c.bf16 %v946, %v946
  %v1266 = vpack.c.bf16 %v948, %v948
  %v1267 = vpack.c.bf16 %v951, %v951
  %v1268 = vpack.c.bf16 %v953, %v953
  %v1269 = vpack.c.bf16 %v956, %v956
  %v1270 = vpack.c.bf16 %v958, %v958
  %v1271 = vpack.c.bf16 %v961, %v961
  %v1272 = vpack.c.bf16 %v963, %v963
  %v1273 = vpack.c.bf16 %v966, %v966
  %v1274 = vpack.c.bf16 %v968, %v968
  %v1275 = vpack.c.bf16 %v971, %v971
  %v1276 = vpack.c.bf16 %v973, %v973
  %v1277 = vpack.c.bf16 %v976, %v976
  %v1278 = vpack.c.bf16 %v978, %v978
  %v1279 = vpack.c.bf16 %v981, %v981
  %v1280 = vpack.c.bf16 %v983, %v983
  %v1281 = vpack.c.bf16 %v986, %v986
  %v1282 = vpack.c.bf16 %v988, %v988
  %v1283 = vpack.c.bf16 %v991, %v991
  %v1284 = vpack.c.bf16 %v993, %v993
  %v1285 = vpack.c.bf16 %v996, %v996
  %v1286 = vpack.c.bf16 %v998, %v998
  %v1287 = vpack.c.bf16 %v1001, %v1001
  %v1288 = vpack.c.bf16 %v1003, %v1003
  %v1289 = vpack.c.bf16 %v1006, %v1006
  %v1290 = vpack.c.bf16 %v1008, %v1008
  %v1291 = vpack.c.bf16 %v1011, %v1011
  %v1292 = vpack.c.bf16 %v1013, %v1013
  %v1293 = vpack.c.bf16 %v1016, %v1016
  %v1294 = vpack.c.bf16 %v1018, %v1018
  %v1295 = vpack.c.bf16 %v1021, %v1021
  %v1296 = vpack.c.bf16 %v1023, %v1023
  %v1297 = vpack.c.bf16 %v1026, %v1026
  %v1298 = vpack.c.bf16 %v1028, %v1028
  %v1299 = vpack.c.bf16 %v1031, %v1031
  %v1300 = vpack.c.bf16 %v1033, %v1033
  %v1301 = vpack.c.bf16 %v1036, %v1036
  %v1302 = vpack.c.bf16 %v1038, %v1038
  %v1303 = vpack.c.bf16 %v1041, %v1041
  %v1304 = vpack.c.bf16 %v1043, %v1043
  %v1305 = vpack.c.bf16 %v1046, %v1046
  %v1306 = vpack.c.bf16 %v1048, %v1048
  %v1307 = vpack.c.bf16 %v1051, %v1051
  %v1308 = vpack.c.bf16 %v1053, %v1053
  %v1309 = vpack.c.bf16 %v1056, %v1056
  %v1310 = vpack.c.bf16 %v1058, %v1058
  %v1311 = vpack.c.bf16 %v1061, %v1061
  %v1312 = vpack.c.bf16 %v1063, %v1063
  %v1313 = vpack.c.bf16 %v1066, %v1066
  %v1314 = vpack.c.bf16 %v1068, %v1068
  %v1315 = vpack.c.bf16 %v1071, %v1071
  %v1316 = vpack.c.bf16 %v1073, %v1073
  %v1317 = vpack.c.bf16 %v1076, %v1076
  %v1318 = vpack.c.bf16 %v1078, %v1078
  %v1319 = vpack.c.bf16 %v1081, %v1081
  %v1320 = vpack.c.bf16 %v1083, %v1083
  %v1321 = vpack.c.bf16 %v1086, %v1086
  %v1322 = vpack.c.bf16 %v1088, %v1088
  %1323 = vst [vmem:[%s140] sm:$0xf] %v1259
  %1324 = vst [vmem:[%s140 + $0x4] sm:$0xf] %v1260
  %1325 = vst [vmem:[%s140 + $0x8] sm:$0xf] %v1261
  %1326 = vst [vmem:[%s140 + $0xc] sm:$0xf] %v1262
  %1327 = vst [vmem:[%s140 + $0x10] sm:$0xf] %v1263
  %1328 = vst [vmem:[%s140 + $0x14] sm:$0xf] %v1264
  %1329 = vst [vmem:[%s140 + $0x18] sm:$0xf] %v1265
  %1330 = vst [vmem:[%s140 + $0x1c] sm:$0xf] %v1266
  %1331 = vst [vmem:[%s140 + $0x20] sm:$0xf] %v1267
  %1332 = vst [vmem:[%s140 + $0x24] sm:$0xf] %v1268
  %1333 = vst [vmem:[%s140 + $0x28] sm:$0xf] %v1269
  %1334 = vst [vmem:[%s140 + $0x2c] sm:$0xf] %v1270
  %1335 = vst [vmem:[%s140 + $0x30] sm:$0xf] %v1271
  %1336 = vst [vmem:[%s140 + $0x34] sm:$0xf] %v1272
  %1337 = vst [vmem:[%s140 + $0x38] sm:$0xf] %v1273
  %1338 = vst [vmem:[%s140 + $0x3c] sm:$0xf] %v1274
  %1339 = vst [vmem:[%s140 + $0x40] sm:$0xf] %v1275
  %1340 = vst [vmem:[%s140 + $0x44] sm:$0xf] %v1276
  %1341 = vst [vmem:[%s140 + $0x48] sm:$0xf] %v1277
  %1342 = vst [vmem:[%s140 + $0x4c] sm:$0xf] %v1278
  %1343 = vst [vmem:[%s140 + $0x50] sm:$0xf] %v1279
  %1344 = vst [vmem:[%s140 + $0x54] sm:$0xf] %v1280
  %1345 = vst [vmem:[%s140 + $0x58] sm:$0xf] %v1281
  %1346 = vst [vmem:[%s140 + $0x5c] sm:$0xf] %v1282
  %1347 = vst [vmem:[%s140 + $0x60] sm:$0xf] %v1283
  %1348 = vst [vmem:[%s140 + $0x64] sm:$0xf] %v1284
  %1349 = vst [vmem:[%s140 + $0x68] sm:$0xf] %v1285
  %1350 = vst [vmem:[%s140 + $0x6c] sm:$0xf] %v1286
  %1351 = vst [vmem:[%s140 + $0x70] sm:$0xf] %v1287
  %1352 = vst [vmem:[%s140 + $0x74] sm:$0xf] %v1288
  %1353 = vst [vmem:[%s140 + $0x78] sm:$0xf] %v1289
  %1354 = vst [vmem:[%s140 + $0x7c] sm:$0xf] %v1290
  %1355 = vst [vmem:[%s140 + $0x80] sm:$0xf] %v1291
  %1356 = vst [vmem:[%s140 + $0x84] sm:$0xf] %v1292
  %1357 = vst [vmem:[%s140 + $0x88] sm:$0xf] %v1293
  %1358 = vst [vmem:[%s140 + $0x8c] sm:$0xf] %v1294
  %1359 = vst [vmem:[%s140 + $0x90] sm:$0xf] %v1295
  %1360 = vst [vmem:[%s140 + $0x94] sm:$0xf] %v1296
  %1361 = vst [vmem:[%s140 + $0x98] sm:$0xf] %v1297
  %1362 = vst [vmem:[%s140 + $0x9c] sm:$0xf] %v1298
  %1363 = vst [vmem:[%s140 + $0xa0] sm:$0xf] %v1299
  %1364 = vst [vmem:[%s140 + $0xa4] sm:$0xf] %v1300
  %1365 = vst [vmem:[%s140 + $0xa8] sm:$0xf] %v1301
  %1366 = vst [vmem:[%s140 + $0xac] sm:$0xf] %v1302
  %1367 = vst [vmem:[%s140 + $0xb0] sm:$0xf] %v1303
  %1368 = vst [vmem:[%s140 + $0xb4] sm:$0xf] %v1304
  %1369 = vst [vmem:[%s140 + $0xb8] sm:$0xf] %v1305
  %1370 = vst [vmem:[%s140 + $0xbc] sm:$0xf] %v1306
  %1371 = vst [vmem:[%s140 + $0xc0] sm:$0xf] %v1307
  %1372 = vst [vmem:[%s140 + $0xc4] sm:$0xf] %v1308
  %1373 = vst [vmem:[%s140 + $0xc8] sm:$0xf] %v1309
  %1374 = vst [vmem:[%s140 + $0xcc] sm:$0xf] %v1310
  %1375 = vst [vmem:[%s140 + $0xd0] sm:$0xf] %v1311
  %1376 = vst [vmem:[%s140 + $0xd4] sm:$0xf] %v1312
  %1377 = vst [vmem:[%s140 + $0xd8] sm:$0xf] %v1313
  %1378 = vst [vmem:[%s140 + $0xdc] sm:$0xf] %v1314
  %1379 = vst [vmem:[%s140 + $0xe0] sm:$0xf] %v1315
  %1380 = vst [vmem:[%s140 + $0xe4] sm:$0xf] %v1316
  %1381 = vst [vmem:[%s140 + $0xe8] sm:$0xf] %v1317
  %1382 = vst [vmem:[%s140 + $0xec] sm:$0xf] %v1318
  %1383 = vst [vmem:[%s140 + $0xf0] sm:$0xf] %v1319
  %1384 = vst [vmem:[%s140 + $0xf4] sm:$0xf] %v1320
  %1385 = vst [vmem:[%s140 + $0xf8] sm:$0xf] %v1321
  %1386 = vst [vmem:[%s140 + $0xfc] sm:$0xf] %v1322
  %v1387 = vld [vmem:[%s117] sm:$0xf]
  %v1388 = vld [vmem:[%s117 + $0x4] sm:$0xf]
  %v1389 = vld [vmem:[%s117 + $0x8] sm:$0xf]
  %v1390 = vld [vmem:[%s117 + $0xc] sm:$0xf]
  %v1391 = vld [vmem:[%s117 + $0x10] sm:$0xf]
  %v1392 = vld [vmem:[%s117 + $0x14] sm:$0xf]
  %v1393 = vld [vmem:[%s117 + $0x18] sm:$0xf]
  %v1394 = vld [vmem:[%s117 + $0x1c] sm:$0xf]
  %v1395 = vld [vmem:[%s117 + $0x20] sm:$0xf]
  %v1396 = vld [vmem:[%s117 + $0x24] sm:$0xf]
  %v1397 = vld [vmem:[%s117 + $0x28] sm:$0xf]
  %v1398 = vld [vmem:[%s117 + $0x2c] sm:$0xf]
  %v1399 = vld [vmem:[%s117 + $0x30] sm:$0xf]
  %v1400 = vld [vmem:[%s117 + $0x34] sm:$0xf]
  %v1401 = vld [vmem:[%s117 + $0x38] sm:$0xf]
  %v1402 = vld [vmem:[%s117 + $0x3c] sm:$0xf]
  %v1403 = vld [vmem:[%s117 + $0x40] sm:$0xf]
  %v1404 = vld [vmem:[%s117 + $0x44] sm:$0xf]
  %v1405 = vld [vmem:[%s117 + $0x48] sm:$0xf]
  %v1406 = vld [vmem:[%s117 + $0x4c] sm:$0xf]
  %v1407 = vld [vmem:[%s117 + $0x50] sm:$0xf]
  %v1408 = vld [vmem:[%s117 + $0x54] sm:$0xf]
  %v1409 = vld [vmem:[%s117 + $0x58] sm:$0xf]
  %v1410 = vld [vmem:[%s117 + $0x5c] sm:$0xf]
  %v1411 = vld [vmem:[%s117 + $0x60] sm:$0xf]
  %v1412 = vld [vmem:[%s117 + $0x64] sm:$0xf]
  %v1413 = vld [vmem:[%s117 + $0x68] sm:$0xf]
  %v1414 = vld [vmem:[%s117 + $0x6c] sm:$0xf]
  %v1415 = vld [vmem:[%s117 + $0x70] sm:$0xf]
  %v1416 = vld [vmem:[%s117 + $0x74] sm:$0xf]
  %v1417 = vld [vmem:[%s117 + $0x78] sm:$0xf]
  %v1418 = vld [vmem:[%s117 + $0x7c] sm:$0xf]
  %v1419 = vld [vmem:[%s117 + $0x80] sm:$0xf]
  %v1420 = vld [vmem:[%s117 + $0x84] sm:$0xf]
  %v1421 = vld [vmem:[%s117 + $0x88] sm:$0xf]
  %v1422 = vld [vmem:[%s117 + $0x8c] sm:$0xf]
  %v1423 = vld [vmem:[%s117 + $0x90] sm:$0xf]
  %v1424 = vld [vmem:[%s117 + $0x94] sm:$0xf]
  %v1425 = vld [vmem:[%s117 + $0x98] sm:$0xf]
  %v1426 = vld [vmem:[%s117 + $0x9c] sm:$0xf]
  %v1427 = vld [vmem:[%s117 + $0xa0] sm:$0xf]
  %v1428 = vld [vmem:[%s117 + $0xa4] sm:$0xf]
  %v1429 = vld [vmem:[%s117 + $0xa8] sm:$0xf]
  %v1430 = vld [vmem:[%s117 + $0xac] sm:$0xf]
  %v1431 = vld [vmem:[%s117 + $0xb0] sm:$0xf]
  %v1432 = vld [vmem:[%s117 + $0xb4] sm:$0xf]
  %v1433 = vld [vmem:[%s117 + $0xb8] sm:$0xf]
  %v1434 = vld [vmem:[%s117 + $0xbc] sm:$0xf]
  %v1435 = vld [vmem:[%s117 + $0xc0] sm:$0xf]
  %v1436 = vld [vmem:[%s117 + $0xc4] sm:$0xf]
  %v1437 = vld [vmem:[%s117 + $0xc8] sm:$0xf]
  %v1438 = vld [vmem:[%s117 + $0xcc] sm:$0xf]
  %v1439 = vld [vmem:[%s117 + $0xd0] sm:$0xf]
  %v1440 = vld [vmem:[%s117 + $0xd4] sm:$0xf]
  %v1441 = vld [vmem:[%s117 + $0xd8] sm:$0xf]
  %v1442 = vld [vmem:[%s117 + $0xdc] sm:$0xf]
  %v1443 = vld [vmem:[%s117 + $0xe0] sm:$0xf]
  %v1444 = vld [vmem:[%s117 + $0xe4] sm:$0xf]
  %v1445 = vld [vmem:[%s117 + $0xe8] sm:$0xf]
  %v1446 = vld [vmem:[%s117 + $0xec] sm:$0xf]
  %v1447 = vld [vmem:[%s117 + $0xf0] sm:$0xf]
  %v1448 = vld [vmem:[%s117 + $0xf4] sm:$0xf]
  %v1449 = vld [vmem:[%s117 + $0xf8] sm:$0xf]
  %v1450 = vld [vmem:[%s117 + $0xfc] sm:$0xf]
  %v1451 = vunpack.c.l.bf16 %v1387
  %v1452 = vunpack.c.l.bf16 %v1388
  %v1453 = vunpack.c.l.bf16 %v1389
  %v1454 = vunpack.c.l.bf16 %v1390
  %v1455 = vunpack.c.l.bf16 %v1391
  %v1456 = vunpack.c.l.bf16 %v1392
  %v1457 = vunpack.c.l.bf16 %v1393
  %v1458 = vunpack.c.l.bf16 %v1394
  %v1459 = vunpack.c.l.bf16 %v1395
  %v1460 = vunpack.c.l.bf16 %v1396
  %v1461 = vunpack.c.l.bf16 %v1397
  %v1462 = vunpack.c.l.bf16 %v1398
  %v1463 = vunpack.c.l.bf16 %v1399
  %v1464 = vunpack.c.l.bf16 %v1400
  %v1465 = vunpack.c.l.bf16 %v1401
  %v1466 = vunpack.c.l.bf16 %v1402
  %v1467 = vunpack.c.l.bf16 %v1403
  %v1468 = vunpack.c.l.bf16 %v1404
  %v1469 = vunpack.c.l.bf16 %v1405
  %v1470 = vunpack.c.l.bf16 %v1406
  %v1471 = vunpack.c.l.bf16 %v1407
  %v1472 = vunpack.c.l.bf16 %v1408
  %v1473 = vunpack.c.l.bf16 %v1409
  %v1474 = vunpack.c.l.bf16 %v1410
  %v1475 = vunpack.c.l.bf16 %v1411
  %v1476 = vunpack.c.l.bf16 %v1412
  %v1477 = vunpack.c.l.bf16 %v1413
  %v1478 = vunpack.c.l.bf16 %v1414
  %v1479 = vunpack.c.l.bf16 %v1415
  %v1480 = vunpack.c.l.bf16 %v1416
  %v1481 = vunpack.c.l.bf16 %v1417
  %v1482 = vunpack.c.l.bf16 %v1418
  %v1483 = vunpack.c.l.bf16 %v1419
  %v1484 = vunpack.c.l.bf16 %v1420
  %v1485 = vunpack.c.l.bf16 %v1421
  %v1486 = vunpack.c.l.bf16 %v1422
  %v1487 = vunpack.c.l.bf16 %v1423
  %v1488 = vunpack.c.l.bf16 %v1424
  %v1489 = vunpack.c.l.bf16 %v1425
  %v1490 = vunpack.c.l.bf16 %v1426
  %v1491 = vunpack.c.l.bf16 %v1427
  %v1492 = vunpack.c.l.bf16 %v1428
  %v1493 = vunpack.c.l.bf16 %v1429
  %v1494 = vunpack.c.l.bf16 %v1430
  %v1495 = vunpack.c.l.bf16 %v1431
  %v1496 = vunpack.c.l.bf16 %v1432
  %v1497 = vunpack.c.l.bf16 %v1433
  %v1498 = vunpack.c.l.bf16 %v1434
  %v1499 = vunpack.c.l.bf16 %v1435
  %v1500 = vunpack.c.l.bf16 %v1436
  %v1501 = vunpack.c.l.bf16 %v1437
  %v1502 = vunpack.c.l.bf16 %v1438
  %v1503 = vunpack.c.l.bf16 %v1439
  %v1504 = vunpack.c.l.bf16 %v1440
  %v1505 = vunpack.c.l.bf16 %v1441
  %v1506 = vunpack.c.l.bf16 %v1442
  %v1507 = vunpack.c.l.bf16 %v1443
  %v1508 = vunpack.c.l.bf16 %v1444
  %v1509 = vunpack.c.l.bf16 %v1445
  %v1510 = vunpack.c.l.bf16 %v1446
  %v1511 = vunpack.c.l.bf16 %v1447
  %v1512 = vunpack.c.l.bf16 %v1448
  %v1513 = vunpack.c.l.bf16 %v1449
  %v1514 = vunpack.c.l.bf16 %v1450
  %v1515 = vsel %vm380, %v1451, 0.0
  %v1516 = vsel %vm380, %v1452, 0.0
  %v1517 = vsel %vm380, %v1453, 0.0
  %v1518 = vsel %vm380, %v1454, 0.0
  %v1519 = vsel %vm380, %v1455, 0.0
  %v1520 = vsel %vm380, %v1456, 0.0
  %v1521 = vsel %vm380, %v1457, 0.0
  %v1522 = vsel %vm380, %v1458, 0.0
  %v1523 = vsel %vm380, %v1459, 0.0
  %v1524 = vsel %vm380, %v1460, 0.0
  %v1525 = vsel %vm380, %v1461, 0.0
  %v1526 = vsel %vm380, %v1462, 0.0
  %v1527 = vsel %vm380, %v1463, 0.0
  %v1528 = vsel %vm380, %v1464, 0.0
  %v1529 = vsel %vm380, %v1465, 0.0
  %v1530 = vsel %vm380, %v1466, 0.0
  %v1531 = vsel %vm380, %v1467, 0.0
  %v1532 = vsel %vm380, %v1468, 0.0
  %v1533 = vsel %vm380, %v1469, 0.0
  %v1534 = vsel %vm380, %v1470, 0.0
  %v1535 = vsel %vm380, %v1471, 0.0
  %v1536 = vsel %vm380, %v1472, 0.0
  %v1537 = vsel %vm380, %v1473, 0.0
  %v1538 = vsel %vm380, %v1474, 0.0
  %v1539 = vsel %vm380, %v1475, 0.0
  %v1540 = vsel %vm380, %v1476, 0.0
  %v1541 = vsel %vm380, %v1477, 0.0
  %v1542 = vsel %vm380, %v1478, 0.0
  %v1543 = vsel %vm380, %v1479, 0.0
  %v1544 = vsel %vm380, %v1480, 0.0
  %v1545 = vsel %vm380, %v1481, 0.0
  %v1546 = vsel %vm380, %v1482, 0.0
  %v1547 = vsel %vm380, %v1483, 0.0
  %v1548 = vsel %vm380, %v1484, 0.0
  %v1549 = vsel %vm380, %v1485, 0.0
  %v1550 = vsel %vm380, %v1486, 0.0
  %v1551 = vsel %vm380, %v1487, 0.0
  %v1552 = vsel %vm380, %v1488, 0.0
  %v1553 = vsel %vm380, %v1489, 0.0
  %v1554 = vsel %vm380, %v1490, 0.0
  %v1555 = vsel %vm380, %v1491, 0.0
  %v1556 = vsel %vm380, %v1492, 0.0
  %v1557 = vsel %vm380, %v1493, 0.0
  %v1558 = vsel %vm380, %v1494, 0.0
  %v1559 = vsel %vm380, %v1495, 0.0
  %v1560 = vsel %vm380, %v1496, 0.0
  %v1561 = vsel %vm380, %v1497, 0.0
  %v1562 = vsel %vm380, %v1498, 0.0
  %v1563 = vsel %vm380, %v1499, 0.0
  %v1564 = vsel %vm380, %v1500, 0.0
  %v1565 = vsel %vm380, %v1501, 0.0
  %v1566 = vsel %vm380, %v1502, 0.0
  %v1567 = vsel %vm380, %v1503, 0.0
  %v1568 = vsel %vm380, %v1504, 0.0
  %v1569 = vsel %vm380, %v1505, 0.0
  %v1570 = vsel %vm380, %v1506, 0.0
  %v1571 = vsel %vm380, %v1507, 0.0
  %v1572 = vsel %vm380, %v1508, 0.0
  %v1573 = vsel %vm380, %v1509, 0.0
  %v1574 = vsel %vm380, %v1510, 0.0
  %v1575 = vsel %vm380, %v1511, 0.0
  %v1576 = vsel %vm380, %v1512, 0.0
  %v1577 = vsel %vm380, %v1513, 0.0
  %v1578 = vsel %vm380, %v1514, 0.0
  %1643 = vrot.lane.b32.xlu0 %v1515, 64
  %v1644 = vpop.permute.xlu0 %1643
  %1645 = vrot.lane.b32.xlu0 %v1516, 64
  %v1646 = vpop.permute.xlu0 %1645
  %1647 = vrot.lane.b32.xlu0 %v1517, 64
  %v1648 = vpop.permute.xlu0 %1647
  %1649 = vrot.lane.b32.xlu0 %v1518, 64
  %v1650 = vpop.permute.xlu0 %1649
  %1651 = vrot.lane.b32.xlu0 %v1519, 64
  %v1652 = vpop.permute.xlu0 %1651
  %1653 = vrot.lane.b32.xlu0 %v1520, 64
  %v1654 = vpop.permute.xlu0 %1653
  %1655 = vrot.lane.b32.xlu0 %v1521, 64
  %v1656 = vpop.permute.xlu0 %1655
  %1657 = vrot.lane.b32.xlu0 %v1522, 64
  %v1658 = vpop.permute.xlu0 %1657
  %1659 = vrot.lane.b32.xlu0 %v1523, 64
  %v1660 = vpop.permute.xlu0 %1659
  %1661 = vrot.lane.b32.xlu0 %v1524, 64
  %v1662 = vpop.permute.xlu0 %1661
  %1663 = vrot.lane.b32.xlu0 %v1525, 64
  %v1664 = vpop.permute.xlu0 %1663
  %1665 = vrot.lane.b32.xlu0 %v1526, 64
  %v1666 = vpop.permute.xlu0 %1665
  %1667 = vrot.lane.b32.xlu0 %v1527, 64
  %v1668 = vpop.permute.xlu0 %1667
  %1669 = vrot.lane.b32.xlu0 %v1528, 64
  %v1670 = vpop.permute.xlu0 %1669
  %1671 = vrot.lane.b32.xlu0 %v1529, 64
  %v1672 = vpop.permute.xlu0 %1671
  %1673 = vrot.lane.b32.xlu0 %v1530, 64
  %v1674 = vpop.permute.xlu0 %1673
  %1675 = vrot.lane.b32.xlu0 %v1531, 64
  %v1676 = vpop.permute.xlu0 %1675
  %1677 = vrot.lane.b32.xlu0 %v1532, 64
  %v1678 = vpop.permute.xlu0 %1677
  %1679 = vrot.lane.b32.xlu0 %v1533, 64
  %v1680 = vpop.permute.xlu0 %1679
  %1681 = vrot.lane.b32.xlu0 %v1534, 64
  %v1682 = vpop.permute.xlu0 %1681
  %1683 = vrot.lane.b32.xlu0 %v1535, 64
  %v1684 = vpop.permute.xlu0 %1683
  %1685 = vrot.lane.b32.xlu0 %v1536, 64
  %v1686 = vpop.permute.xlu0 %1685
  %1687 = vrot.lane.b32.xlu0 %v1537, 64
  %v1688 = vpop.permute.xlu0 %1687
  %1689 = vrot.lane.b32.xlu0 %v1538, 64
  %v1690 = vpop.permute.xlu0 %1689
  %1691 = vrot.lane.b32.xlu0 %v1539, 64
  %v1692 = vpop.permute.xlu0 %1691
  %1693 = vrot.lane.b32.xlu0 %v1540, 64
  %v1694 = vpop.permute.xlu0 %1693
  %1695 = vrot.lane.b32.xlu0 %v1541, 64
  %v1696 = vpop.permute.xlu0 %1695
  %1697 = vrot.lane.b32.xlu0 %v1542, 64
  %v1698 = vpop.permute.xlu0 %1697
  %1699 = vrot.lane.b32.xlu0 %v1543, 64
  %v1700 = vpop.permute.xlu0 %1699
  %1701 = vrot.lane.b32.xlu0 %v1544, 64
  %v1702 = vpop.permute.xlu0 %1701
  %1703 = vrot.lane.b32.xlu0 %v1545, 64
  %v1704 = vpop.permute.xlu0 %1703
  %1705 = vrot.lane.b32.xlu0 %v1546, 64
  %v1706 = vpop.permute.xlu0 %1705
  %1707 = vrot.lane.b32.xlu0 %v1547, 64
  %v1708 = vpop.permute.xlu0 %1707
  %1709 = vrot.lane.b32.xlu0 %v1548, 64
  %v1710 = vpop.permute.xlu0 %1709
  %1711 = vrot.lane.b32.xlu0 %v1549, 64
  %v1712 = vpop.permute.xlu0 %1711
  %1713 = vrot.lane.b32.xlu0 %v1550, 64
  %v1714 = vpop.permute.xlu0 %1713
  %1715 = vrot.lane.b32.xlu0 %v1551, 64
  %v1716 = vpop.permute.xlu0 %1715
  %1717 = vrot.lane.b32.xlu0 %v1552, 64
  %v1718 = vpop.permute.xlu0 %1717
  %1719 = vrot.lane.b32.xlu0 %v1553, 64
  %v1720 = vpop.permute.xlu0 %1719
  %1721 = vrot.lane.b32.xlu0 %v1554, 64
  %v1722 = vpop.permute.xlu0 %1721
  %1723 = vrot.lane.b32.xlu0 %v1555, 64
  %v1724 = vpop.permute.xlu0 %1723
  %1725 = vrot.lane.b32.xlu0 %v1556, 64
  %v1726 = vpop.permute.xlu0 %1725
  %1727 = vrot.lane.b32.xlu0 %v1557, 64
  %v1728 = vpop.permute.xlu0 %1727
  %1729 = vrot.lane.b32.xlu0 %v1558, 64
  %v1730 = vpop.permute.xlu0 %1729
  %1731 = vrot.lane.b32.xlu0 %v1559, 64
  %v1732 = vpop.permute.xlu0 %1731
  %1733 = vrot.lane.b32.xlu0 %v1560, 64
  %v1734 = vpop.permute.xlu0 %1733
  %1735 = vrot.lane.b32.xlu0 %v1561, 64
  %v1736 = vpop.permute.xlu0 %1735
  %1737 = vrot.lane.b32.xlu0 %v1562, 64
  %v1738 = vpop.permute.xlu0 %1737
  %1739 = vrot.lane.b32.xlu0 %v1563, 64
  %v1740 = vpop.permute.xlu0 %1739
  %1741 = vrot.lane.b32.xlu0 %v1564, 64
  %v1742 = vpop.permute.xlu0 %1741
  %1743 = vrot.lane.b32.xlu0 %v1565, 64
  %v1744 = vpop.permute.xlu0 %1743
  %1745 = vrot.lane.b32.xlu0 %v1566, 64
  %v1746 = vpop.permute.xlu0 %1745
  %1747 = vrot.lane.b32.xlu0 %v1567, 64
  %v1748 = vpop.permute.xlu0 %1747
  %1749 = vrot.lane.b32.xlu0 %v1568, 64
  %v1750 = vpop.permute.xlu0 %1749
  %1751 = vrot.lane.b32.xlu0 %v1569, 64
  %v1752 = vpop.permute.xlu0 %1751
  %1753 = vrot.lane.b32.xlu0 %v1570, 64
  %v1754 = vpop.permute.xlu0 %1753
  %1755 = vrot.lane.b32.xlu0 %v1571, 64
  %v1756 = vpop.permute.xlu0 %1755
  %1757 = vrot.lane.b32.xlu0 %v1572, 64
  %v1758 = vpop.permute.xlu0 %1757
  %1759 = vrot.lane.b32.xlu0 %v1573, 64
  %v1760 = vpop.permute.xlu0 %1759
  %1761 = vrot.lane.b32.xlu0 %v1574, 64
  %v1762 = vpop.permute.xlu0 %1761
  %1763 = vrot.lane.b32.xlu0 %v1575, 64
  %v1764 = vpop.permute.xlu0 %1763
  %1765 = vrot.lane.b32.xlu0 %v1576, 64
  %v1766 = vpop.permute.xlu0 %1765
  %1767 = vrot.lane.b32.xlu0 %v1577, 64
  %v1768 = vpop.permute.xlu0 %1767
  %1769 = vrot.lane.b32.xlu0 %v1578, 64
  %v1770 = vpop.permute.xlu0 %1769
  %vm1835 = vcmask 523264
  %v1836 = vsel %vm1835, %v1515, %v1644
  %v1837 = vsel %vm1835, %v1516, %v1646
  %v1838 = vsel %vm1835, %v1517, %v1648
  %v1839 = vsel %vm1835, %v1518, %v1650
  %v1840 = vsel %vm1835, %v1519, %v1652
  %v1841 = vsel %vm1835, %v1520, %v1654
  %v1842 = vsel %vm1835, %v1521, %v1656
  %v1843 = vsel %vm1835, %v1522, %v1658
  %v1844 = vsel %vm1835, %v1523, %v1660
  %v1845 = vsel %vm1835, %v1524, %v1662
  %v1846 = vsel %vm1835, %v1525, %v1664
  %v1847 = vsel %vm1835, %v1526, %v1666
  %v1848 = vsel %vm1835, %v1527, %v1668
  %v1849 = vsel %vm1835, %v1528, %v1670
  %v1850 = vsel %vm1835, %v1529, %v1672
  %v1851 = vsel %vm1835, %v1530, %v1674
  %v1852 = vsel %vm1835, %v1531, %v1676
  %v1853 = vsel %vm1835, %v1532, %v1678
  %v1854 = vsel %vm1835, %v1533, %v1680
  %v1855 = vsel %vm1835, %v1534, %v1682
  %v1856 = vsel %vm1835, %v1535, %v1684
  %v1857 = vsel %vm1835, %v1536, %v1686
  %v1858 = vsel %vm1835, %v1537, %v1688
  %v1859 = vsel %vm1835, %v1538, %v1690
  %v1860 = vsel %vm1835, %v1539, %v1692
  %v1861 = vsel %vm1835, %v1540, %v1694
  %v1862 = vsel %vm1835, %v1541, %v1696
  %v1863 = vsel %vm1835, %v1542, %v1698
  %v1864 = vsel %vm1835, %v1543, %v1700
  %v1865 = vsel %vm1835, %v1544, %v1702
  %v1866 = vsel %vm1835, %v1545, %v1704
  %v1867 = vsel %vm1835, %v1546, %v1706
  %v1868 = vsel %vm1835, %v1547, %v1708
  %v1869 = vsel %vm1835, %v1548, %v1710
  %v1870 = vsel %vm1835, %v1549, %v1712
  %v1871 = vsel %vm1835, %v1550, %v1714
  %v1872 = vsel %vm1835, %v1551, %v1716
  %v1873 = vsel %vm1835, %v1552, %v1718
  %v1874 = vsel %vm1835, %v1553, %v1720
  %v1875 = vsel %vm1835, %v1554, %v1722
  %v1876 = vsel %vm1835, %v1555, %v1724
  %v1877 = vsel %vm1835, %v1556, %v1726
  %v1878 = vsel %vm1835, %v1557, %v1728
  %v1879 = vsel %vm1835, %v1558, %v1730
  %v1880 = vsel %vm1835, %v1559, %v1732
  %v1881 = vsel %vm1835, %v1560, %v1734
  %v1882 = vsel %vm1835, %v1561, %v1736
  %v1883 = vsel %vm1835, %v1562, %v1738
  %v1884 = vsel %vm1835, %v1563, %v1740
  %v1885 = vsel %vm1835, %v1564, %v1742
  %v1886 = vsel %vm1835, %v1565, %v1744
  %v1887 = vsel %vm1835, %v1566, %v1746
  %v1888 = vsel %vm1835, %v1567, %v1748
  %v1889 = vsel %vm1835, %v1568, %v1750
  %v1890 = vsel %vm1835, %v1569, %v1752
  %v1891 = vsel %vm1835, %v1570, %v1754
  %v1892 = vsel %vm1835, %v1571, %v1756
  %v1893 = vsel %vm1835, %v1572, %v1758
  %v1894 = vsel %vm1835, %v1573, %v1760
  %v1895 = vsel %vm1835, %v1574, %v1762
  %v1896 = vsel %vm1835, %v1575, %v1764
  %v1897 = vsel %vm1835, %v1576, %v1766
  %v1898 = vsel %vm1835, %v1577, %v1768
  %v1899 = vsel %vm1835, %v1578, %v1770
  %v1900 = vsub.f32 %v931, %v1836
  %v1901 = vsub.f32 %v933, %v1837
  %v1902 = vsub.f32 %v936, %v1838
  %v1903 = vsub.f32 %v938, %v1839
  %v1904 = vsub.f32 %v941, %v1840
  %v1905 = vsub.f32 %v943, %v1841
  %v1906 = vsub.f32 %v946, %v1842
  %v1907 = vsub.f32 %v948, %v1843
  %v1908 = vsub.f32 %v951, %v1844
  %v1909 = vsub.f32 %v953, %v1845
  %v1910 = vsub.f32 %v956, %v1846
  %v1911 = vsub.f32 %v958, %v1847
  %v1912 = vsub.f32 %v961, %v1848
  %v1913 = vsub.f32 %v963, %v1849
  %v1914 = vsub.f32 %v966, %v1850
  %v1915 = vsub.f32 %v968, %v1851
  %v1916 = vsub.f32 %v971, %v1852
  %v1917 = vsub.f32 %v973, %v1853
  %v1918 = vsub.f32 %v976, %v1854
  %v1919 = vsub.f32 %v978, %v1855
  %v1920 = vsub.f32 %v981, %v1856
  %v1921 = vsub.f32 %v983, %v1857
  %v1922 = vsub.f32 %v986, %v1858
  %v1923 = vsub.f32 %v988, %v1859
  %v1924 = vsub.f32 %v991, %v1860
  %v1925 = vsub.f32 %v993, %v1861
  %v1926 = vsub.f32 %v996, %v1862
  %v1927 = vsub.f32 %v998, %v1863
  %v1928 = vsub.f32 %v1001, %v1864
  %v1929 = vsub.f32 %v1003, %v1865
  %v1930 = vsub.f32 %v1006, %v1866
  %v1931 = vsub.f32 %v1008, %v1867
  %v1932 = vsub.f32 %v1011, %v1868
  %v1933 = vsub.f32 %v1013, %v1869
  %v1934 = vsub.f32 %v1016, %v1870
  %v1935 = vsub.f32 %v1018, %v1871
  %v1936 = vsub.f32 %v1021, %v1872
  %v1937 = vsub.f32 %v1023, %v1873
  %v1938 = vsub.f32 %v1026, %v1874
  %v1939 = vsub.f32 %v1028, %v1875
  %v1940 = vsub.f32 %v1031, %v1876
  %v1941 = vsub.f32 %v1033, %v1877
  %v1942 = vsub.f32 %v1036, %v1878
  %v1943 = vsub.f32 %v1038, %v1879
  %v1944 = vsub.f32 %v1041, %v1880
  %v1945 = vsub.f32 %v1043, %v1881
  %v1946 = vsub.f32 %v1046, %v1882
  %v1947 = vsub.f32 %v1048, %v1883
  %v1948 = vsub.f32 %v1051, %v1884
  %v1949 = vsub.f32 %v1053, %v1885
  %v1950 = vsub.f32 %v1056, %v1886
  %v1951 = vsub.f32 %v1058, %v1887
  %v1952 = vsub.f32 %v1061, %v1888
  %v1953 = vsub.f32 %v1063, %v1889
  %v1954 = vsub.f32 %v1066, %v1890
  %v1955 = vsub.f32 %v1068, %v1891
  %v1956 = vsub.f32 %v1071, %v1892
  %v1957 = vsub.f32 %v1073, %v1893
  %v1958 = vsub.f32 %v1076, %v1894
  %v1959 = vsub.f32 %v1078, %v1895
  %v1960 = vsub.f32 %v1081, %v1896
  %v1961 = vsub.f32 %v1083, %v1897
  %v1962 = vsub.f32 %v1086, %v1898
  %v1963 = vsub.f32 %v1088, %v1899
  %v1964 = vld [vmem:[%s132] sm:$0xff]
  %v1965 = vld [vmem:[%s132 + $0x8] sm:$0xff]
  %v1966 = vld [vmem:[%s132 + $0x10] sm:$0xff]
  %v1967 = vld [vmem:[%s132 + $0x18] sm:$0xff]
  %v1968 = vld [vmem:[%s132 + $0x20] sm:$0xff]
  %v1969 = vld [vmem:[%s132 + $0x28] sm:$0xff]
  %v1970 = vld [vmem:[%s132 + $0x30] sm:$0xff]
  %v1971 = vld [vmem:[%s132 + $0x38] sm:$0xff]
  %v1972 = vld [vmem:[%s132 + $0x40] sm:$0xff]
  %v1973 = vld [vmem:[%s132 + $0x48] sm:$0xff]
  %v1974 = vld [vmem:[%s132 + $0x50] sm:$0xff]
  %v1975 = vld [vmem:[%s132 + $0x58] sm:$0xff]
  %v1976 = vld [vmem:[%s132 + $0x60] sm:$0xff]
  %v1977 = vld [vmem:[%s132 + $0x68] sm:$0xff]
  %v1978 = vld [vmem:[%s132 + $0x70] sm:$0xff]
  %v1979 = vld [vmem:[%s132 + $0x78] sm:$0xff]
  %v1980 = vld [vmem:[%s132 + $0x80] sm:$0xff]
  %v1981 = vld [vmem:[%s132 + $0x88] sm:$0xff]
  %v1982 = vld [vmem:[%s132 + $0x90] sm:$0xff]
  %v1983 = vld [vmem:[%s132 + $0x98] sm:$0xff]
  %v1984 = vld [vmem:[%s132 + $0xa0] sm:$0xff]
  %v1985 = vld [vmem:[%s132 + $0xa8] sm:$0xff]
  %v1986 = vld [vmem:[%s132 + $0xb0] sm:$0xff]
  %v1987 = vld [vmem:[%s132 + $0xb8] sm:$0xff]
  %v1988 = vld [vmem:[%s132 + $0xc0] sm:$0xff]
  %v1989 = vld [vmem:[%s132 + $0xc8] sm:$0xff]
  %v1990 = vld [vmem:[%s132 + $0xd0] sm:$0xff]
  %v1991 = vld [vmem:[%s132 + $0xd8] sm:$0xff]
  %v1992 = vld [vmem:[%s132 + $0xe0] sm:$0xff]
  %v1993 = vld [vmem:[%s132 + $0xe8] sm:$0xff]
  %v1994 = vld [vmem:[%s132 + $0xf0] sm:$0xff]
  %v1995 = vld [vmem:[%s132 + $0xf8] sm:$0xff]
  %v1996 = vld [vmem:[%s132 + $0x100] sm:$0xff]
  %v1997 = vld [vmem:[%s132 + $0x108] sm:$0xff]
  %v1998 = vld [vmem:[%s132 + $0x110] sm:$0xff]
  %v1999 = vld [vmem:[%s132 + $0x118] sm:$0xff]
  %v2000 = vld [vmem:[%s132 + $0x120] sm:$0xff]
  %v2001 = vld [vmem:[%s132 + $0x128] sm:$0xff]
  %v2002 = vld [vmem:[%s132 + $0x130] sm:$0xff]
  %v2003 = vld [vmem:[%s132 + $0x138] sm:$0xff]
  %v2004 = vld [vmem:[%s132 + $0x140] sm:$0xff]
  %v2005 = vld [vmem:[%s132 + $0x148] sm:$0xff]
  %v2006 = vld [vmem:[%s132 + $0x150] sm:$0xff]
  %v2007 = vld [vmem:[%s132 + $0x158] sm:$0xff]
  %v2008 = vld [vmem:[%s132 + $0x160] sm:$0xff]
  %v2009 = vld [vmem:[%s132 + $0x168] sm:$0xff]
  %v2010 = vld [vmem:[%s132 + $0x170] sm:$0xff]
  %v2011 = vld [vmem:[%s132 + $0x178] sm:$0xff]
  %v2012 = vld [vmem:[%s132 + $0x180] sm:$0xff]
  %v2013 = vld [vmem:[%s132 + $0x188] sm:$0xff]
  %v2014 = vld [vmem:[%s132 + $0x190] sm:$0xff]
  %v2015 = vld [vmem:[%s132 + $0x198] sm:$0xff]
  %v2016 = vld [vmem:[%s132 + $0x1a0] sm:$0xff]
  %v2017 = vld [vmem:[%s132 + $0x1a8] sm:$0xff]
  %v2018 = vld [vmem:[%s132 + $0x1b0] sm:$0xff]
  %v2019 = vld [vmem:[%s132 + $0x1b8] sm:$0xff]
  %v2020 = vld [vmem:[%s132 + $0x1c0] sm:$0xff]
  %v2021 = vld [vmem:[%s132 + $0x1c8] sm:$0xff]
  %v2022 = vld [vmem:[%s132 + $0x1d0] sm:$0xff]
  %v2023 = vld [vmem:[%s132 + $0x1d8] sm:$0xff]
  %v2024 = vld [vmem:[%s132 + $0x1e0] sm:$0xff]
  %v2025 = vld [vmem:[%s132 + $0x1e8] sm:$0xff]
  %v2026 = vld [vmem:[%s132 + $0x1f0] sm:$0xff]
  %v2027 = vld [vmem:[%s132 + $0x1f8] sm:$0xff]
  %2029 = vset.pattern.permute.xlu0 0
  %2030 = vperm.xlu0 %2029, %v1964
  %v2031 = vpop.permute.xlu0 %2030
  %2034 = vset.pattern.permute.xlu0 0
  %2035 = vperm.xlu0 %2034, %v1965
  %v2036 = vpop.permute.xlu0 %2035
  %2039 = vset.pattern.permute.xlu0 0
  %2040 = vperm.xlu0 %2039, %v1966
  %v2041 = vpop.permute.xlu0 %2040
  %2044 = vset.pattern.permute.xlu0 0
  %2045 = vperm.xlu0 %2044, %v1967
  %v2046 = vpop.permute.xlu0 %2045
  %2049 = vset.pattern.permute.xlu0 0
  %2050 = vperm.xlu0 %2049, %v1968
  %v2051 = vpop.permute.xlu0 %2050
  %2054 = vset.pattern.permute.xlu0 0
  %2055 = vperm.xlu0 %2054, %v1969
  %v2056 = vpop.permute.xlu0 %2055
  %2059 = vset.pattern.permute.xlu0 0
  %2060 = vperm.xlu0 %2059, %v1970
  %v2061 = vpop.permute.xlu0 %2060
  %2064 = vset.pattern.permute.xlu0 0
  %2065 = vperm.xlu0 %2064, %v1971
  %v2066 = vpop.permute.xlu0 %2065
  %2069 = vset.pattern.permute.xlu0 0
  %2070 = vperm.xlu0 %2069, %v1972
  %v2071 = vpop.permute.xlu0 %2070
  %2074 = vset.pattern.permute.xlu0 0
  %2075 = vperm.xlu0 %2074, %v1973
  %v2076 = vpop.permute.xlu0 %2075
  %2079 = vset.pattern.permute.xlu0 0
  %2080 = vperm.xlu0 %2079, %v1974
  %v2081 = vpop.permute.xlu0 %2080
  %2084 = vset.pattern.permute.xlu0 0
  %2085 = vperm.xlu0 %2084, %v1975
  %v2086 = vpop.permute.xlu0 %2085
  %2089 = vset.pattern.permute.xlu0 0
  %2090 = vperm.xlu0 %2089, %v1976
  %v2091 = vpop.permute.xlu0 %2090
  %2094 = vset.pattern.permute.xlu0 0
  %2095 = vperm.xlu0 %2094, %v1977
  %v2096 = vpop.permute.xlu0 %2095
  %2099 = vset.pattern.permute.xlu0 0
  %2100 = vperm.xlu0 %2099, %v1978
  %v2101 = vpop.permute.xlu0 %2100
  %2104 = vset.pattern.permute.xlu0 0
  %2105 = vperm.xlu0 %2104, %v1979
  %v2106 = vpop.permute.xlu0 %2105
  %2109 = vset.pattern.permute.xlu0 0
  %2110 = vperm.xlu0 %2109, %v1980
  %v2111 = vpop.permute.xlu0 %2110
  %2114 = vset.pattern.permute.xlu0 0
  %2115 = vperm.xlu0 %2114, %v1981
  %v2116 = vpop.permute.xlu0 %2115
  %2119 = vset.pattern.permute.xlu0 0
  %2120 = vperm.xlu0 %2119, %v1982
  %v2121 = vpop.permute.xlu0 %2120
  %2124 = vset.pattern.permute.xlu0 0
  %2125 = vperm.xlu0 %2124, %v1983
  %v2126 = vpop.permute.xlu0 %2125
  %2129 = vset.pattern.permute.xlu0 0
  %2130 = vperm.xlu0 %2129, %v1984
  %v2131 = vpop.permute.xlu0 %2130
  %2134 = vset.pattern.permute.xlu0 0
  %2135 = vperm.xlu0 %2134, %v1985
  %v2136 = vpop.permute.xlu0 %2135
  %2139 = vset.pattern.permute.xlu0 0
  %2140 = vperm.xlu0 %2139, %v1986
  %v2141 = vpop.permute.xlu0 %2140
  %2144 = vset.pattern.permute.xlu0 0
  %2145 = vperm.xlu0 %2144, %v1987
  %v2146 = vpop.permute.xlu0 %2145
  %2149 = vset.pattern.permute.xlu0 0
  %2150 = vperm.xlu0 %2149, %v1988
  %v2151 = vpop.permute.xlu0 %2150
  %2154 = vset.pattern.permute.xlu0 0
  %2155 = vperm.xlu0 %2154, %v1989
  %v2156 = vpop.permute.xlu0 %2155
  %2159 = vset.pattern.permute.xlu0 0
  %2160 = vperm.xlu0 %2159, %v1990
  %v2161 = vpop.permute.xlu0 %2160
  %2164 = vset.pattern.permute.xlu0 0
  %2165 = vperm.xlu0 %2164, %v1991
  %v2166 = vpop.permute.xlu0 %2165
  %2169 = vset.pattern.permute.xlu0 0
  %2170 = vperm.xlu0 %2169, %v1992
  %v2171 = vpop.permute.xlu0 %2170
  %2174 = vset.pattern.permute.xlu0 0
  %2175 = vperm.xlu0 %2174, %v1993
  %v2176 = vpop.permute.xlu0 %2175
  %2179 = vset.pattern.permute.xlu0 0
  %2180 = vperm.xlu0 %2179, %v1994
  %v2181 = vpop.permute.xlu0 %2180
  %2184 = vset.pattern.permute.xlu0 0
  %2185 = vperm.xlu0 %2184, %v1995
  %v2186 = vpop.permute.xlu0 %2185
  %2189 = vset.pattern.permute.xlu0 0
  %2190 = vperm.xlu0 %2189, %v1996
  %v2191 = vpop.permute.xlu0 %2190
  %2194 = vset.pattern.permute.xlu0 0
  %2195 = vperm.xlu0 %2194, %v1997
  %v2196 = vpop.permute.xlu0 %2195
  %2199 = vset.pattern.permute.xlu0 0
  %2200 = vperm.xlu0 %2199, %v1998
  %v2201 = vpop.permute.xlu0 %2200
  %2204 = vset.pattern.permute.xlu0 0
  %2205 = vperm.xlu0 %2204, %v1999
  %v2206 = vpop.permute.xlu0 %2205
  %2209 = vset.pattern.permute.xlu0 0
  %2210 = vperm.xlu0 %2209, %v2000
  %v2211 = vpop.permute.xlu0 %2210
  %2214 = vset.pattern.permute.xlu0 0
  %2215 = vperm.xlu0 %2214, %v2001
  %v2216 = vpop.permute.xlu0 %2215
  %2219 = vset.pattern.permute.xlu0 0
  %2220 = vperm.xlu0 %2219, %v2002
  %v2221 = vpop.permute.xlu0 %2220
  %2224 = vset.pattern.permute.xlu0 0
  %2225 = vperm.xlu0 %2224, %v2003
  %v2226 = vpop.permute.xlu0 %2225
  %2229 = vset.pattern.permute.xlu0 0
  %2230 = vperm.xlu0 %2229, %v2004
  %v2231 = vpop.permute.xlu0 %2230
  %2234 = vset.pattern.permute.xlu0 0
  %2235 = vperm.xlu0 %2234, %v2005
  %v2236 = vpop.permute.xlu0 %2235
  %2239 = vset.pattern.permute.xlu0 0
  %2240 = vperm.xlu0 %2239, %v2006
  %v2241 = vpop.permute.xlu0 %2240
  %2244 = vset.pattern.permute.xlu0 0
  %2245 = vperm.xlu0 %2244, %v2007
  %v2246 = vpop.permute.xlu0 %2245
  %2249 = vset.pattern.permute.xlu0 0
  %2250 = vperm.xlu0 %2249, %v2008
  %v2251 = vpop.permute.xlu0 %2250
  %2254 = vset.pattern.permute.xlu0 0
  %2255 = vperm.xlu0 %2254, %v2009
  %v2256 = vpop.permute.xlu0 %2255
  %2259 = vset.pattern.permute.xlu0 0
  %2260 = vperm.xlu0 %2259, %v2010
  %v2261 = vpop.permute.xlu0 %2260
  %2264 = vset.pattern.permute.xlu0 0
  %2265 = vperm.xlu0 %2264, %v2011
  %v2266 = vpop.permute.xlu0 %2265
  %2269 = vset.pattern.permute.xlu0 0
  %2270 = vperm.xlu0 %2269, %v2012
  %v2271 = vpop.permute.xlu0 %2270
  %2274 = vset.pattern.permute.xlu0 0
  %2275 = vperm.xlu0 %2274, %v2013
  %v2276 = vpop.permute.xlu0 %2275
  %2279 = vset.pattern.permute.xlu0 0
  %2280 = vperm.xlu0 %2279, %v2014
  %v2281 = vpop.permute.xlu0 %2280
  %2284 = vset.pattern.permute.xlu0 0
  %2285 = vperm.xlu0 %2284, %v2015
  %v2286 = vpop.permute.xlu0 %2285
  %2289 = vset.pattern.permute.xlu0 0
  %2290 = vperm.xlu0 %2289, %v2016
  %v2291 = vpop.permute.xlu0 %2290
  %2294 = vset.pattern.permute.xlu0 0
  %2295 = vperm.xlu0 %2294, %v2017
  %v2296 = vpop.permute.xlu0 %2295
  %2299 = vset.pattern.permute.xlu0 0
  %2300 = vperm.xlu0 %2299, %v2018
  %v2301 = vpop.permute.xlu0 %2300
  %2304 = vset.pattern.permute.xlu0 0
  %2305 = vperm.xlu0 %2304, %v2019
  %v2306 = vpop.permute.xlu0 %2305
  %2309 = vset.pattern.permute.xlu0 0
  %2310 = vperm.xlu0 %2309, %v2020
  %v2311 = vpop.permute.xlu0 %2310
  %2314 = vset.pattern.permute.xlu0 0
  %2315 = vperm.xlu0 %2314, %v2021
  %v2316 = vpop.permute.xlu0 %2315
  %2319 = vset.pattern.permute.xlu0 0
  %2320 = vperm.xlu0 %2319, %v2022
  %v2321 = vpop.permute.xlu0 %2320
  %2324 = vset.pattern.permute.xlu0 0
  %2325 = vperm.xlu0 %2324, %v2023
  %v2326 = vpop.permute.xlu0 %2325
  %2329 = vset.pattern.permute.xlu0 0
  %2330 = vperm.xlu0 %2329, %v2024
  %v2331 = vpop.permute.xlu0 %2330
  %2334 = vset.pattern.permute.xlu0 0
  %2335 = vperm.xlu0 %2334, %v2025
  %v2336 = vpop.permute.xlu0 %2335
  %2339 = vset.pattern.permute.xlu0 0
  %2340 = vperm.xlu0 %2339, %v2026
  %v2341 = vpop.permute.xlu0 %2340
  %2344 = vset.pattern.permute.xlu0 0
  %2345 = vperm.xlu0 %2344, %v2027
  %v2346 = vpop.permute.xlu0 %2345
  %v2348 = vmul.f32 %v1900, %v2031
  %v2349 = vmul.f32 %v1901, %v2036
  %v2350 = vmul.f32 %v1902, %v2041
  %v2351 = vmul.f32 %v1903, %v2046
  %v2352 = vmul.f32 %v1904, %v2051
  %v2353 = vmul.f32 %v1905, %v2056
  %v2354 = vmul.f32 %v1906, %v2061
  %v2355 = vmul.f32 %v1907, %v2066
  %v2356 = vmul.f32 %v1908, %v2071
  %v2357 = vmul.f32 %v1909, %v2076
  %v2358 = vmul.f32 %v1910, %v2081
  %v2359 = vmul.f32 %v1911, %v2086
  %v2360 = vmul.f32 %v1912, %v2091
  %v2361 = vmul.f32 %v1913, %v2096
  %v2362 = vmul.f32 %v1914, %v2101
  %v2363 = vmul.f32 %v1915, %v2106
  %v2364 = vmul.f32 %v1916, %v2111
  %v2365 = vmul.f32 %v1917, %v2116
  %v2366 = vmul.f32 %v1918, %v2121
  %v2367 = vmul.f32 %v1919, %v2126
  %v2368 = vmul.f32 %v1920, %v2131
  %v2369 = vmul.f32 %v1921, %v2136
  %v2370 = vmul.f32 %v1922, %v2141
  %v2371 = vmul.f32 %v1923, %v2146
  %v2372 = vmul.f32 %v1924, %v2151
  %v2373 = vmul.f32 %v1925, %v2156
  %v2374 = vmul.f32 %v1926, %v2161
  %v2375 = vmul.f32 %v1927, %v2166
  %v2376 = vmul.f32 %v1928, %v2171
  %v2377 = vmul.f32 %v1929, %v2176
  %v2378 = vmul.f32 %v1930, %v2181
  %v2379 = vmul.f32 %v1931, %v2186
  %v2380 = vmul.f32 %v1932, %v2191
  %v2381 = vmul.f32 %v1933, %v2196
  %v2382 = vmul.f32 %v1934, %v2201
  %v2383 = vmul.f32 %v1935, %v2206
  %v2384 = vmul.f32 %v1936, %v2211
  %v2385 = vmul.f32 %v1937, %v2216
  %v2386 = vmul.f32 %v1938, %v2221
  %v2387 = vmul.f32 %v1939, %v2226
  %v2388 = vmul.f32 %v1940, %v2231
  %v2389 = vmul.f32 %v1941, %v2236
  %v2390 = vmul.f32 %v1942, %v2241
  %v2391 = vmul.f32 %v1943, %v2246
  %v2392 = vmul.f32 %v1944, %v2251
  %v2393 = vmul.f32 %v1945, %v2256
  %v2394 = vmul.f32 %v1946, %v2261
  %v2395 = vmul.f32 %v1947, %v2266
  %v2396 = vmul.f32 %v1948, %v2271
  %v2397 = vmul.f32 %v1949, %v2276
  %v2398 = vmul.f32 %v1950, %v2281
  %v2399 = vmul.f32 %v1951, %v2286
  %v2400 = vmul.f32 %v1952, %v2291
  %v2401 = vmul.f32 %v1953, %v2296
  %v2402 = vmul.f32 %v1954, %v2301
  %v2403 = vmul.f32 %v1955, %v2306
  %v2404 = vmul.f32 %v1956, %v2311
  %v2405 = vmul.f32 %v1957, %v2316
  %v2406 = vmul.f32 %v1958, %v2321
  %v2407 = vmul.f32 %v1959, %v2326
  %v2408 = vmul.f32 %v1960, %v2331
  %v2409 = vmul.f32 %v1961, %v2336
  %v2410 = vmul.f32 %v1962, %v2341
  %v2411 = vmul.f32 %v1963, %v2346
  %v2412 = vld [vmem:[%s14] sm:$0x1]
  %v2413 = vmul.f32 %v2348, %v2348
  %v2414 = vmul.f32 %v2349, %v2349
  %v2415 = vmul.f32 %v2350, %v2350
  %v2416 = vmul.f32 %v2351, %v2351
  %v2417 = vmul.f32 %v2352, %v2352
  %v2418 = vmul.f32 %v2353, %v2353
  %v2419 = vmul.f32 %v2354, %v2354
  %v2420 = vmul.f32 %v2355, %v2355
  %v2421 = vmul.f32 %v2356, %v2356
  %v2422 = vmul.f32 %v2357, %v2357
  %v2423 = vmul.f32 %v2358, %v2358
  %v2424 = vmul.f32 %v2359, %v2359
  %v2425 = vmul.f32 %v2360, %v2360
  %v2426 = vmul.f32 %v2361, %v2361
  %v2427 = vmul.f32 %v2362, %v2362
  %v2428 = vmul.f32 %v2363, %v2363
  %v2429 = vmul.f32 %v2364, %v2364
  %v2430 = vmul.f32 %v2365, %v2365
  %v2431 = vmul.f32 %v2366, %v2366
  %v2432 = vmul.f32 %v2367, %v2367
  %v2433 = vmul.f32 %v2368, %v2368
  %v2434 = vmul.f32 %v2369, %v2369
  %v2435 = vmul.f32 %v2370, %v2370
  %v2436 = vmul.f32 %v2371, %v2371
  %v2437 = vmul.f32 %v2372, %v2372
  %v2438 = vmul.f32 %v2373, %v2373
  %v2439 = vmul.f32 %v2374, %v2374
  %v2440 = vmul.f32 %v2375, %v2375
  %v2441 = vmul.f32 %v2376, %v2376
  %v2442 = vmul.f32 %v2377, %v2377
  %v2443 = vmul.f32 %v2378, %v2378
  %v2444 = vmul.f32 %v2379, %v2379
  %v2445 = vmul.f32 %v2380, %v2380
  %v2446 = vmul.f32 %v2381, %v2381
  %v2447 = vmul.f32 %v2382, %v2382
  %v2448 = vmul.f32 %v2383, %v2383
  %v2449 = vmul.f32 %v2384, %v2384
  %v2450 = vmul.f32 %v2385, %v2385
  %v2451 = vmul.f32 %v2386, %v2386
  %v2452 = vmul.f32 %v2387, %v2387
  %v2453 = vmul.f32 %v2388, %v2388
  %v2454 = vmul.f32 %v2389, %v2389
  %v2455 = vmul.f32 %v2390, %v2390
  %v2456 = vmul.f32 %v2391, %v2391
  %v2457 = vmul.f32 %v2392, %v2392
  %v2458 = vmul.f32 %v2393, %v2393
  %v2459 = vmul.f32 %v2394, %v2394
  %v2460 = vmul.f32 %v2395, %v2395
  %v2461 = vmul.f32 %v2396, %v2396
  %v2462 = vmul.f32 %v2397, %v2397
  %v2463 = vmul.f32 %v2398, %v2398
  %v2464 = vmul.f32 %v2399, %v2399
  %v2465 = vmul.f32 %v2400, %v2400
  %v2466 = vmul.f32 %v2401, %v2401
  %v2467 = vmul.f32 %v2402, %v2402
  %v2468 = vmul.f32 %v2403, %v2403
  %v2469 = vmul.f32 %v2404, %v2404
  %v2470 = vmul.f32 %v2405, %v2405
  %v2471 = vmul.f32 %v2406, %v2406
  %v2472 = vmul.f32 %v2407, %v2407
  %v2473 = vmul.f32 %v2408, %v2408
  %v2474 = vmul.f32 %v2409, %v2409
  %v2475 = vmul.f32 %v2410, %v2410
  %v2476 = vmul.f32 %v2411, %v2411
  %v2477 = vadd.f32 %v2413, %v2414
  %v2478 = vadd.f32 %v2477, %v2415
  %v2479 = vadd.f32 %v2478, %v2416
  %v2480 = vadd.f32 %v2479, %v2417
  %v2481 = vadd.f32 %v2480, %v2418
  %v2482 = vadd.f32 %v2481, %v2419
  %v2483 = vadd.f32 %v2482, %v2420
  %v2484 = vadd.f32 %v2483, %v2421
  %v2485 = vadd.f32 %v2484, %v2422
  %v2486 = vadd.f32 %v2485, %v2423
  %v2487 = vadd.f32 %v2486, %v2424
  %v2488 = vadd.f32 %v2487, %v2425
  %v2489 = vadd.f32 %v2488, %v2426
  %v2490 = vadd.f32 %v2489, %v2427
  %v2491 = vadd.f32 %v2490, %v2428
  %v2492 = vadd.f32 %v2491, %v2429
  %v2493 = vadd.f32 %v2492, %v2430
  %v2494 = vadd.f32 %v2493, %v2431
  %v2495 = vadd.f32 %v2494, %v2432
  %v2496 = vadd.f32 %v2495, %v2433
  %v2497 = vadd.f32 %v2496, %v2434
  %v2498 = vadd.f32 %v2497, %v2435
  %v2499 = vadd.f32 %v2498, %v2436
  %v2500 = vadd.f32 %v2499, %v2437
  %v2501 = vadd.f32 %v2500, %v2438
  %v2502 = vadd.f32 %v2501, %v2439
  %v2503 = vadd.f32 %v2502, %v2440
  %v2504 = vadd.f32 %v2503, %v2441
  %v2505 = vadd.f32 %v2504, %v2442
  %v2506 = vadd.f32 %v2505, %v2443
  %v2507 = vadd.f32 %v2506, %v2444
  %v2508 = vadd.f32 %v2507, %v2445
  %v2509 = vadd.f32 %v2508, %v2446
  %v2510 = vadd.f32 %v2509, %v2447
  %v2511 = vadd.f32 %v2510, %v2448
  %v2512 = vadd.f32 %v2511, %v2449
  %v2513 = vadd.f32 %v2512, %v2450
  %v2514 = vadd.f32 %v2513, %v2451
  %v2515 = vadd.f32 %v2514, %v2452
  %v2516 = vadd.f32 %v2515, %v2453
  %v2517 = vadd.f32 %v2516, %v2454
  %v2518 = vadd.f32 %v2517, %v2455
  %v2519 = vadd.f32 %v2518, %v2456
  %v2520 = vadd.f32 %v2519, %v2457
  %v2521 = vadd.f32 %v2520, %v2458
  %v2522 = vadd.f32 %v2521, %v2459
  %v2523 = vadd.f32 %v2522, %v2460
  %v2524 = vadd.f32 %v2523, %v2461
  %v2525 = vadd.f32 %v2524, %v2462
  %v2526 = vadd.f32 %v2525, %v2463
  %v2527 = vadd.f32 %v2526, %v2464
  %v2528 = vadd.f32 %v2527, %v2465
  %v2529 = vadd.f32 %v2528, %v2466
  %v2530 = vadd.f32 %v2529, %v2467
  %v2531 = vadd.f32 %v2530, %v2468
  %v2532 = vadd.f32 %v2531, %v2469
  %v2533 = vadd.f32 %v2532, %v2470
  %v2534 = vadd.f32 %v2533, %v2471
  %v2535 = vadd.f32 %v2534, %v2472
  %v2536 = vadd.f32 %v2535, %v2473
  %v2537 = vadd.f32 %v2536, %v2474
  %v2538 = vadd.f32 %v2537, %v2475
  %v2539 = vadd.f32 %v2538, %v2476
  %v2540 = vrot.slane %v2539, 4
  %v2541 = vadd.f32 %v2539, %v2540
  %v2542 = vrot.slane %v2541, 2
  %v2543 = vadd.f32 %v2541, %v2542
  %v2544 = vrot.slane %v2543, 1
  %v2545 = vadd.f32 %v2543, %v2544
  %v2546 = vadd.f32 %v2412, %v2545
  %2547 = vst [vmem:[%s14] sm:$0x1] %v2546
  %v2548 = vld [vmem:[%s8] sm:$0xf]
  %v2549 = vld [vmem:[%s8 + $0x4] sm:$0xf]
  %v2550 = vld [vmem:[%s8 + $0x8] sm:$0xf]
  %v2551 = vld [vmem:[%s8 + $0xc] sm:$0xf]
  %v2552 = vld [vmem:[%s8 + $0x10] sm:$0xf]
  %v2553 = vld [vmem:[%s8 + $0x14] sm:$0xf]
  %v2554 = vld [vmem:[%s8 + $0x18] sm:$0xf]
  %v2555 = vld [vmem:[%s8 + $0x1c] sm:$0xf]
  %v2556 = vld [vmem:[%s8 + $0x20] sm:$0xf]
  %v2557 = vld [vmem:[%s8 + $0x24] sm:$0xf]
  %v2558 = vld [vmem:[%s8 + $0x28] sm:$0xf]
  %v2559 = vld [vmem:[%s8 + $0x2c] sm:$0xf]
  %v2560 = vld [vmem:[%s8 + $0x30] sm:$0xf]
  %v2561 = vld [vmem:[%s8 + $0x34] sm:$0xf]
  %v2562 = vld [vmem:[%s8 + $0x38] sm:$0xf]
  %v2563 = vld [vmem:[%s8 + $0x3c] sm:$0xf]
  %v2564 = vld [vmem:[%s9] sm:$0x1]
  %v2566 = vperm.slane %v2564, 0
  %v2632 = vunpack.c.l.b16 %v1259
  %v2633 = vunpack.c.l.b16 %v1260
  %v2634 = vunpack.c.l.b16 %v1261
  %v2635 = vunpack.c.l.b16 %v1262
  %v2636 = vunpack.c.l.b16 %v1263
  %v2637 = vunpack.c.l.b16 %v1264
  %v2638 = vunpack.c.l.b16 %v1265
  %v2639 = vunpack.c.l.b16 %v1266
  %v2640 = vunpack.c.l.b16 %v1267
  %v2641 = vunpack.c.l.b16 %v1268
  %v2642 = vunpack.c.l.b16 %v1269
  %v2643 = vunpack.c.l.b16 %v1270
  %v2644 = vunpack.c.l.b16 %v1271
  %v2645 = vunpack.c.l.b16 %v1272
  %v2646 = vunpack.c.l.b16 %v1273
  %v2647 = vunpack.c.l.b16 %v1274
  %v2648 = vunpack.c.l.b16 %v1275
  %v2649 = vunpack.c.l.b16 %v1276
  %v2650 = vunpack.c.l.b16 %v1277
  %v2651 = vunpack.c.l.b16 %v1278
  %v2652 = vunpack.c.l.b16 %v1279
  %v2653 = vunpack.c.l.b16 %v1280
  %v2654 = vunpack.c.l.b16 %v1281
  %v2655 = vunpack.c.l.b16 %v1282
  %v2656 = vunpack.c.l.b16 %v1283
  %v2657 = vunpack.c.l.b16 %v1284
  %v2658 = vunpack.c.l.b16 %v1285
  %v2659 = vunpack.c.l.b16 %v1286
  %v2660 = vunpack.c.l.b16 %v1287
  %v2661 = vunpack.c.l.b16 %v1288
  %v2662 = vunpack.c.l.b16 %v1289
  %v2663 = vunpack.c.l.b16 %v1290
  %v2664 = vunpack.c.l.b16 %v1291
  %v2665 = vunpack.c.l.b16 %v1292
  %v2666 = vunpack.c.l.b16 %v1293
  %v2667 = vunpack.c.l.b16 %v1294
  %v2668 = vunpack.c.l.b16 %v1295
  %v2669 = vunpack.c.l.b16 %v1296
  %v2670 = vunpack.c.l.b16 %v1297
  %v2671 = vunpack.c.l.b16 %v1298
  %v2672 = vunpack.c.l.b16 %v1299
  %v2673 = vunpack.c.l.b16 %v1300
  %v2674 = vunpack.c.l.b16 %v1301
  %v2675 = vunpack.c.l.b16 %v1302
  %v2676 = vunpack.c.l.b16 %v1303
  %v2677 = vunpack.c.l.b16 %v1304
  %v2678 = vunpack.c.l.b16 %v1305
  %v2679 = vunpack.c.l.b16 %v1306
  %v2680 = vunpack.c.l.b16 %v1307
  %v2681 = vunpack.c.l.b16 %v1308
  %v2682 = vunpack.c.l.b16 %v1309
  %v2683 = vunpack.c.l.b16 %v1310
  %v2684 = vunpack.c.l.b16 %v1311
  %v2685 = vunpack.c.l.b16 %v1312
  %v2686 = vunpack.c.l.b16 %v1313
  %v2687 = vunpack.c.l.b16 %v1314
  %v2688 = vunpack.c.l.b16 %v1315
  %v2689 = vunpack.c.l.b16 %v1316
  %v2690 = vunpack.c.l.b16 %v1317
  %v2691 = vunpack.c.l.b16 %v1318
  %v2692 = vunpack.c.l.b16 %v1319
  %v2693 = vunpack.c.l.b16 %v1320
  %v2694 = vunpack.c.l.b16 %v1321
  %v2695 = vunpack.c.l.b16 %v1322
  %v2696 = vpack.c.b16 %v2633, %v2632
  %v2697 = vpack.c.b16 %v2635, %v2634
  %v2698 = vpack.c.b16 %v2637, %v2636
  %v2699 = vpack.c.b16 %v2639, %v2638
  %v2700 = vpack.c.b16 %v2641, %v2640
  %v2701 = vpack.c.b16 %v2643, %v2642
  %v2702 = vpack.c.b16 %v2645, %v2644
  %v2703 = vpack.c.b16 %v2647, %v2646
  %v2704 = vpack.c.b16 %v2649, %v2648
  %v2705 = vpack.c.b16 %v2651, %v2650
  %v2706 = vpack.c.b16 %v2653, %v2652
  %v2707 = vpack.c.b16 %v2655, %v2654
  %v2708 = vpack.c.b16 %v2657, %v2656
  %v2709 = vpack.c.b16 %v2659, %v2658
  %v2710 = vpack.c.b16 %v2661, %v2660
  %v2711 = vpack.c.b16 %v2663, %v2662
  %v2712 = vpack.c.b16 %v2665, %v2664
  %v2713 = vpack.c.b16 %v2667, %v2666
  %v2714 = vpack.c.b16 %v2669, %v2668
  %v2715 = vpack.c.b16 %v2671, %v2670
  %v2716 = vpack.c.b16 %v2673, %v2672
  %v2717 = vpack.c.b16 %v2675, %v2674
  %v2718 = vpack.c.b16 %v2677, %v2676
  %v2719 = vpack.c.b16 %v2679, %v2678
  %v2720 = vpack.c.b16 %v2681, %v2680
  %v2721 = vpack.c.b16 %v2683, %v2682
  %v2722 = vpack.c.b16 %v2685, %v2684
  %v2723 = vpack.c.b16 %v2687, %v2686
  %v2724 = vpack.c.b16 %v2689, %v2688
  %v2725 = vpack.c.b16 %v2691, %v2690
  %v2726 = vpack.c.b16 %v2693, %v2692
  %v2727 = vpack.c.b16 %v2695, %v2694
  %v2776 = vunpack.c.l.b16 %v2548
  %v2777 = vunpack.c.l.b16 %v2549
  %v2778 = vunpack.c.l.b16 %v2550
  %v2779 = vunpack.c.l.b16 %v2551
  %v2780 = vunpack.c.l.b16 %v2552
  %v2781 = vunpack.c.l.b16 %v2553
  %v2782 = vunpack.c.l.b16 %v2554
  %v2783 = vunpack.c.l.b16 %v2555
  %v2784 = vunpack.c.l.b16 %v2556
  %v2785 = vunpack.c.l.b16 %v2557
  %v2786 = vunpack.c.l.b16 %v2558
  %v2787 = vunpack.c.l.b16 %v2559
  %v2788 = vunpack.c.l.b16 %v2560
  %v2789 = vunpack.c.l.b16 %v2561
  %v2790 = vunpack.c.l.b16 %v2562
  %v2791 = vunpack.c.l.b16 %v2563
  %v2792 = vpack.c.b16 %v2777, %v2776
  %v2793 = vpack.c.b16 %v2779, %v2778
  %v2794 = vpack.c.b16 %v2781, %v2780
  %v2795 = vpack.c.b16 %v2783, %v2782
  %v2796 = vpack.c.b16 %v2785, %v2784
  %v2797 = vpack.c.b16 %v2787, %v2786
  %v2798 = vpack.c.b16 %v2789, %v2788
  %v2799 = vpack.c.b16 %v2791, %v2790
  %2808 = vmatpush.bf16.msra.mxu0 %v2799
  %2809 = vmatpush.bf16.msra.mxu0 %v2798
  %2810 = vmatpush.bf16.msra.mxu0 %v2797
  %2811 = vmatpush.bf16.msra.mxu0 %v2796
  %2812 = vmatpush.bf16.msra.mxu0 %v2795
  %2813 = vmatpush.bf16.msra.mxu0 %v2794
  %2814 = vmatpush.bf16.msra.mxu0 %v2793
  %2815 = vmatpush.bf16.msra.mxu0 %v2792
  %2816 = vmatmul.bf16.gmra.mxu0 %v2696
  %v2817 = vpop.f32.mrf.mxu0
  %v2818 = vadd.f32 %v2566, %v2817
  %v2819 = vpop.f32.mrf.mxu0
  %v2820 = vadd.f32 %v2566, %v2819
  %2821 = vmatmul.bf16.gmra.mxu0 %v2697
  %v2822 = vpop.f32.mrf.mxu0
  %v2823 = vadd.f32 %v2566, %v2822
  %v2824 = vpop.f32.mrf.mxu0
  %v2825 = vadd.f32 %v2566, %v2824
  %2826 = vmatmul.bf16.gmra.mxu0 %v2698
  %v2827 = vpop.f32.mrf.mxu0
  %v2828 = vadd.f32 %v2566, %v2827
  %v2829 = vpop.f32.mrf.mxu0
  %v2830 = vadd.f32 %v2566, %v2829
  %2831 = vmatmul.bf16.gmra.mxu0 %v2699
  %v2832 = vpop.f32.mrf.mxu0
  %v2833 = vadd.f32 %v2566, %v2832
  %v2834 = vpop.f32.mrf.mxu0
  %v2835 = vadd.f32 %v2566, %v2834
  %2836 = vmatmul.bf16.gmra.mxu0 %v2700
  %v2837 = vpop.f32.mrf.mxu0
  %v2838 = vadd.f32 %v2566, %v2837
  %v2839 = vpop.f32.mrf.mxu0
  %v2840 = vadd.f32 %v2566, %v2839
  %2841 = vmatmul.bf16.gmra.mxu0 %v2701
  %v2842 = vpop.f32.mrf.mxu0
  %v2843 = vadd.f32 %v2566, %v2842
  %v2844 = vpop.f32.mrf.mxu0
  %v2845 = vadd.f32 %v2566, %v2844
  %2846 = vmatmul.bf16.gmra.mxu0 %v2702
  %v2847 = vpop.f32.mrf.mxu0
  %v2848 = vadd.f32 %v2566, %v2847
  %v2849 = vpop.f32.mrf.mxu0
  %v2850 = vadd.f32 %v2566, %v2849
  %2851 = vmatmul.bf16.gmra.mxu0 %v2703
  %v2852 = vpop.f32.mrf.mxu0
  %v2853 = vadd.f32 %v2566, %v2852
  %v2854 = vpop.f32.mrf.mxu0
  %v2855 = vadd.f32 %v2566, %v2854
  %2856 = vmatmul.bf16.gmra.mxu0 %v2704
  %v2857 = vpop.f32.mrf.mxu0
  %v2858 = vadd.f32 %v2566, %v2857
  %v2859 = vpop.f32.mrf.mxu0
  %v2860 = vadd.f32 %v2566, %v2859
  %2861 = vmatmul.bf16.gmra.mxu0 %v2705
  %v2862 = vpop.f32.mrf.mxu0
  %v2863 = vadd.f32 %v2566, %v2862
  %v2864 = vpop.f32.mrf.mxu0
  %v2865 = vadd.f32 %v2566, %v2864
  %2866 = vmatmul.bf16.gmra.mxu0 %v2706
  %v2867 = vpop.f32.mrf.mxu0
  %v2868 = vadd.f32 %v2566, %v2867
  %v2869 = vpop.f32.mrf.mxu0
  %v2870 = vadd.f32 %v2566, %v2869
  %2871 = vmatmul.bf16.gmra.mxu0 %v2707
  %v2872 = vpop.f32.mrf.mxu0
  %v2873 = vadd.f32 %v2566, %v2872
  %v2874 = vpop.f32.mrf.mxu0
  %v2875 = vadd.f32 %v2566, %v2874
  %2876 = vmatmul.bf16.gmra.mxu0 %v2708
  %v2877 = vpop.f32.mrf.mxu0
  %v2878 = vadd.f32 %v2566, %v2877
  %v2879 = vpop.f32.mrf.mxu0
  %v2880 = vadd.f32 %v2566, %v2879
  %2881 = vmatmul.bf16.gmra.mxu0 %v2709
  %v2882 = vpop.f32.mrf.mxu0
  %v2883 = vadd.f32 %v2566, %v2882
  %v2884 = vpop.f32.mrf.mxu0
  %v2885 = vadd.f32 %v2566, %v2884
  %2886 = vmatmul.bf16.gmra.mxu0 %v2710
  %v2887 = vpop.f32.mrf.mxu0
  %v2888 = vadd.f32 %v2566, %v2887
  %v2889 = vpop.f32.mrf.mxu0
  %v2890 = vadd.f32 %v2566, %v2889
  %2891 = vmatmul.bf16.gmra.mxu0 %v2711
  %v2892 = vpop.f32.mrf.mxu0
  %v2893 = vadd.f32 %v2566, %v2892
  %v2894 = vpop.f32.mrf.mxu0
  %v2895 = vadd.f32 %v2566, %v2894
  %2896 = vmatmul.bf16.gmra.mxu0 %v2712
  %v2897 = vpop.f32.mrf.mxu0
  %v2898 = vadd.f32 %v2566, %v2897
  %v2899 = vpop.f32.mrf.mxu0
  %v2900 = vadd.f32 %v2566, %v2899
  %2901 = vmatmul.bf16.gmra.mxu0 %v2713
  %v2902 = vpop.f32.mrf.mxu0
  %v2903 = vadd.f32 %v2566, %v2902
  %v2904 = vpop.f32.mrf.mxu0
  %v2905 = vadd.f32 %v2566, %v2904
  %2906 = vmatmul.bf16.gmra.mxu0 %v2714
  %v2907 = vpop.f32.mrf.mxu0
  %v2908 = vadd.f32 %v2566, %v2907
  %v2909 = vpop.f32.mrf.mxu0
  %v2910 = vadd.f32 %v2566, %v2909
  %2911 = vmatmul.bf16.gmra.mxu0 %v2715
  %v2912 = vpop.f32.mrf.mxu0
  %v2913 = vadd.f32 %v2566, %v2912
  %v2914 = vpop.f32.mrf.mxu0
  %v2915 = vadd.f32 %v2566, %v2914
  %2916 = vmatmul.bf16.gmra.mxu0 %v2716
  %v2917 = vpop.f32.mrf.mxu0
  %v2918 = vadd.f32 %v2566, %v2917
  %v2919 = vpop.f32.mrf.mxu0
  %v2920 = vadd.f32 %v2566, %v2919
  %2921 = vmatmul.bf16.gmra.mxu0 %v2717
  %v2922 = vpop.f32.mrf.mxu0
  %v2923 = vadd.f32 %v2566, %v2922
  %v2924 = vpop.f32.mrf.mxu0
  %v2925 = vadd.f32 %v2566, %v2924
  %2926 = vmatmul.bf16.gmra.mxu0 %v2718
  %v2927 = vpop.f32.mrf.mxu0
  %v2928 = vadd.f32 %v2566, %v2927
  %v2929 = vpop.f32.mrf.mxu0
  %v2930 = vadd.f32 %v2566, %v2929
  %2931 = vmatmul.bf16.gmra.mxu0 %v2719
  %v2932 = vpop.f32.mrf.mxu0
  %v2933 = vadd.f32 %v2566, %v2932
  %v2934 = vpop.f32.mrf.mxu0
  %v2935 = vadd.f32 %v2566, %v2934
  %2936 = vmatmul.bf16.gmra.mxu0 %v2720
  %v2937 = vpop.f32.mrf.mxu0
  %v2938 = vadd.f32 %v2566, %v2937
  %v2939 = vpop.f32.mrf.mxu0
  %v2940 = vadd.f32 %v2566, %v2939
  %2941 = vmatmul.bf16.gmra.mxu0 %v2721
  %v2942 = vpop.f32.mrf.mxu0
  %v2943 = vadd.f32 %v2566, %v2942
  %v2944 = vpop.f32.mrf.mxu0
  %v2945 = vadd.f32 %v2566, %v2944
  %2946 = vmatmul.bf16.gmra.mxu0 %v2722
  %v2947 = vpop.f32.mrf.mxu0
  %v2948 = vadd.f32 %v2566, %v2947
  %v2949 = vpop.f32.mrf.mxu0
  %v2950 = vadd.f32 %v2566, %v2949
  %2951 = vmatmul.bf16.gmra.mxu0 %v2723
  %v2952 = vpop.f32.mrf.mxu0
  %v2953 = vadd.f32 %v2566, %v2952
  %v2954 = vpop.f32.mrf.mxu0
  %v2955 = vadd.f32 %v2566, %v2954
  %2956 = vmatmul.bf16.gmra.mxu0 %v2724
  %v2957 = vpop.f32.mrf.mxu0
  %v2958 = vadd.f32 %v2566, %v2957
  %v2959 = vpop.f32.mrf.mxu0
  %v2960 = vadd.f32 %v2566, %v2959
  %2961 = vmatmul.bf16.gmra.mxu0 %v2725
  %v2962 = vpop.f32.mrf.mxu0
  %v2963 = vadd.f32 %v2566, %v2962
  %v2964 = vpop.f32.mrf.mxu0
  %v2965 = vadd.f32 %v2566, %v2964
  %2966 = vmatmul.bf16.gmra.mxu0 %v2726
  %v2967 = vpop.f32.mrf.mxu0
  %v2968 = vadd.f32 %v2566, %v2967
  %v2969 = vpop.f32.mrf.mxu0
  %v2970 = vadd.f32 %v2566, %v2969
  %2971 = vmatmul.bf16.gmra.mxu0 %v2727
  %v2972 = vpop.f32.mrf.mxu0
  %v2973 = vadd.f32 %v2566, %v2972
  %v2974 = vpop.f32.mrf.mxu0
  %v2975 = vadd.f32 %v2566, %v2974
  %2976 = vdwg.mxu0
  %v2977 = vmax.f32 %v2818, 0.0
  %v2978 = vmax.f32 %v2820, 0.0
  %v2979 = vmax.f32 %v2823, 0.0
  %v2980 = vmax.f32 %v2825, 0.0
  %v2981 = vmax.f32 %v2828, 0.0
  %v2982 = vmax.f32 %v2830, 0.0
  %v2983 = vmax.f32 %v2833, 0.0
  %v2984 = vmax.f32 %v2835, 0.0
  %v2985 = vmax.f32 %v2838, 0.0
  %v2986 = vmax.f32 %v2840, 0.0
  %v2987 = vmax.f32 %v2843, 0.0
  %v2988 = vmax.f32 %v2845, 0.0
  %v2989 = vmax.f32 %v2848, 0.0
  %v2990 = vmax.f32 %v2850, 0.0
  %v2991 = vmax.f32 %v2853, 0.0
  %v2992 = vmax.f32 %v2855, 0.0
  %v2993 = vmax.f32 %v2858, 0.0
  %v2994 = vmax.f32 %v2860, 0.0
  %v2995 = vmax.f32 %v2863, 0.0
  %v2996 = vmax.f32 %v2865, 0.0
  %v2997 = vmax.f32 %v2868, 0.0
  %v2998 = vmax.f32 %v2870, 0.0
  %v2999 = vmax.f32 %v2873, 0.0
  %v3000 = vmax.f32 %v2875, 0.0
  %v3001 = vmax.f32 %v2878, 0.0
  %v3002 = vmax.f32 %v2880, 0.0
  %v3003 = vmax.f32 %v2883, 0.0
  %v3004 = vmax.f32 %v2885, 0.0
  %v3005 = vmax.f32 %v2888, 0.0
  %v3006 = vmax.f32 %v2890, 0.0
  %v3007 = vmax.f32 %v2893, 0.0
  %v3008 = vmax.f32 %v2895, 0.0
  %v3009 = vmax.f32 %v2898, 0.0
  %v3010 = vmax.f32 %v2900, 0.0
  %v3011 = vmax.f32 %v2903, 0.0
  %v3012 = vmax.f32 %v2905, 0.0
  %v3013 = vmax.f32 %v2908, 0.0
  %v3014 = vmax.f32 %v2910, 0.0
  %v3015 = vmax.f32 %v2913, 0.0
  %v3016 = vmax.f32 %v2915, 0.0
  %v3017 = vmax.f32 %v2918, 0.0
  %v3018 = vmax.f32 %v2920, 0.0
  %v3019 = vmax.f32 %v2923, 0.0
  %v3020 = vmax.f32 %v2925, 0.0
  %v3021 = vmax.f32 %v2928, 0.0
  %v3022 = vmax.f32 %v2930, 0.0
  %v3023 = vmax.f32 %v2933, 0.0
  %v3024 = vmax.f32 %v2935, 0.0
  %v3025 = vmax.f32 %v2938, 0.0
  %v3026 = vmax.f32 %v2940, 0.0
  %v3027 = vmax.f32 %v2943, 0.0
  %v3028 = vmax.f32 %v2945, 0.0
  %v3029 = vmax.f32 %v2948, 0.0
  %v3030 = vmax.f32 %v2950, 0.0
  %v3031 = vmax.f32 %v2953, 0.0
  %v3032 = vmax.f32 %v2955, 0.0
  %v3033 = vmax.f32 %v2958, 0.0
  %v3034 = vmax.f32 %v2960, 0.0
  %v3035 = vmax.f32 %v2963, 0.0
  %v3036 = vmax.f32 %v2965, 0.0
  %v3037 = vmax.f32 %v2968, 0.0
  %v3038 = vmax.f32 %v2970, 0.0
  %v3039 = vmax.f32 %v2973, 0.0
  %v3040 = vmax.f32 %v2975, 0.0
  %v3041 = vpack.c.bf16 %v2978, %v2977
  %v3042 = vpack.c.bf16 %v2980, %v2979
  %v3043 = vpack.c.bf16 %v2982, %v2981
  %v3044 = vpack.c.bf16 %v2984, %v2983
  %v3045 = vpack.c.bf16 %v2986, %v2985
  %v3046 = vpack.c.bf16 %v2988, %v2987
  %v3047 = vpack.c.bf16 %v2990, %v2989
  %v3048 = vpack.c.bf16 %v2992, %v2991
  %v3049 = vpack.c.bf16 %v2994, %v2993
  %v3050 = vpack.c.bf16 %v2996, %v2995
  %v3051 = vpack.c.bf16 %v2998, %v2997
  %v3052 = vpack.c.bf16 %v3000, %v2999
  %v3053 = vpack.c.bf16 %v3002, %v3001
  %v3054 = vpack.c.bf16 %v3004, %v3003
  %v3055 = vpack.c.bf16 %v3006, %v3005
  %v3056 = vpack.c.bf16 %v3008, %v3007
  %v3057 = vpack.c.bf16 %v3010, %v3009
  %v3058 = vpack.c.bf16 %v3012, %v3011
  %v3059 = vpack.c.bf16 %v3014, %v3013
  %v3060 = vpack.c.bf16 %v3016, %v3015
  %v3061 = vpack.c.bf16 %v3018, %v3017
  %v3062 = vpack.c.bf16 %v3020, %v3019
  %v3063 = vpack.c.bf16 %v3022, %v3021
  %v3064 = vpack.c.bf16 %v3024, %v3023
  %v3065 = vpack.c.bf16 %v3026, %v3025
  %v3066 = vpack.c.bf16 %v3028, %v3027
  %v3067 = vpack.c.bf16 %v3030, %v3029
  %v3068 = vpack.c.bf16 %v3032, %v3031
  %v3069 = vpack.c.bf16 %v3034, %v3033
  %v3070 = vpack.c.bf16 %v3036, %v3035
  %v3071 = vpack.c.bf16 %v3038, %v3037
  %v3072 = vpack.c.bf16 %v3040, %v3039
  %v3073 = vld [vmem:[%s10] sm:$0xf]
  %v3074 = vld [vmem:[%s10 + $0x4] sm:$0xf]
  %v3075 = vld [vmem:[%s10 + $0x8] sm:$0xf]
  %v3076 = vld [vmem:[%s10 + $0xc] sm:$0xf]
  %v3077 = vld [vmem:[%s10 + $0x10] sm:$0xf]
  %v3078 = vld [vmem:[%s10 + $0x14] sm:$0xf]
  %v3079 = vld [vmem:[%s10 + $0x18] sm:$0xf]
  %v3080 = vld [vmem:[%s10 + $0x1c] sm:$0xf]
  %v3081 = vld [vmem:[%s11] sm:$0x1]
  %v3083 = vperm.slane %v3081, 0
  %v3093 = vunpack.c.l.b16 %v3073
  %v3094 = vunpack.c.l.b16 %v3074
  %v3095 = vunpack.c.l.b16 %v3075
  %v3096 = vunpack.c.l.b16 %v3076
  %v3097 = vunpack.c.l.b16 %v3077
  %v3098 = vunpack.c.l.b16 %v3078
  %v3099 = vunpack.c.l.b16 %v3079
  %v3100 = vunpack.c.l.b16 %v3080
  %v3101 = vpack.c.b16 %v3094, %v3093
  %v3102 = vpack.c.b16 %v3096, %v3095
  %v3103 = vpack.c.b16 %v3098, %v3097
  %v3104 = vpack.c.b16 %v3100, %v3099
  %v3110 = vsel %vm1835, %v3041, 0
  %v3113 = vsel %vm1835, %v3042, 0
  %v3116 = vsel %vm1835, %v3043, 0
  %v3119 = vsel %vm1835, %v3044, 0
  %v3122 = vsel %vm1835, %v3045, 0
  %v3125 = vsel %vm1835, %v3046, 0
  %v3128 = vsel %vm1835, %v3047, 0
  %v3131 = vsel %vm1835, %v3048, 0
  %v3134 = vsel %vm1835, %v3049, 0
  %v3137 = vsel %vm1835, %v3050, 0
  %v3140 = vsel %vm1835, %v3051, 0
  %v3143 = vsel %vm1835, %v3052, 0
  %v3146 = vsel %vm1835, %v3053, 0
  %v3149 = vsel %vm1835, %v3054, 0
  %v3152 = vsel %vm1835, %v3055, 0
  %v3155 = vsel %vm1835, %v3056, 0
  %v3158 = vsel %vm1835, %v3057, 0
  %v3161 = vsel %vm1835, %v3058, 0
  %v3164 = vsel %vm1835, %v3059, 0
  %v3167 = vsel %vm1835, %v3060, 0
  %v3170 = vsel %vm1835, %v3061, 0
  %v3173 = vsel %vm1835, %v3062, 0
  %v3176 = vsel %vm1835, %v3063, 0
  %v3179 = vsel %vm1835, %v3064, 0
  %v3182 = vsel %vm1835, %v3065, 0
  %v3185 = vsel %vm1835, %v3066, 0
  %v3188 = vsel %vm1835, %v3067, 0
  %v3191 = vsel %vm1835, %v3068, 0
  %v3194 = vsel %vm1835, %v3069, 0
  %v3197 = vsel %vm1835, %v3070, 0
  %v3200 = vsel %vm1835, %v3071, 0
  %v3203 = vsel %vm1835, %v3072, 0
  %3205 = vmatpush.bf16.msra.mxu0 0
  %3206 = vmatpush.bf16.msra.mxu0 0
  %3207 = vmatpush.bf16.msra.mxu0 0
  %3208 = vmatpush.bf16.msra.mxu0 0
  %3209 = vmatpush.bf16.msra.mxu0 %v3104
  %3210 = vmatpush.bf16.msra.mxu0 %v3103
  %3211 = vmatpush.bf16.msra.mxu0 %v3102
  %3212 = vmatpush.bf16.msra.mxu0 %v3101
  %3213 = vmatmul.bf16.gmra.mxu0 %v3110
  %v3214 = vpop.f32.mrf.mxu0
  %v3215 = vadd.f32 %v3083, %v3214
  %v3216 = vpop.f32.mrf.mxu0
  %v3217 = vadd.f32 %v3083, %v3216
  %3218 = vmatmul.bf16.gmra.mxu0 %v3113
  %v3219 = vpop.f32.mrf.mxu0
  %v3220 = vadd.f32 %v3083, %v3219
  %v3221 = vpop.f32.mrf.mxu0
  %v3222 = vadd.f32 %v3083, %v3221
  %3223 = vmatmul.bf16.gmra.mxu0 %v3116
  %v3224 = vpop.f32.mrf.mxu0
  %v3225 = vadd.f32 %v3083, %v3224
  %v3226 = vpop.f32.mrf.mxu0
  %v3227 = vadd.f32 %v3083, %v3226
  %3228 = vmatmul.bf16.gmra.mxu0 %v3119
  %v3229 = vpop.f32.mrf.mxu0
  %v3230 = vadd.f32 %v3083, %v3229
  %v3231 = vpop.f32.mrf.mxu0
  %v3232 = vadd.f32 %v3083, %v3231
  %3233 = vmatmul.bf16.gmra.mxu0 %v3122
  %v3234 = vpop.f32.mrf.mxu0
  %v3235 = vadd.f32 %v3083, %v3234
  %v3236 = vpop.f32.mrf.mxu0
  %v3237 = vadd.f32 %v3083, %v3236
  %3238 = vmatmul.bf16.gmra.mxu0 %v3125
  %v3239 = vpop.f32.mrf.mxu0
  %v3240 = vadd.f32 %v3083, %v3239
  %v3241 = vpop.f32.mrf.mxu0
  %v3242 = vadd.f32 %v3083, %v3241
  %3243 = vmatmul.bf16.gmra.mxu0 %v3128
  %v3244 = vpop.f32.mrf.mxu0
  %v3245 = vadd.f32 %v3083, %v3244
  %v3246 = vpop.f32.mrf.mxu0
  %v3247 = vadd.f32 %v3083, %v3246
  %3248 = vmatmul.bf16.gmra.mxu0 %v3131
  %v3249 = vpop.f32.mrf.mxu0
  %v3250 = vadd.f32 %v3083, %v3249
  %v3251 = vpop.f32.mrf.mxu0
  %v3252 = vadd.f32 %v3083, %v3251
  %3253 = vmatmul.bf16.gmra.mxu0 %v3134
  %v3254 = vpop.f32.mrf.mxu0
  %v3255 = vadd.f32 %v3083, %v3254
  %v3256 = vpop.f32.mrf.mxu0
  %v3257 = vadd.f32 %v3083, %v3256
  %3258 = vmatmul.bf16.gmra.mxu0 %v3137
  %v3259 = vpop.f32.mrf.mxu0
  %v3260 = vadd.f32 %v3083, %v3259
  %v3261 = vpop.f32.mrf.mxu0
  %v3262 = vadd.f32 %v3083, %v3261
  %3263 = vmatmul.bf16.gmra.mxu0 %v3140
  %v3264 = vpop.f32.mrf.mxu0
  %v3265 = vadd.f32 %v3083, %v3264
  %v3266 = vpop.f32.mrf.mxu0
  %v3267 = vadd.f32 %v3083, %v3266
  %3268 = vmatmul.bf16.gmra.mxu0 %v3143
  %v3269 = vpop.f32.mrf.mxu0
  %v3270 = vadd.f32 %v3083, %v3269
  %v3271 = vpop.f32.mrf.mxu0
  %v3272 = vadd.f32 %v3083, %v3271
  %3273 = vmatmul.bf16.gmra.mxu0 %v3146
  %v3274 = vpop.f32.mrf.mxu0
  %v3275 = vadd.f32 %v3083, %v3274
  %v3276 = vpop.f32.mrf.mxu0
  %v3277 = vadd.f32 %v3083, %v3276
  %3278 = vmatmul.bf16.gmra.mxu0 %v3149
  %v3279 = vpop.f32.mrf.mxu0
  %v3280 = vadd.f32 %v3083, %v3279
  %v3281 = vpop.f32.mrf.mxu0
  %v3282 = vadd.f32 %v3083, %v3281
  %3283 = vmatmul.bf16.gmra.mxu0 %v3152
  %v3284 = vpop.f32.mrf.mxu0
  %v3285 = vadd.f32 %v3083, %v3284
  %v3286 = vpop.f32.mrf.mxu0
  %v3287 = vadd.f32 %v3083, %v3286
  %3288 = vmatmul.bf16.gmra.mxu0 %v3155
  %v3289 = vpop.f32.mrf.mxu0
  %v3290 = vadd.f32 %v3083, %v3289
  %v3291 = vpop.f32.mrf.mxu0
  %v3292 = vadd.f32 %v3083, %v3291
  %3293 = vmatmul.bf16.gmra.mxu0 %v3158
  %v3294 = vpop.f32.mrf.mxu0
  %v3295 = vadd.f32 %v3083, %v3294
  %v3296 = vpop.f32.mrf.mxu0
  %v3297 = vadd.f32 %v3083, %v3296
  %3298 = vmatmul.bf16.gmra.mxu0 %v3161
  %v3299 = vpop.f32.mrf.mxu0
  %v3300 = vadd.f32 %v3083, %v3299
  %v3301 = vpop.f32.mrf.mxu0
  %v3302 = vadd.f32 %v3083, %v3301
  %3303 = vmatmul.bf16.gmra.mxu0 %v3164
  %v3304 = vpop.f32.mrf.mxu0
  %v3305 = vadd.f32 %v3083, %v3304
  %v3306 = vpop.f32.mrf.mxu0
  %v3307 = vadd.f32 %v3083, %v3306
  %3308 = vmatmul.bf16.gmra.mxu0 %v3167
  %v3309 = vpop.f32.mrf.mxu0
  %v3310 = vadd.f32 %v3083, %v3309
  %v3311 = vpop.f32.mrf.mxu0
  %v3312 = vadd.f32 %v3083, %v3311
  %3313 = vmatmul.bf16.gmra.mxu0 %v3170
  %v3314 = vpop.f32.mrf.mxu0
  %v3315 = vadd.f32 %v3083, %v3314
  %v3316 = vpop.f32.mrf.mxu0
  %v3317 = vadd.f32 %v3083, %v3316
  %3318 = vmatmul.bf16.gmra.mxu0 %v3173
  %v3319 = vpop.f32.mrf.mxu0
  %v3320 = vadd.f32 %v3083, %v3319
  %v3321 = vpop.f32.mrf.mxu0
  %v3322 = vadd.f32 %v3083, %v3321
  %3323 = vmatmul.bf16.gmra.mxu0 %v3176
  %v3324 = vpop.f32.mrf.mxu0
  %v3325 = vadd.f32 %v3083, %v3324
  %v3326 = vpop.f32.mrf.mxu0
  %v3327 = vadd.f32 %v3083, %v3326
  %3328 = vmatmul.bf16.gmra.mxu0 %v3179
  %v3329 = vpop.f32.mrf.mxu0
  %v3330 = vadd.f32 %v3083, %v3329
  %v3331 = vpop.f32.mrf.mxu0
  %v3332 = vadd.f32 %v3083, %v3331
  %3333 = vmatmul.bf16.gmra.mxu0 %v3182
  %v3334 = vpop.f32.mrf.mxu0
  %v3335 = vadd.f32 %v3083, %v3334
  %v3336 = vpop.f32.mrf.mxu0
  %v3337 = vadd.f32 %v3083, %v3336
  %3338 = vmatmul.bf16.gmra.mxu0 %v3185
  %v3339 = vpop.f32.mrf.mxu0
  %v3340 = vadd.f32 %v3083, %v3339
  %v3341 = vpop.f32.mrf.mxu0
  %v3342 = vadd.f32 %v3083, %v3341
  %3343 = vmatmul.bf16.gmra.mxu0 %v3188
  %v3344 = vpop.f32.mrf.mxu0
  %v3345 = vadd.f32 %v3083, %v3344
  %v3346 = vpop.f32.mrf.mxu0
  %v3347 = vadd.f32 %v3083, %v3346
  %3348 = vmatmul.bf16.gmra.mxu0 %v3191
  %v3349 = vpop.f32.mrf.mxu0
  %v3350 = vadd.f32 %v3083, %v3349
  %v3351 = vpop.f32.mrf.mxu0
  %v3352 = vadd.f32 %v3083, %v3351
  %3353 = vmatmul.bf16.gmra.mxu0 %v3194
  %v3354 = vpop.f32.mrf.mxu0
  %v3355 = vadd.f32 %v3083, %v3354
  %v3356 = vpop.f32.mrf.mxu0
  %v3357 = vadd.f32 %v3083, %v3356
  %3358 = vmatmul.bf16.gmra.mxu0 %v3197
  %v3359 = vpop.f32.mrf.mxu0
  %v3360 = vadd.f32 %v3083, %v3359
  %v3361 = vpop.f32.mrf.mxu0
  %v3362 = vadd.f32 %v3083, %v3361
  %3363 = vmatmul.bf16.gmra.mxu0 %v3200
  %v3364 = vpop.f32.mrf.mxu0
  %v3365 = vadd.f32 %v3083, %v3364
  %v3366 = vpop.f32.mrf.mxu0
  %v3367 = vadd.f32 %v3083, %v3366
  %3368 = vmatmul.bf16.gmra.mxu0 %v3203
  %v3369 = vpop.f32.mrf.mxu0
  %v3370 = vadd.f32 %v3083, %v3369
  %v3371 = vpop.f32.mrf.mxu0
  %v3372 = vadd.f32 %v3083, %v3371
  %3373 = vdwg.mxu0
  %3438 = vrot.lane.b32.xlu0 %v3215, 32
  %v3439 = vpop.permute.xlu0 %3438
  %3440 = vrot.lane.b32.xlu0 %v3217, 32
  %v3441 = vpop.permute.xlu0 %3440
  %3442 = vrot.lane.b32.xlu0 %v3220, 32
  %v3443 = vpop.permute.xlu0 %3442
  %3444 = vrot.lane.b32.xlu0 %v3222, 32
  %v3445 = vpop.permute.xlu0 %3444
  %3446 = vrot.lane.b32.xlu0 %v3225, 32
  %v3447 = vpop.permute.xlu0 %3446
  %3448 = vrot.lane.b32.xlu0 %v3227, 32
  %v3449 = vpop.permute.xlu0 %3448
  %3450 = vrot.lane.b32.xlu0 %v3230, 32
  %v3451 = vpop.permute.xlu0 %3450
  %3452 = vrot.lane.b32.xlu0 %v3232, 32
  %v3453 = vpop.permute.xlu0 %3452
  %3454 = vrot.lane.b32.xlu0 %v3235, 32
  %v3455 = vpop.permute.xlu0 %3454
  %3456 = vrot.lane.b32.xlu0 %v3237, 32
  %v3457 = vpop.permute.xlu0 %3456
  %3458 = vrot.lane.b32.xlu0 %v3240, 32
  %v3459 = vpop.permute.xlu0 %3458
  %3460 = vrot.lane.b32.xlu0 %v3242, 32
  %v3461 = vpop.permute.xlu0 %3460
  %3462 = vrot.lane.b32.xlu0 %v3245, 32
  %v3463 = vpop.permute.xlu0 %3462
  %3464 = vrot.lane.b32.xlu0 %v3247, 32
  %v3465 = vpop.permute.xlu0 %3464
  %3466 = vrot.lane.b32.xlu0 %v3250, 32
  %v3467 = vpop.permute.xlu0 %3466
  %3468 = vrot.lane.b32.xlu0 %v3252, 32
  %v3469 = vpop.permute.xlu0 %3468
  %3470 = vrot.lane.b32.xlu0 %v3255, 32
  %v3471 = vpop.permute.xlu0 %3470
  %3472 = vrot.lane.b32.xlu0 %v3257, 32
  %v3473 = vpop.permute.xlu0 %3472
  %3474 = vrot.lane.b32.xlu0 %v3260, 32
  %v3475 = vpop.permute.xlu0 %3474
  %3476 = vrot.lane.b32.xlu0 %v3262, 32
  %v3477 = vpop.permute.xlu0 %3476
  %3478 = vrot.lane.b32.xlu0 %v3265, 32
  %v3479 = vpop.permute.xlu0 %3478
  %3480 = vrot.lane.b32.xlu0 %v3267, 32
  %v3481 = vpop.permute.xlu0 %3480
  %3482 = vrot.lane.b32.xlu0 %v3270, 32
  %v3483 = vpop.permute.xlu0 %3482
  %3484 = vrot.lane.b32.xlu0 %v3272, 32
  %v3485 = vpop.permute.xlu0 %3484
  %3486 = vrot.lane.b32.xlu0 %v3275, 32
  %v3487 = vpop.permute.xlu0 %3486
  %3488 = vrot.lane.b32.xlu0 %v3277, 32
  %v3489 = vpop.permute.xlu0 %3488
  %3490 = vrot.lane.b32.xlu0 %v3280, 32
  %v3491 = vpop.permute.xlu0 %3490
  %3492 = vrot.lane.b32.xlu0 %v3282, 32
  %v3493 = vpop.permute.xlu0 %3492
  %3494 = vrot.lane.b32.xlu0 %v3285, 32
  %v3495 = vpop.permute.xlu0 %3494
  %3496 = vrot.lane.b32.xlu0 %v3287, 32
  %v3497 = vpop.permute.xlu0 %3496
  %3498 = vrot.lane.b32.xlu0 %v3290, 32
  %v3499 = vpop.permute.xlu0 %3498
  %3500 = vrot.lane.b32.xlu0 %v3292, 32
  %v3501 = vpop.permute.xlu0 %3500
  %3502 = vrot.lane.b32.xlu0 %v3295, 32
  %v3503 = vpop.permute.xlu0 %3502
  %3504 = vrot.lane.b32.xlu0 %v3297, 32
  %v3505 = vpop.permute.xlu0 %3504
  %3506 = vrot.lane.b32.xlu0 %v3300, 32
  %v3507 = vpop.permute.xlu0 %3506
  %3508 = vrot.lane.b32.xlu0 %v3302, 32
  %v3509 = vpop.permute.xlu0 %3508
  %3510 = vrot.lane.b32.xlu0 %v3305, 32
  %v3511 = vpop.permute.xlu0 %3510
  %3512 = vrot.lane.b32.xlu0 %v3307, 32
  %v3513 = vpop.permute.xlu0 %3512
  %3514 = vrot.lane.b32.xlu0 %v3310, 32
  %v3515 = vpop.permute.xlu0 %3514
  %3516 = vrot.lane.b32.xlu0 %v3312, 32
  %v3517 = vpop.permute.xlu0 %3516
  %3518 = vrot.lane.b32.xlu0 %v3315, 32
  %v3519 = vpop.permute.xlu0 %3518
  %3520 = vrot.lane.b32.xlu0 %v3317, 32
  %v3521 = vpop.permute.xlu0 %3520
  %3522 = vrot.lane.b32.xlu0 %v3320, 32
  %v3523 = vpop.permute.xlu0 %3522
  %3524 = vrot.lane.b32.xlu0 %v3322, 32
  %v3525 = vpop.permute.xlu0 %3524
  %3526 = vrot.lane.b32.xlu0 %v3325, 32
  %v3527 = vpop.permute.xlu0 %3526
  %3528 = vrot.lane.b32.xlu0 %v3327, 32
  %v3529 = vpop.permute.xlu0 %3528
  %3530 = vrot.lane.b32.xlu0 %v3330, 32
  %v3531 = vpop.permute.xlu0 %3530
  %3532 = vrot.lane.b32.xlu0 %v3332, 32
  %v3533 = vpop.permute.xlu0 %3532
  %3534 = vrot.lane.b32.xlu0 %v3335, 32
  %v3535 = vpop.permute.xlu0 %3534
  %3536 = vrot.lane.b32.xlu0 %v3337, 32
  %v3537 = vpop.permute.xlu0 %3536
  %3538 = vrot.lane.b32.xlu0 %v3340, 32
  %v3539 = vpop.permute.xlu0 %3538
  %3540 = vrot.lane.b32.xlu0 %v3342, 32
  %v3541 = vpop.permute.xlu0 %3540
  %3542 = vrot.lane.b32.xlu0 %v3345, 32
  %v3543 = vpop.permute.xlu0 %3542
  %3544 = vrot.lane.b32.xlu0 %v3347, 32
  %v3545 = vpop.permute.xlu0 %3544
  %3546 = vrot.lane.b32.xlu0 %v3350, 32
  %v3547 = vpop.permute.xlu0 %3546
  %3548 = vrot.lane.b32.xlu0 %v3352, 32
  %v3549 = vpop.permute.xlu0 %3548
  %3550 = vrot.lane.b32.xlu0 %v3355, 32
  %v3551 = vpop.permute.xlu0 %3550
  %3552 = vrot.lane.b32.xlu0 %v3357, 32
  %v3553 = vpop.permute.xlu0 %3552
  %3554 = vrot.lane.b32.xlu0 %v3360, 32
  %v3555 = vpop.permute.xlu0 %3554
  %3556 = vrot.lane.b32.xlu0 %v3362, 32
  %v3557 = vpop.permute.xlu0 %3556
  %3558 = vrot.lane.b32.xlu0 %v3365, 32
  %v3559 = vpop.permute.xlu0 %3558
  %3560 = vrot.lane.b32.xlu0 %v3367, 32
  %v3561 = vpop.permute.xlu0 %3560
  %3562 = vrot.lane.b32.xlu0 %v3370, 32
  %v3563 = vpop.permute.xlu0 %3562
  %3564 = vrot.lane.b32.xlu0 %v3372, 32
  %v3565 = vpop.permute.xlu0 %3564
  %vm3630 = vcmask 261120
  %v3631 = vsel %vm3630, %v1100, %v3439
  %v3632 = vsel %vm3630, %v1102, %v3441
  %v3633 = vsel %vm3630, %v1105, %v3443
  %v3634 = vsel %vm3630, %v1107, %v3445
  %v3635 = vsel %vm3630, %v1110, %v3447
  %v3636 = vsel %vm3630, %v1112, %v3449
  %v3637 = vsel %vm3630, %v1115, %v3451
  %v3638 = vsel %vm3630, %v1117, %v3453
  %v3639 = vsel %vm3630, %v1120, %v3455
  %v3640 = vsel %vm3630, %v1122, %v3457
  %v3641 = vsel %vm3630, %v1125, %v3459
  %v3642 = vsel %vm3630, %v1127, %v3461
  %v3643 = vsel %vm3630, %v1130, %v3463
  %v3644 = vsel %vm3630, %v1132, %v3465
  %v3645 = vsel %vm3630, %v1135, %v3467
  %v3646 = vsel %vm3630, %v1137, %v3469
  %v3647 = vsel %vm3630, %v1140, %v3471
  %v3648 = vsel %vm3630, %v1142, %v3473
  %v3649 = vsel %vm3630, %v1145, %v3475
  %v3650 = vsel %vm3630, %v1147, %v3477
  %v3651 = vsel %vm3630, %v1150, %v3479
  %v3652 = vsel %vm3630, %v1152, %v3481
  %v3653 = vsel %vm3630, %v1155, %v3483
  %v3654 = vsel %vm3630, %v1157, %v3485
  %v3655 = vsel %vm3630, %v1160, %v3487
  %v3656 = vsel %vm3630, %v1162, %v3489
  %v3657 = vsel %vm3630, %v1165, %v3491
  %v3658 = vsel %vm3630, %v1167, %v3493
  %v3659 = vsel %vm3630, %v1170, %v3495
  %v3660 = vsel %vm3630, %v1172, %v3497
  %v3661 = vsel %vm3630, %v1175, %v3499
  %v3662 = vsel %vm3630, %v1177, %v3501
  %v3663 = vsel %vm3630, %v1180, %v3503
  %v3664 = vsel %vm3630, %v1182, %v3505
  %v3665 = vsel %vm3630, %v1185, %v3507
  %v3666 = vsel %vm3630, %v1187, %v3509
  %v3667 = vsel %vm3630, %v1190, %v3511
  %v3668 = vsel %vm3630, %v1192, %v3513
  %v3669 = vsel %vm3630, %v1195, %v3515
  %v3670 = vsel %vm3630, %v1197, %v3517
  %v3671 = vsel %vm3630, %v1200, %v3519
  %v3672 = vsel %vm3630, %v1202, %v3521
  %v3673 = vsel %vm3630, %v1205, %v3523
  %v3674 = vsel %vm3630, %v1207, %v3525
  %v3675 = vsel %vm3630, %v1210, %v3527
  %v3676 = vsel %vm3630, %v1212, %v3529
  %v3677 = vsel %vm3630, %v1215, %v3531
  %v3678 = vsel %vm3630, %v1217, %v3533
  %v3679 = vsel %vm3630, %v1220, %v3535
  %v3680 = vsel %vm3630, %v1222, %v3537
  %v3681 = vsel %vm3630, %v1225, %v3539
  %v3682 = vsel %vm3630, %v1227, %v3541
  %v3683 = vsel %vm3630, %v1230, %v3543
  %v3684 = vsel %vm3630, %v1232, %v3545
  %v3685 = vsel %vm3630, %v1235, %v3547
  %v3686 = vsel %vm3630, %v1237, %v3549
  %v3687 = vsel %vm3630, %v1240, %v3551
  %v3688 = vsel %vm3630, %v1242, %v3553
  %v3689 = vsel %vm3630, %v1245, %v3555
  %v3690 = vsel %vm3630, %v1247, %v3557
  %v3691 = vsel %vm3630, %v1250, %v3559
  %v3692 = vsel %vm3630, %v1252, %v3561
  %v3693 = vsel %vm3630, %v1255, %v3563
  %v3694 = vsel %vm3630, %v1257, %v3565
  %v3695 = vlaneseq
  %v3696 = vshrl.u32 %v3695, 7
  %v3697 = vld [vmem:[%s124] sm:$0xf]
  %v3698 = vperm.slane %v3697, 0
  %v3699 = vperm.slane %v3697, 1
  %v3700 = vperm.slane %v3697, 2
  %v3701 = vperm.slane %v3697, 3
  %vm3702 = vcmp.eq.s32.totalorder %v3696, %v3698
  %vm3703 = vcmp.eq.s32.totalorder %v3696, %v3699
  %vm3704 = vcmp.eq.s32.totalorder %v3696, %v3700
  %vm3705 = vcmp.eq.s32.totalorder %v3696, %v3701
  %v3706 = vsel %vm3702, 1, 0
  %v3707 = vsel %vm3703, 1, 0
  %v3708 = vsel %vm3704, 1, 0
  %v3709 = vsel %vm3705, 1, 0
  %v3710 = vcvt.s32.f32 %v3706
  %v3711 = vcvt.s32.f32 %v3707
  %v3712 = vcvt.s32.f32 %v3708
  %v3713 = vcvt.s32.f32 %v3709
  %v3714 = vld [vmem:[%s13] sm:$0xff]
  %3715 = vmatpush.msra.mxu0 %v3646
  %3716 = vmatpush.msra.mxu0 %v3645
  %3717 = vmatpush.msra.mxu0 %v3644
  %3718 = vmatpush.msra.mxu0 %v3643
  %3719 = vmatpush.msra.mxu0 %v3642
  %3720 = vmatpush.msra.mxu0 %v3641
  %3721 = vmatpush.msra.mxu0 %v3640
  %3722 = vmatpush.msra.mxu0 %v3639
  %3723 = vmatpush.msra.mxu0 %v3638
  %3724 = vmatpush.msra.mxu0 %v3637
  %3725 = vmatpush.msra.mxu0 %v3636
  %3726 = vmatpush.msra.mxu0 %v3635
  %3727 = vmatpush.msra.mxu0 %v3634
  %3728 = vmatpush.msra.mxu0 %v3633
  %3729 = vmatpush.msra.mxu0 %v3632
  %3730 = vmatpush.msra.mxu0 %v3631
  %3731 = vmatmul.f32.gmra.mxu0 %v3710
  %v3732 = vpop.f32.mrf.mxu0
  %v3733 = vadd.f32 0.0, %v3732
  %3734 = vdwg.mxu0
  %3735 = vmatpush.msra.mxu0 %v3662
  %3736 = vmatpush.msra.mxu0 %v3661
  %3737 = vmatpush.msra.mxu0 %v3660
  %3738 = vmatpush.msra.mxu0 %v3659
  %3739 = vmatpush.msra.mxu0 %v3658
  %3740 = vmatpush.msra.mxu0 %v3657
  %3741 = vmatpush.msra.mxu0 %v3656
  %3742 = vmatpush.msra.mxu0 %v3655
  %3743 = vmatpush.msra.mxu0 %v3654
  %3744 = vmatpush.msra.mxu0 %v3653
  %3745 = vmatpush.msra.mxu0 %v3652
  %3746 = vmatpush.msra.mxu0 %v3651
  %3747 = vmatpush.msra.mxu0 %v3650
  %3748 = vmatpush.msra.mxu0 %v3649
  %3749 = vmatpush.msra.mxu0 %v3648
  %3750 = vmatpush.msra.mxu0 %v3647
  %3751 = vmatmul.f32.gmra.mxu0 %v3711
  %v3752 = vpop.f32.mrf.mxu0
  %v3753 = vadd.f32 %v3733, %v3752
  %3754 = vdwg.mxu0
  %3755 = vmatpush.msra.mxu0 %v3678
  %3756 = vmatpush.msra.mxu0 %v3677
  %3757 = vmatpush.msra.mxu0 %v3676
  %3758 = vmatpush.msra.mxu0 %v3675
  %3759 = vmatpush.msra.mxu0 %v3674
  %3760 = vmatpush.msra.mxu0 %v3673
  %3761 = vmatpush.msra.mxu0 %v3672
  %3762 = vmatpush.msra.mxu0 %v3671
  %3763 = vmatpush.msra.mxu0 %v3670
  %3764 = vmatpush.msra.mxu0 %v3669
  %3765 = vmatpush.msra.mxu0 %v3668
  %3766 = vmatpush.msra.mxu0 %v3667
  %3767 = vmatpush.msra.mxu0 %v3666
  %3768 = vmatpush.msra.mxu0 %v3665
  %3769 = vmatpush.msra.mxu0 %v3664
  %3770 = vmatpush.msra.mxu0 %v3663
  %3771 = vmatmul.f32.gmra.mxu0 %v3712
  %v3772 = vpop.f32.mrf.mxu0
  %v3773 = vadd.f32 %v3753, %v3772
  %3774 = vdwg.mxu0
  %3775 = vmatpush.msra.mxu0 %v3694
  %3776 = vmatpush.msra.mxu0 %v3693
  %3777 = vmatpush.msra.mxu0 %v3692
  %3778 = vmatpush.msra.mxu0 %v3691
  %3779 = vmatpush.msra.mxu0 %v3690
  %3780 = vmatpush.msra.mxu0 %v3689
  %3781 = vmatpush.msra.mxu0 %v3688
  %3782 = vmatpush.msra.mxu0 %v3687
  %3783 = vmatpush.msra.mxu0 %v3686
  %3784 = vmatpush.msra.mxu0 %v3685
  %3785 = vmatpush.msra.mxu0 %v3684
  %3786 = vmatpush.msra.mxu0 %v3683
  %3787 = vmatpush.msra.mxu0 %v3682
  %3788 = vmatpush.msra.mxu0 %v3681
  %3789 = vmatpush.msra.mxu0 %v3680
  %3790 = vmatpush.msra.mxu0 %v3679
  %3791 = vmatmul.f32.gmra.mxu0 %v3713
  %v3792 = vpop.f32.mrf.mxu0
  %v3793 = vadd.f32 %v3773, %v3792
  %3794 = vdwg.mxu0
  %v3795 = vadd.f32 %v3714, %v3793
  %3796 = vst.msk [vmem:[%s13] sm:$0xff] %vm824, %v3795
  %s3797 = sadd.s32 0, 0
  %s3798 = smul.u32 64, %s3797
  %p3799 = scmp.lt.s32.totalorder %s3798, 63
  %s3800 = scalar_select %p3799, %s3798, 63
  %s3801 = smul.addr %s3800, 4
  %s3802 = scalar_lea.vmem %s12, %s3801
  // Predicated region
  $region54: #{adversarial_denoiser_forward.1} parent=0 // pred_check
    _
  $region55: #{adversarial_denoiser_forward.1} parent=0 // pred_check_branch
    %3804 = sbr.rel (0) target = $region57
  $region56: #{adversarial_denoiser_forward.1} parent=0 // pred_region
    %s3805 = sadd.s32 0, 0
    %s3806 = smul.u32 64, %s3805
  $region57: #{adversarial_denoiser_forward.1} parent=0 // pred_fallthru
    _
  // Predicated region
  $region58: #{adversarial_denoiser_forward.1} parent=0 // pred_check
    _
  $region59: #{adversarial_denoiser_forward.1} parent=0 // pred_check_branch
    %3808 = sbr.rel (0) target = $region61
  $region60: #{adversarial_denoiser_forward.1} parent=0 // pred_region
    _
  $region61: #{adversarial_denoiser_forward.1} parent=0 // pred_fallthru
    _
  // Predicated region
  $region62: #{adversarial_denoiser_forward.1} parent=0 // pred_check
    _
  $region63: #{adversarial_denoiser_forward.1} parent=0 // pred_check_branch
    %3810 = sbr.rel (0) target = $region65
  $region64: #{adversarial_denoiser_forward.1} parent=0 // pred_region
    _
  $region65: #{adversarial_denoiser_forward.1} parent=0 // pred_fallthru
    _
  // Predicated region
  $region66: #{adversarial_denoiser_forward.1} parent=0 // pred_check
    _
  $region67: #{adversarial_denoiser_forward.1} parent=0 // pred_check_branch
    %3812 = sbr.rel (0) target = $region69
  $region68: #{adversarial_denoiser_forward.1} parent=0 // pred_region
    %s3813 = sadd.s32 0, 0
    %s3814 = smul.u32 64, %s3813
    %p3815 = scmp.lt.s32.totalorder %s3814, 63
    %s3816 = scalar_select %p3815, %s3814, 63
    %s3817 = smul.addr %s3816, 4
    %s3818 = scalar_lea.vmem %s12, %s3817
  $region69: #{adversarial_denoiser_forward.1} parent=0 // pred_fallthru
    _
  // Predicated region
  $region70: #{adversarial_denoiser_forward.1} parent=0 // pred_check
    _
  $region71: #{adversarial_denoiser_forward.1} parent=0 // pred_check_branch
    %3820 = sbr.rel (0) target = $region73
  $region72: #{adversarial_denoiser_forward.1} parent=0 // pred_region
    _
  $region73: #{adversarial_denoiser_forward.1} parent=0 // pred_fallthru
    _
  // Predicated region
  $region74: #{adversarial_denoiser_forward.1} parent=0 // pred_check
    _
  $region75: #{adversarial_denoiser_forward.1} parent=0 // pred_check_branch
    %3822 = sbr.rel (0) target = $region77
  $region76: #{adversarial_denoiser_forward.1} parent=0 // pred_region
    _
  $region77: #{adversarial_denoiser_forward.1} parent=0 // pred_fallthru
    _

</llo_original>
